<compile_context>
chip_gen: v6e
topology: v6e:2x2x1
jax: 0.10.0
libtpu: 0.0.40
codegen_flags: <defaults>
</compile_context>

<pallas_src>
import functools
import jax
import jax.numpy as jnp
from jax import lax
from jax.experimental import pallas as pl
from jax.experimental.pallas import tpu as pltpu

# ----------------------------- config ---------------------------------------
N_LABELS = 3
HIDDEN   = 32
N_HEADS  = 4
HEAD_DIM = HIDDEN // N_HEADS
FFN      = 64
N_LAYERS = 2
VOCAB    = 100
MAX_POS  = 40
LN_EPS   = 1e-5

_VMEM = pl.BlockSpec(memory_space=pltpu.MemorySpace.VMEM)


# --------------------------- kernel helpers ----------------------------------

def _layer_norm(x, g, b):
    mu = jnp.mean(x, axis=-1, keepdims=True)
    xc = x - mu
    var = jnp.mean(xc * xc, axis=-1, keepdims=True)
    return xc * lax.rsqrt(var + LN_EPS) * g + b


def _gelu(x):
    # TODO(synk): HF RoBERTa uses exact (erf) GELU; tanh approximation used here.
    return 0.5 * x * (1.0 + jnp.tanh(0.7978845608028654 *
                                     (x + 0.044715 * x * x * x)))


# --------------------------- fused forward kernel ----------------------------

def _fused_forward_kernel(
    h_ref, mask_ref, onehot_ref,
    emb_g_ref, emb_b_ref,
    wqkv_ref, bqkv_ref, wo_ref, bo_ref,
    ln1g_ref, ln1b_ref,
    w1_ref, b1_ref, w2_ref, b2_ref,
    ln2g_ref, ln2b_ref,
    clsw_ref, clsb_ref,
    logits_ref, loss_ref,
    *, batch, seq,
):
    scale = 1.0 / (HEAD_DIM ** 0.5)
    bf16 = jnp.bfloat16

    # Embedding LayerNorm (no residual -> no zero slab DMA'd from HBM).
    h = _layer_norm(h_ref[...], emb_g_ref[...], emb_b_ref[...])      # (B*S, H) f32

    # Additive attention mask: built & broadcast ONCE, reused by every layer/head.
    add_mask = jnp.broadcast_to((1.0 - mask_ref[...]) * -1e9,
                                (batch, seq, seq))                    # (B, S, S)

    for l in range(N_LAYERS):          # static unroll; all weights VMEM-resident
        # ---- fused QKV projection: one bf16 MXU op, f32 accumulation ----
        qkv = (jnp.dot(h.astype(bf16), wqkv_ref[l],
                       preferred_element_type=jnp.float32)
               + bqkv_ref[l])                                         # (B*S, 3H) f32
        qkv_b = qkv.astype(bf16)

        # ---- multi-head attention ----
        # Per-head score/context micro-matmuls (S=8, dh=8) stay in a tiny static
        # loop; the projection back to H lanes is ONE full-width matmul below.
        # TODO(synk): at real roberta-base head counts, batch the head axis
        # (rank-4 einsum or a head grid axis) instead of this static unroll.
        ctx_heads = []
        for hd in range(N_HEADS):
            o = hd * HEAD_DIM
            q = qkv_b[:, o:o + HEAD_DIM].reshape(batch, seq, HEAD_DIM)
            k = qkv_b[:, HIDDEN + o:HIDDEN + o + HEAD_DIM].reshape(
                batch, seq, HEAD_DIM)
            v = qkv_b[:, 2 * HIDDEN + o:2 * HIDDEN + o + HEAD_DIM].reshape(
                batch, seq, HEAD_DIM)
            # contract on the last dims of q and k -> no explicit K transpose
            s = jnp.einsum('bqd,bkd->bqk', q, k,
                           preferred_element_type=jnp.float32) * scale
            s = s + add_mask                                          # (B, S, S)
            s = s - jnp.max(s, axis=-1, keepdims=True)
            p = jnp.exp(s)
            # EUP reciprocal (separate VLIW slot) instead of a VPU divide chain.
            p = p * pl.reciprocal(jnp.sum(p, axis=-1, keepdims=True),
                                  approx=True)
            ctx_heads.append(
                jnp.einsum('bqk,bkd->bqd', p.astype(bf16), v,
                           preferred_element_type=jnp.float32))       # (B, S, dh)

        # fold all heads back to H lanes with a single output projection matmul
        ctx = jnp.concatenate(ctx_heads, axis=-1).reshape(batch * seq, HIDDEN)
        attn = (jnp.dot(ctx.astype(bf16), wo_ref[l],
                        preferred_element_type=jnp.float32) + bo_ref[l])

        h = _layer_norm(attn + h, ln1g_ref[l], ln1b_ref[l])

        # ---- FFN (bf16 matmuls, f32 accumulation + f32 GELU/LayerNorm) ----
        inter = _gelu(jnp.dot(h.astype(bf16), w1_ref[l],
                              preferred_element_type=jnp.float32) + b1_ref[l])
        ffn = (jnp.dot(inter.astype(bf16), w2_ref[l],
                       preferred_element_type=jnp.float32) + b2_ref[l])
        h = _layer_norm(ffn + h, ln2g_ref[l], ln2b_ref[l])

    # ---- mean-pool over the sequence: plain sublane reduction, no pool matrix ----
    # (matches torch .mean(dim=1): mask-agnostic mean over all S positions)
    pooled = jnp.mean(h.reshape(batch, seq, HIDDEN), axis=1)          # (B, H)

    # ---- classifier; nn.Dropout(p=0.3) is identity at inference ----
    # TODO(synk): training-mode dropout (random masking) not implemented.
    logits = (jnp.dot(pooled.astype(bf16), clsw_ref[...],
                      preferred_element_type=jnp.float32) + clsb_ref[...])
    logits_ref[...] = logits

    # ---- cross-entropy epilogue (same kernel, no extra launch) ----
    m = jnp.max(logits, axis=-1, keepdims=True)
    lse = m + jnp.log(jnp.sum(jnp.exp(logits - m), axis=-1, keepdims=True))
    nll = jnp.sum((lse - logits) * onehot_ref[...], axis=-1, keepdims=True)
    loss_ref[...] = jnp.mean(nll).reshape(1, 1)


# ----------------------------- parameters ------------------------------------

def init_params(key):
    keys = jax.random.split(key, 4 + N_LAYERS)

    def dense_w(k, din, dout):
        return 0.02 * jax.random.normal(k, (din, dout), jnp.float32)

    wqkv, bqkv, wo, bo = [], [], [], []
    ln1g, ln1b, ln2g, ln2b = [], [], [], []
    w1, b1, w2, b2 = [], [], [], []
    for i in range(N_LAYERS):
        lk = jax.random.split(keys[4 + i], 6)
        qw, kw, vw = (dense_w(lk[j], HIDDEN, HIDDEN) for j in range(3))
        wqkv.append(jnp.concatenate([qw, kw, vw], axis=1))       # (H, 3H)
        bqkv.append(jnp.zeros((1, 3 * HIDDEN), jnp.float32))
        wo.append(dense_w(lk[3], HIDDEN, HIDDEN))
        bo.append(jnp.zeros((1, HIDDEN), jnp.float32))
        w1.append(dense_w(lk[4], HIDDEN, FFN))
        b1.append(jnp.zeros((1, FFN), jnp.float32))
        w2.append(dense_w(lk[5], FFN, HIDDEN))
        b2.append(jnp.zeros((1, HIDDEN), jnp.float32))
        ln1g.append(jnp.ones((1, HIDDEN), jnp.float32))
        ln1b.append(jnp.zeros((1, HIDDEN), jnp.float32))
        ln2g.append(jnp.ones((1, HIDDEN), jnp.float32))
        ln2b.append(jnp.zeros((1, HIDDEN), jnp.float32))

    return {
        "word_emb": 0.02 * jax.random.normal(keys[0], (VOCAB, HIDDEN), jnp.float32),
        "pos_emb":  0.02 * jax.random.normal(keys[1], (MAX_POS, HIDDEN), jnp.float32),
        "type_emb": 0.02 * jax.random.normal(keys[2], (1, HIDDEN), jnp.float32),
        "emb_ln_g": jnp.ones((1, HIDDEN), jnp.float32),
        "emb_ln_b": jnp.zeros((1, HIDDEN), jnp.float32),
        "cls": {"w": dense_w(keys[3], HIDDEN, N_LABELS),
                "b": jnp.zeros((1, N_LABELS), jnp.float32)},
        "stacked": {
            "wqkv": jnp.stack(wqkv), "bqkv": jnp.stack(bqkv),
            "wo": jnp.stack(wo), "bo": jnp.stack(bo),
            "ln1_g": jnp.stack(ln1g), "ln1_b": jnp.stack(ln1b),
            "w1": jnp.stack(w1), "b1": jnp.stack(b1),
            "w2": jnp.stack(w2), "b2": jnp.stack(b2),
            "ln2_g": jnp.stack(ln2g), "ln2_b": jnp.stack(ln2b),
        },
    }


# ------------------------------ forward --------------------------------------

def roberta_classifier_forward(params, input_ids, attention_mask, labels=None):
    B, S = input_ids.shape
    bf16 = jnp.bfloat16

    # Embedding lookup/add is gather glue done in XLA; everything downstream is
    # a single fused Pallas kernel.
    # TODO(synk): real roberta-base offsets position ids by padding_idx+1 and
    # uses the attention mask to build them; this synthetic model uses [0, S).
    h = (jnp.take(params["word_emb"], input_ids, axis=0)
         + params["pos_emb"][:S][None, :, :]
         + params["type_emb"][0][None, None, :]).reshape(B * S, HIDDEN)

    mask_f = attention_mask.astype(jnp.float32).reshape(B, 1, S)

    if labels is not None:
        onehot = jax.nn.one_hot(labels, N_LABELS, dtype=jnp.float32)
    else:
        onehot = jnp.zeros((B, N_LABELS), jnp.float32)

    st = params["stacked"]
    # MXU weight operands in bf16 (halves weight footprint / DMA bytes; f32
    # accumulation in-kernel).  LayerNorm params and biases stay f32.
    operands = (h, mask_f, onehot,
                params["emb_ln_g"], params["emb_ln_b"],
                st["wqkv"].astype(bf16), st["bqkv"],
                st["wo"].astype(bf16), st["bo"],
                st["ln1_g"], st["ln1_b"],
                st["w1"].astype(bf16), st["b1"],
                st["w2"].astype(bf16), st["b2"],
                st["ln2_g"], st["ln2_b"],
                params["cls"]["w"].astype(bf16), params["cls"]["b"])

    kern = functools.partial(_fused_forward_kernel, batch=B, seq=S)
    logits, loss = pl.pallas_call(
        kern,
        out_shape=(jax.ShapeDtypeStruct((B, N_LABELS), jnp.float32),
                   jax.ShapeDtypeStruct((1, 1), jnp.float32)),
        in_specs=[_VMEM] * len(operands),
        out_specs=(_VMEM, _VMEM),
        compiler_params=pltpu.CompilerParams(vmem_limit_bytes=64 * 1024 * 1024),
    )(*operands)

    if labels is None:
        return jnp.zeros((), jnp.float32), logits
    return loss[0, 0], logits


# -------------------------------- main ----------------------------------------

if __name__ == "__main__":
    root = jax.random.PRNGKey(0)
    k_param, k_ids = jax.random.split(root)

    params = init_params(k_param)

    B, S = 2, 8
    input_ids = jax.random.randint(k_ids, (B, S), 0, VOCAB, dtype=jnp.int32)
    attention_mask = jnp.array([[1, 1, 1, 1, 1, 1, 1, 1],
                                [1, 1, 1, 1, 1, 1, 0, 0]], dtype=jnp.int32)
    labels = jnp.array([0, 2], dtype=jnp.int32)

    loss, logits = roberta_classifier_forward(params, input_ids,
                                              attention_mask, labels)
    jax.block_until_ready((loss, logits))
    assert logits.shape == (B, N_LABELS)
    print("KERNEL_OK")
</pallas_src>

<mosaic_0001>
module attributes {stable_mosaic.version = 11 : i64} {
  func.func @_fused_forward_kernel(%arg0: memref<16x32xf32, #tpu.memory_space<vmem>>, %arg1: memref<2x1x8xf32, #tpu.memory_space<vmem>>, %arg2: memref<2x3xf32, #tpu.memory_space<vmem>>, %arg3: memref<1x32xf32, #tpu.memory_space<vmem>>, %arg4: memref<1x32xf32, #tpu.memory_space<vmem>>, %arg5: memref<2x32x96xbf16, #tpu.memory_space<vmem>>, %arg6: memref<2x1x96xf32, #tpu.memory_space<vmem>>, %arg7: memref<2x32x32xbf16, #tpu.memory_space<vmem>>, %arg8: memref<2x1x32xf32, #tpu.memory_space<vmem>>, %arg9: memref<2x1x32xf32, #tpu.memory_space<vmem>>, %arg10: memref<2x1x32xf32, #tpu.memory_space<vmem>>, %arg11: memref<2x32x64xbf16, #tpu.memory_space<vmem>>, %arg12: memref<2x1x64xf32, #tpu.memory_space<vmem>>, %arg13: memref<2x64x32xbf16, #tpu.memory_space<vmem>>, %arg14: memref<2x1x32xf32, #tpu.memory_space<vmem>>, %arg15: memref<2x1x32xf32, #tpu.memory_space<vmem>>, %arg16: memref<2x1x32xf32, #tpu.memory_space<vmem>>, %arg17: memref<32x3xbf16, #tpu.memory_space<vmem>>, %arg18: memref<1x3xf32, #tpu.memory_space<vmem>>, %arg19: memref<2x3xf32, #tpu.memory_space<vmem>>, %arg20: memref<1x1xf32, #tpu.memory_space<vmem>>) attributes {dimension_semantics = [], scalar_prefetch = 0 : i64, scratch_operands = 0 : i64, tpu.core_type = #tpu.core_type<tc>} {
    %c0 = arith.constant 0 : index
    %c0_0 = arith.constant 0 : index
    %0 = vector.load %arg0[%c0, %c0_0] : memref<16x32xf32, #tpu.memory_space<vmem>>, vector<16x32xf32>
    %c0_1 = arith.constant 0 : index
    %c0_2 = arith.constant 0 : index
    %1 = vector.load %arg3[%c0_1, %c0_2] : memref<1x32xf32, #tpu.memory_space<vmem>>, vector<1x32xf32>
    %c0_3 = arith.constant 0 : index
    %c0_4 = arith.constant 0 : index
    %2 = vector.load %arg4[%c0_3, %c0_4] : memref<1x32xf32, #tpu.memory_space<vmem>>, vector<1x32xf32>
    %cst = arith.constant dense<0.000000e+00> : vector<16xf32>
    %3 = vector.multi_reduction <add>, %0, %cst [1] : vector<16x32xf32> to vector<16xf32>
    %4 = vector.shape_cast %3 : vector<16xf32> to vector<16x1xf32>
    %cst_5 = arith.constant 3.200000e+01 : f32
    %5 = vector.broadcast %cst_5 : f32 to vector<16x1xf32>
    %6 = arith.divf %4, %5 : vector<16x1xf32>
    %7 = vector.broadcast %6 : vector<16x1xf32> to vector<16x32xf32>
    %8 = arith.subf %0, %7 : vector<16x32xf32>
    %9 = arith.mulf %8, %8 : vector<16x32xf32>
    %cst_6 = arith.constant dense<0.000000e+00> : vector<16xf32>
    %10 = vector.multi_reduction <add>, %9, %cst_6 [1] : vector<16x32xf32> to vector<16xf32>
    %11 = vector.shape_cast %10 : vector<16xf32> to vector<16x1xf32>
    %cst_7 = arith.constant 3.200000e+01 : f32
    %12 = vector.broadcast %cst_7 : f32 to vector<16x1xf32>
    %13 = arith.divf %11, %12 : vector<16x1xf32>
    %cst_8 = arith.constant 9.99999974E-6 : f32
    %14 = vector.broadcast %cst_8 : f32 to vector<16x1xf32>
    %15 = arith.addf %13, %14 : vector<16x1xf32>
    %16 = math.rsqrt %15 : vector<16x1xf32>
    %17 = vector.broadcast %16 : vector<16x1xf32> to vector<16x32xf32>
    %18 = arith.mulf %8, %17 : vector<16x32xf32>
    %19 = vector.broadcast %1 : vector<1x32xf32> to vector<16x32xf32>
    %20 = arith.mulf %18, %19 : vector<16x32xf32>
    %21 = vector.broadcast %2 : vector<1x32xf32> to vector<16x32xf32>
    %22 = arith.addf %20, %21 : vector<16x32xf32>
    %c0_9 = arith.constant 0 : index
    %c0_10 = arith.constant 0 : index
    %c0_11 = arith.constant 0 : index
    %23 = vector.load %arg1[%c0_9, %c0_10, %c0_11] : memref<2x1x8xf32, #tpu.memory_space<vmem>>, vector<2x1x8xf32>
    %cst_12 = arith.constant 1.000000e+00 : f32
    %24 = vector.broadcast %cst_12 : f32 to vector<2x1x8xf32>
    %25 = arith.subf %24, %23 : vector<2x1x8xf32>
    %cst_13 = arith.constant -1.000000e+09 : f32
    %26 = vector.broadcast %cst_13 : f32 to vector<2x1x8xf32>
    %27 = arith.mulf %25, %26 : vector<2x1x8xf32>
    %28 = vector.shape_cast %27 : vector<2x1x8xf32> to vector<2x1x8xf32>
    %29 = vector.broadcast %28 : vector<2x1x8xf32> to vector<2x8x8xf32>
    %30 = arith.truncf %22 : vector<16x32xf32> to vector<16x32xbf16>
    %c0_14 = arith.constant 0 : index
    %c0_15 = arith.constant 0 : index
    %c0_16 = arith.constant 0 : index
    %31 = vector.load %arg5[%c0_14, %c0_15, %c0_16] : memref<2x32x96xbf16, #tpu.memory_space<vmem>>, vector<1x32x96xbf16>
    %32 = vector.shape_cast %31 : vector<1x32x96xbf16> to vector<32x96xbf16>
    %cst_17 = arith.constant dense<0.000000e+00> : vector<16x96xf32>
    %33 = tpu.matmul %30, %32, %cst_17 {dimension_numbers = #tpu.dot_dimension_numbers<[1], [0], [0], [1], [0, 0, 1, 1], [], []>} : vector<16x32xbf16>, vector<32x96xbf16>, vector<16x96xf32> -> vector<16x96xf32>
    %c0_18 = arith.constant 0 : index
    %c0_19 = arith.constant 0 : index
    %c0_20 = arith.constant 0 : index
    %34 = vector.load %arg6[%c0_18, %c0_19, %c0_20] : memref<2x1x96xf32, #tpu.memory_space<vmem>>, vector<1x1x96xf32>
    %35 = vector.shape_cast %34 : vector<1x1x96xf32> to vector<1x96xf32>
    %36 = vector.broadcast %35 : vector<1x96xf32> to vector<16x96xf32>
    %37 = arith.addf %33, %36 : vector<16x96xf32>
    %38 = arith.truncf %37 : vector<16x96xf32> to vector<16x96xbf16>
    %39 = vector.extract_strided_slice %38 {offsets = [0, 0], sizes = [16, 8], strides = [1, 1]} : vector<16x96xbf16> to vector<16x8xbf16>
    %40 = vector.shape_cast %39 : vector<16x8xbf16> to vector<2x8x8xbf16>
    %41 = vector.extract_strided_slice %38 {offsets = [0, 32], sizes = [16, 8], strides = [1, 1]} : vector<16x96xbf16> to vector<16x8xbf16>
    %42 = vector.shape_cast %41 : vector<16x8xbf16> to vector<2x8x8xbf16>
    %43 = vector.extract_strided_slice %38 {offsets = [0, 64], sizes = [16, 8], strides = [1, 1]} : vector<16x96xbf16> to vector<16x8xbf16>
    %44 = vector.shape_cast %43 : vector<16x8xbf16> to vector<2x8x8xbf16>
    "tpu.trace_start"() <{level = 10 : i32, message = "bqd,bkd->bqk"}> : () -> ()
    %cst_21 = arith.constant dense<0.000000e+00> : vector<2x8x8xf32>
    %45 = tpu.matmul %40, %42, %cst_21 {dimension_numbers = #tpu.dot_dimension_numbers<[2], [2], [1], [1], [0, 0, 0, 1, 1, 1], [0], [0]>} : vector<2x8x8xbf16>, vector<2x8x8xbf16>, vector<2x8x8xf32> -> vector<2x8x8xf32>
    "tpu.trace_stop"() : () -> ()
    %cst_22 = arith.constant 0.353553385 : f32
    %46 = vector.broadcast %cst_22 : f32 to vector<2x8x8xf32>
    %47 = arith.mulf %45, %46 : vector<2x8x8xf32>
    %48 = arith.addf %47, %29 : vector<2x8x8xf32>
    %cst_23 = arith.constant dense<0xFF800000> : vector<2x8xf32>
    %49 = vector.multi_reduction <maximumf>, %48, %cst_23 [2] : vector<2x8x8xf32> to vector<2x8xf32>
    %50 = vector.shape_cast %49 : vector<2x8xf32> to vector<2x8x1xf32>
    %51 = vector.broadcast %50 : vector<2x8x1xf32> to vector<2x8x8xf32>
    %52 = arith.subf %48, %51 : vector<2x8x8xf32>
    %53 = math.exp %52 : vector<2x8x8xf32>
    %cst_24 = arith.constant dense<0.000000e+00> : vector<2x8xf32>
    %54 = vector.multi_reduction <add>, %53, %cst_24 [2] : vector<2x8x8xf32> to vector<2x8xf32>
    %55 = vector.shape_cast %54 : vector<2x8xf32> to vector<2x8x1xf32>
    %56 = tpu.reciprocal %55 {approx = true} : vector<2x8x1xf32> -> vector<2x8x1xf32>
    %57 = vector.broadcast %56 : vector<2x8x1xf32> to vector<2x8x8xf32>
    %58 = arith.mulf %53, %57 : vector<2x8x8xf32>
    %59 = arith.truncf %58 : vector<2x8x8xf32> to vector<2x8x8xbf16>
    "tpu.trace_start"() <{level = 10 : i32, message = "bqk,bkd->bqd"}> : () -> ()
    %cst_25 = arith.constant dense<0.000000e+00> : vector<2x8x8xf32>
    %60 = tpu.matmul %59, %44, %cst_25 {dimension_numbers = #tpu.dot_dimension_numbers<[2], [1], [1], [2], [0, 0, 0, 1, 1, 2], [0], [0]>} : vector<2x8x8xbf16>, vector<2x8x8xbf16>, vector<2x8x8xf32> -> vector<2x8x8xf32>
    "tpu.trace_stop"() : () -> ()
    %61 = vector.extract_strided_slice %38 {offsets = [0, 8], sizes = [16, 8], strides = [1, 1]} : vector<16x96xbf16> to vector<16x8xbf16>
    %62 = vector.shape_cast %61 : vector<16x8xbf16> to vector<2x8x8xbf16>
    %63 = vector.extract_strided_slice %38 {offsets = [0, 40], sizes = [16, 8], strides = [1, 1]} : vector<16x96xbf16> to vector<16x8xbf16>
    %64 = vector.shape_cast %63 : vector<16x8xbf16> to vector<2x8x8xbf16>
    %65 = vector.extract_strided_slice %38 {offsets = [0, 72], sizes = [16, 8], strides = [1, 1]} : vector<16x96xbf16> to vector<16x8xbf16>
    %66 = vector.shape_cast %65 : vector<16x8xbf16> to vector<2x8x8xbf16>
    "tpu.trace_start"() <{level = 10 : i32, message = "bqd,bkd->bqk"}> : () -> ()
    %cst_26 = arith.constant dense<0.000000e+00> : vector<2x8x8xf32>
    %67 = tpu.matmul %62, %64, %cst_26 {dimension_numbers = #tpu.dot_dimension_numbers<[2], [2], [1], [1], [0, 0, 0, 1, 1, 1], [0], [0]>} : vector<2x8x8xbf16>, vector<2x8x8xbf16>, vector<2x8x8xf32> -> vector<2x8x8xf32>
    "tpu.trace_stop"() : () -> ()
    %cst_27 = arith.constant 0.353553385 : f32
    %68 = vector.broadcast %cst_27 : f32 to vector<2x8x8xf32>
    %69 = arith.mulf %67, %68 : vector<2x8x8xf32>
    %70 = arith.addf %69, %29 : vector<2x8x8xf32>
    %cst_28 = arith.constant dense<0xFF800000> : vector<2x8xf32>
    %71 = vector.multi_reduction <maximumf>, %70, %cst_28 [2] : vector<2x8x8xf32> to vector<2x8xf32>
    %72 = vector.shape_cast %71 : vector<2x8xf32> to vector<2x8x1xf32>
    %73 = vector.broadcast %72 : vector<2x8x1xf32> to vector<2x8x8xf32>
    %74 = arith.subf %70, %73 : vector<2x8x8xf32>
    %75 = math.exp %74 : vector<2x8x8xf32>
    %cst_29 = arith.constant dense<0.000000e+00> : vector<2x8xf32>
    %76 = vector.multi_reduction <add>, %75, %cst_29 [2] : vector<2x8x8xf32> to vector<2x8xf32>
    %77 = vector.shape_cast %76 : vector<2x8xf32> to vector<2x8x1xf32>
    %78 = tpu.reciprocal %77 {approx = true} : vector<2x8x1xf32> -> vector<2x8x1xf32>
    %79 = vector.broadcast %78 : vector<2x8x1xf32> to vector<2x8x8xf32>
    %80 = arith.mulf %75, %79 : vector<2x8x8xf32>
    %81 = arith.truncf %80 : vector<2x8x8xf32> to vector<2x8x8xbf16>
    "tpu.trace_start"() <{level = 10 : i32, message = "bqk,bkd->bqd"}> : () -> ()
    %cst_30 = arith.constant dense<0.000000e+00> : vector<2x8x8xf32>
    %82 = tpu.matmul %81, %66, %cst_30 {dimension_numbers = #tpu.dot_dimension_numbers<[2], [1], [1], [2], [0, 0, 0, 1, 1, 2], [0], [0]>} : vector<2x8x8xbf16>, vector<2x8x8xbf16>, vector<2x8x8xf32> -> vector<2x8x8xf32>
    "tpu.trace_stop"() : () -> ()
    %83 = vector.extract_strided_slice %38 {offsets = [0, 16], sizes = [16, 8], strides = [1, 1]} : vector<16x96xbf16> to vector<16x8xbf16>
    %84 = vector.shape_cast %83 : vector<16x8xbf16> to vector<2x8x8xbf16>
    %85 = vector.extract_strided_slice %38 {offsets = [0, 48], sizes = [16, 8], strides = [1, 1]} : vector<16x96xbf16> to vector<16x8xbf16>
    %86 = vector.shape_cast %85 : vector<16x8xbf16> to vector<2x8x8xbf16>
    %87 = vector.extract_strided_slice %38 {offsets = [0, 80], sizes = [16, 8], strides = [1, 1]} : vector<16x96xbf16> to vector<16x8xbf16>
    %88 = vector.shape_cast %87 : vector<16x8xbf16> to vector<2x8x8xbf16>
    "tpu.trace_start"() <{level = 10 : i32, message = "bqd,bkd->bqk"}> : () -> ()
    %cst_31 = arith.constant dense<0.000000e+00> : vector<2x8x8xf32>
    %89 = tpu.matmul %84, %86, %cst_31 {dimension_numbers = #tpu.dot_dimension_numbers<[2], [2], [1], [1], [0, 0, 0, 1, 1, 1], [0], [0]>} : vector<2x8x8xbf16>, vector<2x8x8xbf16>, vector<2x8x8xf32> -> vector<2x8x8xf32>
    "tpu.trace_stop"() : () -> ()
    %cst_32 = arith.constant 0.353553385 : f32
    %90 = vector.broadcast %cst_32 : f32 to vector<2x8x8xf32>
    %91 = arith.mulf %89, %90 : vector<2x8x8xf32>
    %92 = arith.addf %91, %29 : vector<2x8x8xf32>
    %cst_33 = arith.constant dense<0xFF800000> : vector<2x8xf32>
    %93 = vector.multi_reduction <maximumf>, %92, %cst_33 [2] : vector<2x8x8xf32> to vector<2x8xf32>
    %94 = vector.shape_cast %93 : vector<2x8xf32> to vector<2x8x1xf32>
    %95 = vector.broadcast %94 : vector<2x8x1xf32> to vector<2x8x8xf32>
    %96 = arith.subf %92, %95 : vector<2x8x8xf32>
    %97 = math.exp %96 : vector<2x8x8xf32>
    %cst_34 = arith.constant dense<0.000000e+00> : vector<2x8xf32>
    %98 = vector.multi_reduction <add>, %97, %cst_34 [2] : vector<2x8x8xf32> to vector<2x8xf32>
    %99 = vector.shape_cast %98 : vector<2x8xf32> to vector<2x8x1xf32>
    %100 = tpu.reciprocal %99 {approx = true} : vector<2x8x1xf32> -> vector<2x8x1xf32>
    %101 = vector.broadcast %100 : vector<2x8x1xf32> to vector<2x8x8xf32>
    %102 = arith.mulf %97, %101 : vector<2x8x8xf32>
    %103 = arith.truncf %102 : vector<2x8x8xf32> to vector<2x8x8xbf16>
    "tpu.trace_start"() <{level = 10 : i32, message = "bqk,bkd->bqd"}> : () -> ()
    %cst_35 = arith.constant dense<0.000000e+00> : vector<2x8x8xf32>
    %104 = tpu.matmul %103, %88, %cst_35 {dimension_numbers = #tpu.dot_dimension_numbers<[2], [1], [1], [2], [0, 0, 0, 1, 1, 2], [0], [0]>} : vector<2x8x8xbf16>, vector<2x8x8xbf16>, vector<2x8x8xf32> -> vector<2x8x8xf32>
    "tpu.trace_stop"() : () -> ()
    %105 = vector.extract_strided_slice %38 {offsets = [0, 24], sizes = [16, 8], strides = [1, 1]} : vector<16x96xbf16> to vector<16x8xbf16>
    %106 = vector.shape_cast %105 : vector<16x8xbf16> to vector<2x8x8xbf16>
    %107 = vector.extract_strided_slice %38 {offsets = [0, 56], sizes = [16, 8], strides = [1, 1]} : vector<16x96xbf16> to vector<16x8xbf16>
    %108 = vector.shape_cast %107 : vector<16x8xbf16> to vector<2x8x8xbf16>
    %109 = vector.extract_strided_slice %38 {offsets = [0, 88], sizes = [16, 8], strides = [1, 1]} : vector<16x96xbf16> to vector<16x8xbf16>
    %110 = vector.shape_cast %109 : vector<16x8xbf16> to vector<2x8x8xbf16>
    "tpu.trace_start"() <{level = 10 : i32, message = "bqd,bkd->bqk"}> : () -> ()
    %cst_36 = arith.constant dense<0.000000e+00> : vector<2x8x8xf32>
    %111 = tpu.matmul %106, %108, %cst_36 {dimension_numbers = #tpu.dot_dimension_numbers<[2], [2], [1], [1], [0, 0, 0, 1, 1, 1], [0], [0]>} : vector<2x8x8xbf16>, vector<2x8x8xbf16>, vector<2x8x8xf32> -> vector<2x8x8xf32>
    "tpu.trace_stop"() : () -> ()
    %cst_37 = arith.constant 0.353553385 : f32
    %112 = vector.broadcast %cst_37 : f32 to vector<2x8x8xf32>
    %113 = arith.mulf %111, %112 : vector<2x8x8xf32>
    %114 = arith.addf %113, %29 : vector<2x8x8xf32>
    %cst_38 = arith.constant dense<0xFF800000> : vector<2x8xf32>
    %115 = vector.multi_reduction <maximumf>, %114, %cst_38 [2] : vector<2x8x8xf32> to vector<2x8xf32>
    %116 = vector.shape_cast %115 : vector<2x8xf32> to vector<2x8x1xf32>
    %117 = vector.broadcast %116 : vector<2x8x1xf32> to vector<2x8x8xf32>
    %118 = arith.subf %114, %117 : vector<2x8x8xf32>
    %119 = math.exp %118 : vector<2x8x8xf32>
    %cst_39 = arith.constant dense<0.000000e+00> : vector<2x8xf32>
    %120 = vector.multi_reduction <add>, %119, %cst_39 [2] : vector<2x8x8xf32> to vector<2x8xf32>
    %121 = vector.shape_cast %120 : vector<2x8xf32> to vector<2x8x1xf32>
    %122 = tpu.reciprocal %121 {approx = true} : vector<2x8x1xf32> -> vector<2x8x1xf32>
    %123 = vector.broadcast %122 : vector<2x8x1xf32> to vector<2x8x8xf32>
    %124 = arith.mulf %119, %123 : vector<2x8x8xf32>
    %125 = arith.truncf %124 : vector<2x8x8xf32> to vector<2x8x8xbf16>
    "tpu.trace_start"() <{level = 10 : i32, message = "bqk,bkd->bqd"}> : () -> ()
    %cst_40 = arith.constant dense<0.000000e+00> : vector<2x8x8xf32>
    %126 = tpu.matmul %125, %110, %cst_40 {dimension_numbers = #tpu.dot_dimension_numbers<[2], [1], [1], [2], [0, 0, 0, 1, 1, 2], [0], [0]>} : vector<2x8x8xbf16>, vector<2x8x8xbf16>, vector<2x8x8xf32> -> vector<2x8x8xf32>
    "tpu.trace_stop"() : () -> ()
    %127 = tpu.concatenate %60, %82, %104, %126 in 2 : vector<2x8x8xf32>, vector<2x8x8xf32>, vector<2x8x8xf32>, vector<2x8x8xf32> -> vector<2x8x32xf32>
    %128 = vector.shape_cast %127 : vector<2x8x32xf32> to vector<16x32xf32>
    %129 = arith.truncf %128 : vector<16x32xf32> to vector<16x32xbf16>
    %c0_41 = arith.constant 0 : index
    %c0_42 = arith.constant 0 : index
    %c0_43 = arith.constant 0 : index
    %130 = vector.load %arg7[%c0_41, %c0_42, %c0_43] : memref<2x32x32xbf16, #tpu.memory_space<vmem>>, vector<1x32x32xbf16>
    %131 = vector.shape_cast %130 : vector<1x32x32xbf16> to vector<32x32xbf16>
    %cst_44 = arith.constant dense<0.000000e+00> : vector<16x32xf32>
    %132 = tpu.matmul %129, %131, %cst_44 {dimension_numbers = #tpu.dot_dimension_numbers<[1], [0], [0], [1], [0, 0, 1, 1], [], []>} : vector<16x32xbf16>, vector<32x32xbf16>, vector<16x32xf32> -> vector<16x32xf32>
    %c0_45 = arith.constant 0 : index
    %c0_46 = arith.constant 0 : index
    %c0_47 = arith.constant 0 : index
    %133 = vector.load %arg8[%c0_45, %c0_46, %c0_47] : memref<2x1x32xf32, #tpu.memory_space<vmem>>, vector<1x1x32xf32>
    %134 = vector.shape_cast %133 : vector<1x1x32xf32> to vector<1x32xf32>
    %135 = vector.broadcast %134 : vector<1x32xf32> to vector<16x32xf32>
    %136 = arith.addf %132, %135 : vector<16x32xf32>
    %137 = arith.addf %136, %22 : vector<16x32xf32>
    %c0_48 = arith.constant 0 : index
    %c0_49 = arith.constant 0 : index
    %c0_50 = arith.constant 0 : index
    %138 = vector.load %arg9[%c0_48, %c0_49, %c0_50] : memref<2x1x32xf32, #tpu.memory_space<vmem>>, vector<1x1x32xf32>
    %139 = vector.shape_cast %138 : vector<1x1x32xf32> to vector<1x32xf32>
    %c0_51 = arith.constant 0 : index
    %c0_52 = arith.constant 0 : index
    %c0_53 = arith.constant 0 : index
    %140 = vector.load %arg10[%c0_51, %c0_52, %c0_53] : memref<2x1x32xf32, #tpu.memory_space<vmem>>, vector<1x1x32xf32>
    %141 = vector.shape_cast %140 : vector<1x1x32xf32> to vector<1x32xf32>
    %cst_54 = arith.constant dense<0.000000e+00> : vector<16xf32>
    %142 = vector.multi_reduction <add>, %137, %cst_54 [1] : vector<16x32xf32> to vector<16xf32>
    %143 = vector.shape_cast %142 : vector<16xf32> to vector<16x1xf32>
    %cst_55 = arith.constant 3.200000e+01 : f32
    %144 = vector.broadcast %cst_55 : f32 to vector<16x1xf32>
    %145 = arith.divf %143, %144 : vector<16x1xf32>
    %146 = vector.broadcast %145 : vector<16x1xf32> to vector<16x32xf32>
    %147 = arith.subf %137, %146 : vector<16x32xf32>
    %148 = arith.mulf %147, %147 : vector<16x32xf32>
    %cst_56 = arith.constant dense<0.000000e+00> : vector<16xf32>
    %149 = vector.multi_reduction <add>, %148, %cst_56 [1] : vector<16x32xf32> to vector<16xf32>
    %150 = vector.shape_cast %149 : vector<16xf32> to vector<16x1xf32>
    %cst_57 = arith.constant 3.200000e+01 : f32
    %151 = vector.broadcast %cst_57 : f32 to vector<16x1xf32>
    %152 = arith.divf %150, %151 : vector<16x1xf32>
    %cst_58 = arith.constant 9.99999974E-6 : f32
    %153 = vector.broadcast %cst_58 : f32 to vector<16x1xf32>
    %154 = arith.addf %152, %153 : vector<16x1xf32>
    %155 = math.rsqrt %154 : vector<16x1xf32>
    %156 = vector.broadcast %155 : vector<16x1xf32> to vector<16x32xf32>
    %157 = arith.mulf %147, %156 : vector<16x32xf32>
    %158 = vector.broadcast %139 : vector<1x32xf32> to vector<16x32xf32>
    %159 = arith.mulf %157, %158 : vector<16x32xf32>
    %160 = vector.broadcast %141 : vector<1x32xf32> to vector<16x32xf32>
    %161 = arith.addf %159, %160 : vector<16x32xf32>
    %162 = arith.truncf %161 : vector<16x32xf32> to vector<16x32xbf16>
    %c0_59 = arith.constant 0 : index
    %c0_60 = arith.constant 0 : index
    %c0_61 = arith.constant 0 : index
    %163 = vector.load %arg11[%c0_59, %c0_60, %c0_61] : memref<2x32x64xbf16, #tpu.memory_space<vmem>>, vector<1x32x64xbf16>
    %164 = vector.shape_cast %163 : vector<1x32x64xbf16> to vector<32x64xbf16>
    %cst_62 = arith.constant dense<0.000000e+00> : vector<16x64xf32>
    %165 = tpu.matmul %162, %164, %cst_62 {dimension_numbers = #tpu.dot_dimension_numbers<[1], [0], [0], [1], [0, 0, 1, 1], [], []>} : vector<16x32xbf16>, vector<32x64xbf16>, vector<16x64xf32> -> vector<16x64xf32>
    %c0_63 = arith.constant 0 : index
    %c0_64 = arith.constant 0 : index
    %c0_65 = arith.constant 0 : index
    %166 = vector.load %arg12[%c0_63, %c0_64, %c0_65] : memref<2x1x64xf32, #tpu.memory_space<vmem>>, vector<1x1x64xf32>
    %167 = vector.shape_cast %166 : vector<1x1x64xf32> to vector<1x64xf32>
    %168 = vector.broadcast %167 : vector<1x64xf32> to vector<16x64xf32>
    %169 = arith.addf %165, %168 : vector<16x64xf32>
    %cst_66 = arith.constant 5.000000e-01 : f32
    %170 = vector.broadcast %cst_66 : f32 to vector<16x64xf32>
    %171 = arith.mulf %170, %169 : vector<16x64xf32>
    %cst_67 = arith.constant 4.471500e-02 : f32
    %172 = vector.broadcast %cst_67 : f32 to vector<16x64xf32>
    %173 = arith.mulf %172, %169 : vector<16x64xf32>
    %174 = arith.mulf %173, %169 : vector<16x64xf32>
    %175 = arith.mulf %174, %169 : vector<16x64xf32>
    %176 = arith.addf %169, %175 : vector<16x64xf32>
    %cst_68 = arith.constant 0.797884583 : f32
    %177 = vector.broadcast %cst_68 : f32 to vector<16x64xf32>
    %178 = arith.mulf %177, %176 : vector<16x64xf32>
    %179 = math.tanh %178 : vector<16x64xf32>
    %cst_69 = arith.constant 1.000000e+00 : f32
    %180 = vector.broadcast %cst_69 : f32 to vector<16x64xf32>
    %181 = arith.addf %180, %179 : vector<16x64xf32>
    %182 = arith.mulf %171, %181 : vector<16x64xf32>
    %183 = arith.truncf %182 : vector<16x64xf32> to vector<16x64xbf16>
    %c0_70 = arith.constant 0 : index
    %c0_71 = arith.constant 0 : index
    %c0_72 = arith.constant 0 : index
    %184 = vector.load %arg13[%c0_70, %c0_71, %c0_72] : memref<2x64x32xbf16, #tpu.memory_space<vmem>>, vector<1x64x32xbf16>
    %185 = vector.shape_cast %184 : vector<1x64x32xbf16> to vector<64x32xbf16>
    %cst_73 = arith.constant dense<0.000000e+00> : vector<16x32xf32>
    %186 = tpu.matmul %183, %185, %cst_73 {dimension_numbers = #tpu.dot_dimension_numbers<[1], [0], [0], [1], [0, 0, 1, 1], [], []>} : vector<16x64xbf16>, vector<64x32xbf16>, vector<16x32xf32> -> vector<16x32xf32>
    %c0_74 = arith.constant 0 : index
    %c0_75 = arith.constant 0 : index
    %c0_76 = arith.constant 0 : index
    %187 = vector.load %arg14[%c0_74, %c0_75, %c0_76] : memref<2x1x32xf32, #tpu.memory_space<vmem>>, vector<1x1x32xf32>
    %188 = vector.shape_cast %187 : vector<1x1x32xf32> to vector<1x32xf32>
    %189 = vector.broadcast %188 : vector<1x32xf32> to vector<16x32xf32>
    %190 = arith.addf %186, %189 : vector<16x32xf32>
    %191 = arith.addf %190, %161 : vector<16x32xf32>
    %c0_77 = arith.constant 0 : index
    %c0_78 = arith.constant 0 : index
    %c0_79 = arith.constant 0 : index
    %192 = vector.load %arg15[%c0_77, %c0_78, %c0_79] : memref<2x1x32xf32, #tpu.memory_space<vmem>>, vector<1x1x32xf32>
    %193 = vector.shape_cast %192 : vector<1x1x32xf32> to vector<1x32xf32>
    %c0_80 = arith.constant 0 : index
    %c0_81 = arith.constant 0 : index
    %c0_82 = arith.constant 0 : index
    %194 = vector.load %arg16[%c0_80, %c0_81, %c0_82] : memref<2x1x32xf32, #tpu.memory_space<vmem>>, vector<1x1x32xf32>
    %195 = vector.shape_cast %194 : vector<1x1x32xf32> to vector<1x32xf32>
    %cst_83 = arith.constant dense<0.000000e+00> : vector<16xf32>
    %196 = vector.multi_reduction <add>, %191, %cst_83 [1] : vector<16x32xf32> to vector<16xf32>
    %197 = vector.shape_cast %196 : vector<16xf32> to vector<16x1xf32>
    %cst_84 = arith.constant 3.200000e+01 : f32
    %198 = vector.broadcast %cst_84 : f32 to vector<16x1xf32>
    %199 = arith.divf %197, %198 : vector<16x1xf32>
    %200 = vector.broadcast %199 : vector<16x1xf32> to vector<16x32xf32>
    %201 = arith.subf %191, %200 : vector<16x32xf32>
    %202 = arith.mulf %201, %201 : vector<16x32xf32>
    %cst_85 = arith.constant dense<0.000000e+00> : vector<16xf32>
    %203 = vector.multi_reduction <add>, %202, %cst_85 [1] : vector<16x32xf32> to vector<16xf32>
    %204 = vector.shape_cast %203 : vector<16xf32> to vector<16x1xf32>
    %cst_86 = arith.constant 3.200000e+01 : f32
    %205 = vector.broadcast %cst_86 : f32 to vector<16x1xf32>
    %206 = arith.divf %204, %205 : vector<16x1xf32>
    %cst_87 = arith.constant 9.99999974E-6 : f32
    %207 = vector.broadcast %cst_87 : f32 to vector<16x1xf32>
    %208 = arith.addf %206, %207 : vector<16x1xf32>
    %209 = math.rsqrt %208 : vector<16x1xf32>
    %210 = vector.broadcast %209 : vector<16x1xf32> to vector<16x32xf32>
    %211 = arith.mulf %201, %210 : vector<16x32xf32>
    %212 = vector.broadcast %193 : vector<1x32xf32> to vector<16x32xf32>
    %213 = arith.mulf %211, %212 : vector<16x32xf32>
    %214 = vector.broadcast %195 : vector<1x32xf32> to vector<16x32xf32>
    %215 = arith.addf %213, %214 : vector<16x32xf32>
    %216 = arith.truncf %215 : vector<16x32xf32> to vector<16x32xbf16>
    %c1 = arith.constant 1 : index
    %c0_88 = arith.constant 0 : index
    %c0_89 = arith.constant 0 : index
    %217 = vector.load %arg5[%c1, %c0_88, %c0_89] : memref<2x32x96xbf16, #tpu.memory_space<vmem>>, vector<1x32x96xbf16>
    %218 = vector.shape_cast %217 : vector<1x32x96xbf16> to vector<32x96xbf16>
    %cst_90 = arith.constant dense<0.000000e+00> : vector<16x96xf32>
    %219 = tpu.matmul %216, %218, %cst_90 {dimension_numbers = #tpu.dot_dimension_numbers<[1], [0], [0], [1], [0, 0, 1, 1], [], []>} : vector<16x32xbf16>, vector<32x96xbf16>, vector<16x96xf32> -> vector<16x96xf32>
    %c1_91 = arith.constant 1 : index
    %c0_92 = arith.constant 0 : index
    %c0_93 = arith.constant 0 : index
    %220 = vector.load %arg6[%c1_91, %c0_92, %c0_93] : memref<2x1x96xf32, #tpu.memory_space<vmem>>, vector<1x1x96xf32>
    %221 = vector.shape_cast %220 : vector<1x1x96xf32> to vector<1x96xf32>
    %222 = vector.broadcast %221 : vector<1x96xf32> to vector<16x96xf32>
    %223 = arith.addf %219, %222 : vector<16x96xf32>
    %224 = arith.truncf %223 : vector<16x96xf32> to vector<16x96xbf16>
    %225 = vector.extract_strided_slice %224 {offsets = [0, 0], sizes = [16, 8], strides = [1, 1]} : vector<16x96xbf16> to vector<16x8xbf16>
    %226 = vector.shape_cast %225 : vector<16x8xbf16> to vector<2x8x8xbf16>
    %227 = vector.extract_strided_slice %224 {offsets = [0, 32], sizes = [16, 8], strides = [1, 1]} : vector<16x96xbf16> to vector<16x8xbf16>
    %228 = vector.shape_cast %227 : vector<16x8xbf16> to vector<2x8x8xbf16>
    %229 = vector.extract_strided_slice %224 {offsets = [0, 64], sizes = [16, 8], strides = [1, 1]} : vector<16x96xbf16> to vector<16x8xbf16>
    %230 = vector.shape_cast %229 : vector<16x8xbf16> to vector<2x8x8xbf16>
    "tpu.trace_start"() <{level = 10 : i32, message = "bqd,bkd->bqk"}> : () -> ()
    %cst_94 = arith.constant dense<0.000000e+00> : vector<2x8x8xf32>
    %231 = tpu.matmul %226, %228, %cst_94 {dimension_numbers = #tpu.dot_dimension_numbers<[2], [2], [1], [1], [0, 0, 0, 1, 1, 1], [0], [0]>} : vector<2x8x8xbf16>, vector<2x8x8xbf16>, vector<2x8x8xf32> -> vector<2x8x8xf32>
    "tpu.trace_stop"() : () -> ()
    %cst_95 = arith.constant 0.353553385 : f32
    %232 = vector.broadcast %cst_95 : f32 to vector<2x8x8xf32>
    %233 = arith.mulf %231, %232 : vector<2x8x8xf32>
    %234 = arith.addf %233, %29 : vector<2x8x8xf32>
    %cst_96 = arith.constant dense<0xFF800000> : vector<2x8xf32>
    %235 = vector.multi_reduction <maximumf>, %234, %cst_96 [2] : vector<2x8x8xf32> to vector<2x8xf32>
    %236 = vector.shape_cast %235 : vector<2x8xf32> to vector<2x8x1xf32>
    %237 = vector.broadcast %236 : vector<2x8x1xf32> to vector<2x8x8xf32>
    %238 = arith.subf %234, %237 : vector<2x8x8xf32>
    %239 = math.exp %238 : vector<2x8x8xf32>
    %cst_97 = arith.constant dense<0.000000e+00> : vector<2x8xf32>
    %240 = vector.multi_reduction <add>, %239, %cst_97 [2] : vector<2x8x8xf32> to vector<2x8xf32>
    %241 = vector.shape_cast %240 : vector<2x8xf32> to vector<2x8x1xf32>
    %242 = tpu.reciprocal %241 {approx = true} : vector<2x8x1xf32> -> vector<2x8x1xf32>
    %243 = vector.broadcast %242 : vector<2x8x1xf32> to vector<2x8x8xf32>
    %244 = arith.mulf %239, %243 : vector<2x8x8xf32>
    %245 = arith.truncf %244 : vector<2x8x8xf32> to vector<2x8x8xbf16>
    "tpu.trace_start"() <{level = 10 : i32, message = "bqk,bkd->bqd"}> : () -> ()
    %cst_98 = arith.constant dense<0.000000e+00> : vector<2x8x8xf32>
    %246 = tpu.matmul %245, %230, %cst_98 {dimension_numbers = #tpu.dot_dimension_numbers<[2], [1], [1], [2], [0, 0, 0, 1, 1, 2], [0], [0]>} : vector<2x8x8xbf16>, vector<2x8x8xbf16>, vector<2x8x8xf32> -> vector<2x8x8xf32>
    "tpu.trace_stop"() : () -> ()
    %247 = vector.extract_strided_slice %224 {offsets = [0, 8], sizes = [16, 8], strides = [1, 1]} : vector<16x96xbf16> to vector<16x8xbf16>
    %248 = vector.shape_cast %247 : vector<16x8xbf16> to vector<2x8x8xbf16>
    %249 = vector.extract_strided_slice %224 {offsets = [0, 40], sizes = [16, 8], strides = [1, 1]} : vector<16x96xbf16> to vector<16x8xbf16>
    %250 = vector.shape_cast %249 : vector<16x8xbf16> to vector<2x8x8xbf16>
    %251 = vector.extract_strided_slice %224 {offsets = [0, 72], sizes = [16, 8], strides = [1, 1]} : vector<16x96xbf16> to vector<16x8xbf16>
    %252 = vector.shape_cast %251 : vector<16x8xbf16> to vector<2x8x8xbf16>
    "tpu.trace_start"() <{level = 10 : i32, message = "bqd,bkd->bqk"}> : () -> ()
    %cst_99 = arith.constant dense<0.000000e+00> : vector<2x8x8xf32>
    %253 = tpu.matmul %248, %250, %cst_99 {dimension_numbers = #tpu.dot_dimension_numbers<[2], [2], [1], [1], [0, 0, 0, 1, 1, 1], [0], [0]>} : vector<2x8x8xbf16>, vector<2x8x8xbf16>, vector<2x8x8xf32> -> vector<2x8x8xf32>
    "tpu.trace_stop"() : () -> ()
    %cst_100 = arith.constant 0.353553385 : f32
    %254 = vector.broadcast %cst_100 : f32 to vector<2x8x8xf32>
    %255 = arith.mulf %253, %254 : vector<2x8x8xf32>
    %256 = arith.addf %255, %29 : vector<2x8x8xf32>
    %cst_101 = arith.constant dense<0xFF800000> : vector<2x8xf32>
    %257 = vector.multi_reduction <maximumf>, %256, %cst_101 [2] : vector<2x8x8xf32> to vector<2x8xf32>
    %258 = vector.shape_cast %257 : vector<2x8xf32> to vector<2x8x1xf32>
    %259 = vector.broadcast %258 : vector<2x8x1xf32> to vector<2x8x8xf32>
    %260 = arith.subf %256, %259 : vector<2x8x8xf32>
    %261 = math.exp %260 : vector<2x8x8xf32>
    %cst_102 = arith.constant dense<0.000000e+00> : vector<2x8xf32>
    %262 = vector.multi_reduction <add>, %261, %cst_102 [2] : vector<2x8x8xf32> to vector<2x8xf32>
    %263 = vector.shape_cast %262 : vector<2x8xf32> to vector<2x8x1xf32>
    %264 = tpu.reciprocal %263 {approx = true} : vector<2x8x1xf32> -> vector<2x8x1xf32>
    %265 = vector.broadcast %264 : vector<2x8x1xf32> to vector<2x8x8xf32>
    %266 = arith.mulf %261, %265 : vector<2x8x8xf32>
    %267 = arith.truncf %266 : vector<2x8x8xf32> to vector<2x8x8xbf16>
    "tpu.trace_start"() <{level = 10 : i32, message = "bqk,bkd->bqd"}> : () -> ()
    %cst_103 = arith.constant dense<0.000000e+00> : vector<2x8x8xf32>
    %268 = tpu.matmul %267, %252, %cst_103 {dimension_numbers = #tpu.dot_dimension_numbers<[2], [1], [1], [2], [0, 0, 0, 1, 1, 2], [0], [0]>} : vector<2x8x8xbf16>, vector<2x8x8xbf16>, vector<2x8x8xf32> -> vector<2x8x8xf32>
    "tpu.trace_stop"() : () -> ()
    %269 = vector.extract_strided_slice %224 {offsets = [0, 16], sizes = [16, 8], strides = [1, 1]} : vector<16x96xbf16> to vector<16x8xbf16>
    %270 = vector.shape_cast %269 : vector<16x8xbf16> to vector<2x8x8xbf16>
    %271 = vector.extract_strided_slice %224 {offsets = [0, 48], sizes = [16, 8], strides = [1, 1]} : vector<16x96xbf16> to vector<16x8xbf16>
    %272 = vector.shape_cast %271 : vector<16x8xbf16> to vector<2x8x8xbf16>
    %273 = vector.extract_strided_slice %224 {offsets = [0, 80], sizes = [16, 8], strides = [1, 1]} : vector<16x96xbf16> to vector<16x8xbf16>
    %274 = vector.shape_cast %273 : vector<16x8xbf16> to vector<2x8x8xbf16>
    "tpu.trace_start"() <{level = 10 : i32, message = "bqd,bkd->bqk"}> : () -> ()
    %cst_104 = arith.constant dense<0.000000e+00> : vector<2x8x8xf32>
    %275 = tpu.matmul %270, %272, %cst_104 {dimension_numbers = #tpu.dot_dimension_numbers<[2], [2], [1], [1], [0, 0, 0, 1, 1, 1], [0], [0]>} : vector<2x8x8xbf16>, vector<2x8x8xbf16>, vector<2x8x8xf32> -> vector<2x8x8xf32>
    "tpu.trace_stop"() : () -> ()
    %cst_105 = arith.constant 0.353553385 : f32
    %276 = vector.broadcast %cst_105 : f32 to vector<2x8x8xf32>
    %277 = arith.mulf %275, %276 : vector<2x8x8xf32>
    %278 = arith.addf %277, %29 : vector<2x8x8xf32>
    %cst_106 = arith.constant dense<0xFF800000> : vector<2x8xf32>
    %279 = vector.multi_reduction <maximumf>, %278, %cst_106 [2] : vector<2x8x8xf32> to vector<2x8xf32>
    %280 = vector.shape_cast %279 : vector<2x8xf32> to vector<2x8x1xf32>
    %281 = vector.broadcast %280 : vector<2x8x1xf32> to vector<2x8x8xf32>
    %282 = arith.subf %278, %281 : vector<2x8x8xf32>
    %283 = math.exp %282 : vector<2x8x8xf32>
    %cst_107 = arith.constant dense<0.000000e+00> : vector<2x8xf32>
    %284 = vector.multi_reduction <add>, %283, %cst_107 [2] : vector<2x8x8xf32> to vector<2x8xf32>
    %285 = vector.shape_cast %284 : vector<2x8xf32> to vector<2x8x1xf32>
    %286 = tpu.reciprocal %285 {approx = true} : vector<2x8x1xf32> -> vector<2x8x1xf32>
    %287 = vector.broadcast %286 : vector<2x8x1xf32> to vector<2x8x8xf32>
    %288 = arith.mulf %283, %287 : vector<2x8x8xf32>
    %289 = arith.truncf %288 : vector<2x8x8xf32> to vector<2x8x8xbf16>
    "tpu.trace_start"() <{level = 10 : i32, message = "bqk,bkd->bqd"}> : () -> ()
    %cst_108 = arith.constant dense<0.000000e+00> : vector<2x8x8xf32>
    %290 = tpu.matmul %289, %274, %cst_108 {dimension_numbers = #tpu.dot_dimension_numbers<[2], [1], [1], [2], [0, 0, 0, 1, 1, 2], [0], [0]>} : vector<2x8x8xbf16>, vector<2x8x8xbf16>, vector<2x8x8xf32> -> vector<2x8x8xf32>
    "tpu.trace_stop"() : () -> ()
    %291 = vector.extract_strided_slice %224 {offsets = [0, 24], sizes = [16, 8], strides = [1, 1]} : vector<16x96xbf16> to vector<16x8xbf16>
    %292 = vector.shape_cast %291 : vector<16x8xbf16> to vector<2x8x8xbf16>
    %293 = vector.extract_strided_slice %224 {offsets = [0, 56], sizes = [16, 8], strides = [1, 1]} : vector<16x96xbf16> to vector<16x8xbf16>
    %294 = vector.shape_cast %293 : vector<16x8xbf16> to vector<2x8x8xbf16>
    %295 = vector.extract_strided_slice %224 {offsets = [0, 88], sizes = [16, 8], strides = [1, 1]} : vector<16x96xbf16> to vector<16x8xbf16>
    %296 = vector.shape_cast %295 : vector<16x8xbf16> to vector<2x8x8xbf16>
    "tpu.trace_start"() <{level = 10 : i32, message = "bqd,bkd->bqk"}> : () -> ()
    %cst_109 = arith.constant dense<0.000000e+00> : vector<2x8x8xf32>
    %297 = tpu.matmul %292, %294, %cst_109 {dimension_numbers = #tpu.dot_dimension_numbers<[2], [2], [1], [1], [0, 0, 0, 1, 1, 1], [0], [0]>} : vector<2x8x8xbf16>, vector<2x8x8xbf16>, vector<2x8x8xf32> -> vector<2x8x8xf32>
    "tpu.trace_stop"() : () -> ()
    %cst_110 = arith.constant 0.353553385 : f32
    %298 = vector.broadcast %cst_110 : f32 to vector<2x8x8xf32>
    %299 = arith.mulf %297, %298 : vector<2x8x8xf32>
    %300 = arith.addf %299, %29 : vector<2x8x8xf32>
    %cst_111 = arith.constant dense<0xFF800000> : vector<2x8xf32>
    %301 = vector.multi_reduction <maximumf>, %300, %cst_111 [2] : vector<2x8x8xf32> to vector<2x8xf32>
    %302 = vector.shape_cast %301 : vector<2x8xf32> to vector<2x8x1xf32>
    %303 = vector.broadcast %302 : vector<2x8x1xf32> to vector<2x8x8xf32>
    %304 = arith.subf %300, %303 : vector<2x8x8xf32>
    %305 = math.exp %304 : vector<2x8x8xf32>
    %cst_112 = arith.constant dense<0.000000e+00> : vector<2x8xf32>
    %306 = vector.multi_reduction <add>, %305, %cst_112 [2] : vector<2x8x8xf32> to vector<2x8xf32>
    %307 = vector.shape_cast %306 : vector<2x8xf32> to vector<2x8x1xf32>
    %308 = tpu.reciprocal %307 {approx = true} : vector<2x8x1xf32> -> vector<2x8x1xf32>
    %309 = vector.broadcast %308 : vector<2x8x1xf32> to vector<2x8x8xf32>
    %310 = arith.mulf %305, %309 : vector<2x8x8xf32>
    %311 = arith.truncf %310 : vector<2x8x8xf32> to vector<2x8x8xbf16>
    "tpu.trace_start"() <{level = 10 : i32, message = "bqk,bkd->bqd"}> : () -> ()
    %cst_113 = arith.constant dense<0.000000e+00> : vector<2x8x8xf32>
    %312 = tpu.matmul %311, %296, %cst_113 {dimension_numbers = #tpu.dot_dimension_numbers<[2], [1], [1], [2], [0, 0, 0, 1, 1, 2], [0], [0]>} : vector<2x8x8xbf16>, vector<2x8x8xbf16>, vector<2x8x8xf32> -> vector<2x8x8xf32>
    "tpu.trace_stop"() : () -> ()
    %313 = tpu.concatenate %246, %268, %290, %312 in 2 : vector<2x8x8xf32>, vector<2x8x8xf32>, vector<2x8x8xf32>, vector<2x8x8xf32> -> vector<2x8x32xf32>
    %314 = vector.shape_cast %313 : vector<2x8x32xf32> to vector<16x32xf32>
    %315 = arith.truncf %314 : vector<16x32xf32> to vector<16x32xbf16>
    %c1_114 = arith.constant 1 : index
    %c0_115 = arith.constant 0 : index
    %c0_116 = arith.constant 0 : index
    %316 = vector.load %arg7[%c1_114, %c0_115, %c0_116] : memref<2x32x32xbf16, #tpu.memory_space<vmem>>, vector<1x32x32xbf16>
    %317 = vector.shape_cast %316 : vector<1x32x32xbf16> to vector<32x32xbf16>
    %cst_117 = arith.constant dense<0.000000e+00> : vector<16x32xf32>
    %318 = tpu.matmul %315, %317, %cst_117 {dimension_numbers = #tpu.dot_dimension_numbers<[1], [0], [0], [1], [0, 0, 1, 1], [], []>} : vector<16x32xbf16>, vector<32x32xbf16>, vector<16x32xf32> -> vector<16x32xf32>
    %c1_118 = arith.constant 1 : index
    %c0_119 = arith.constant 0 : index
    %c0_120 = arith.constant 0 : index
    %319 = vector.load %arg8[%c1_118, %c0_119, %c0_120] : memref<2x1x32xf32, #tpu.memory_space<vmem>>, vector<1x1x32xf32>
    %320 = vector.shape_cast %319 : vector<1x1x32xf32> to vector<1x32xf32>
    %321 = vector.broadcast %320 : vector<1x32xf32> to vector<16x32xf32>
    %322 = arith.addf %318, %321 : vector<16x32xf32>
    %323 = arith.addf %322, %215 : vector<16x32xf32>
    %c1_121 = arith.constant 1 : index
    %c0_122 = arith.constant 0 : index
    %c0_123 = arith.constant 0 : index
    %324 = vector.load %arg9[%c1_121, %c0_122, %c0_123] : memref<2x1x32xf32, #tpu.memory_space<vmem>>, vector<1x1x32xf32>
    %325 = vector.shape_cast %324 : vector<1x1x32xf32> to vector<1x32xf32>
    %c1_124 = arith.constant 1 : index
    %c0_125 = arith.constant 0 : index
    %c0_126 = arith.constant 0 : index
    %326 = vector.load %arg10[%c1_124, %c0_125, %c0_126] : memref<2x1x32xf32, #tpu.memory_space<vmem>>, vector<1x1x32xf32>
    %327 = vector.shape_cast %326 : vector<1x1x32xf32> to vector<1x32xf32>
    %cst_127 = arith.constant dense<0.000000e+00> : vector<16xf32>
    %328 = vector.multi_reduction <add>, %323, %cst_127 [1] : vector<16x32xf32> to vector<16xf32>
    %329 = vector.shape_cast %328 : vector<16xf32> to vector<16x1xf32>
    %cst_128 = arith.constant 3.200000e+01 : f32
    %330 = vector.broadcast %cst_128 : f32 to vector<16x1xf32>
    %331 = arith.divf %329, %330 : vector<16x1xf32>
    %332 = vector.broadcast %331 : vector<16x1xf32> to vector<16x32xf32>
    %333 = arith.subf %323, %332 : vector<16x32xf32>
    %334 = arith.mulf %333, %333 : vector<16x32xf32>
    %cst_129 = arith.constant dense<0.000000e+00> : vector<16xf32>
    %335 = vector.multi_reduction <add>, %334, %cst_129 [1] : vector<16x32xf32> to vector<16xf32>
    %336 = vector.shape_cast %335 : vector<16xf32> to vector<16x1xf32>
    %cst_130 = arith.constant 3.200000e+01 : f32
    %337 = vector.broadcast %cst_130 : f32 to vector<16x1xf32>
    %338 = arith.divf %336, %337 : vector<16x1xf32>
    %cst_131 = arith.constant 9.99999974E-6 : f32
    %339 = vector.broadcast %cst_131 : f32 to vector<16x1xf32>
    %340 = arith.addf %338, %339 : vector<16x1xf32>
    %341 = math.rsqrt %340 : vector<16x1xf32>
    %342 = vector.broadcast %341 : vector<16x1xf32> to vector<16x32xf32>
    %343 = arith.mulf %333, %342 : vector<16x32xf32>
    %344 = vector.broadcast %325 : vector<1x32xf32> to vector<16x32xf32>
    %345 = arith.mulf %343, %344 : vector<16x32xf32>
    %346 = vector.broadcast %327 : vector<1x32xf32> to vector<16x32xf32>
    %347 = arith.addf %345, %346 : vector<16x32xf32>
    %348 = arith.truncf %347 : vector<16x32xf32> to vector<16x32xbf16>
    %c1_132 = arith.constant 1 : index
    %c0_133 = arith.constant 0 : index
    %c0_134 = arith.constant 0 : index
    %349 = vector.load %arg11[%c1_132, %c0_133, %c0_134] : memref<2x32x64xbf16, #tpu.memory_space<vmem>>, vector<1x32x64xbf16>
    %350 = vector.shape_cast %349 : vector<1x32x64xbf16> to vector<32x64xbf16>
    %cst_135 = arith.constant dense<0.000000e+00> : vector<16x64xf32>
    %351 = tpu.matmul %348, %350, %cst_135 {dimension_numbers = #tpu.dot_dimension_numbers<[1], [0], [0], [1], [0, 0, 1, 1], [], []>} : vector<16x32xbf16>, vector<32x64xbf16>, vector<16x64xf32> -> vector<16x64xf32>
    %c1_136 = arith.constant 1 : index
    %c0_137 = arith.constant 0 : index
    %c0_138 = arith.constant 0 : index
    %352 = vector.load %arg12[%c1_136, %c0_137, %c0_138] : memref<2x1x64xf32, #tpu.memory_space<vmem>>, vector<1x1x64xf32>
    %353 = vector.shape_cast %352 : vector<1x1x64xf32> to vector<1x64xf32>
    %354 = vector.broadcast %353 : vector<1x64xf32> to vector<16x64xf32>
    %355 = arith.addf %351, %354 : vector<16x64xf32>
    %cst_139 = arith.constant 5.000000e-01 : f32
    %356 = vector.broadcast %cst_139 : f32 to vector<16x64xf32>
    %357 = arith.mulf %356, %355 : vector<16x64xf32>
    %cst_140 = arith.constant 4.471500e-02 : f32
    %358 = vector.broadcast %cst_140 : f32 to vector<16x64xf32>
    %359 = arith.mulf %358, %355 : vector<16x64xf32>
    %360 = arith.mulf %359, %355 : vector<16x64xf32>
    %361 = arith.mulf %360, %355 : vector<16x64xf32>
    %362 = arith.addf %355, %361 : vector<16x64xf32>
    %cst_141 = arith.constant 0.797884583 : f32
    %363 = vector.broadcast %cst_141 : f32 to vector<16x64xf32>
    %364 = arith.mulf %363, %362 : vector<16x64xf32>
    %365 = math.tanh %364 : vector<16x64xf32>
    %cst_142 = arith.constant 1.000000e+00 : f32
    %366 = vector.broadcast %cst_142 : f32 to vector<16x64xf32>
    %367 = arith.addf %366, %365 : vector<16x64xf32>
    %368 = arith.mulf %357, %367 : vector<16x64xf32>
    %369 = arith.truncf %368 : vector<16x64xf32> to vector<16x64xbf16>
    %c1_143 = arith.constant 1 : index
    %c0_144 = arith.constant 0 : index
    %c0_145 = arith.constant 0 : index
    %370 = vector.load %arg13[%c1_143, %c0_144, %c0_145] : memref<2x64x32xbf16, #tpu.memory_space<vmem>>, vector<1x64x32xbf16>
    %371 = vector.shape_cast %370 : vector<1x64x32xbf16> to vector<64x32xbf16>
    %cst_146 = arith.constant dense<0.000000e+00> : vector<16x32xf32>
    %372 = tpu.matmul %369, %371, %cst_146 {dimension_numbers = #tpu.dot_dimension_numbers<[1], [0], [0], [1], [0, 0, 1, 1], [], []>} : vector<16x64xbf16>, vector<64x32xbf16>, vector<16x32xf32> -> vector<16x32xf32>
    %c1_147 = arith.constant 1 : index
    %c0_148 = arith.constant 0 : index
    %c0_149 = arith.constant 0 : index
    %373 = vector.load %arg14[%c1_147, %c0_148, %c0_149] : memref<2x1x32xf32, #tpu.memory_space<vmem>>, vector<1x1x32xf32>
    %374 = vector.shape_cast %373 : vector<1x1x32xf32> to vector<1x32xf32>
    %375 = vector.broadcast %374 : vector<1x32xf32> to vector<16x32xf32>
    %376 = arith.addf %372, %375 : vector<16x32xf32>
    %377 = arith.addf %376, %347 : vector<16x32xf32>
    %c1_150 = arith.constant 1 : index
    %c0_151 = arith.constant 0 : index
    %c0_152 = arith.constant 0 : index
    %378 = vector.load %arg15[%c1_150, %c0_151, %c0_152] : memref<2x1x32xf32, #tpu.memory_space<vmem>>, vector<1x1x32xf32>
    %379 = vector.shape_cast %378 : vector<1x1x32xf32> to vector<1x32xf32>
    %c1_153 = arith.constant 1 : index
    %c0_154 = arith.constant 0 : index
    %c0_155 = arith.constant 0 : index
    %380 = vector.load %arg16[%c1_153, %c0_154, %c0_155] : memref<2x1x32xf32, #tpu.memory_space<vmem>>, vector<1x1x32xf32>
    %381 = vector.shape_cast %380 : vector<1x1x32xf32> to vector<1x32xf32>
    %cst_156 = arith.constant dense<0.000000e+00> : vector<16xf32>
    %382 = vector.multi_reduction <add>, %377, %cst_156 [1] : vector<16x32xf32> to vector<16xf32>
    %383 = vector.shape_cast %382 : vector<16xf32> to vector<16x1xf32>
    %cst_157 = arith.constant 3.200000e+01 : f32
    %384 = vector.broadcast %cst_157 : f32 to vector<16x1xf32>
    %385 = arith.divf %383, %384 : vector<16x1xf32>
    %386 = vector.broadcast %385 : vector<16x1xf32> to vector<16x32xf32>
    %387 = arith.subf %377, %386 : vector<16x32xf32>
    %388 = arith.mulf %387, %387 : vector<16x32xf32>
    %cst_158 = arith.constant dense<0.000000e+00> : vector<16xf32>
    %389 = vector.multi_reduction <add>, %388, %cst_158 [1] : vector<16x32xf32> to vector<16xf32>
    %390 = vector.shape_cast %389 : vector<16xf32> to vector<16x1xf32>
    %cst_159 = arith.constant 3.200000e+01 : f32
    %391 = vector.broadcast %cst_159 : f32 to vector<16x1xf32>
    %392 = arith.divf %390, %391 : vector<16x1xf32>
    %cst_160 = arith.constant 9.99999974E-6 : f32
    %393 = vector.broadcast %cst_160 : f32 to vector<16x1xf32>
    %394 = arith.addf %392, %393 : vector<16x1xf32>
    %395 = math.rsqrt %394 : vector<16x1xf32>
    %396 = vector.broadcast %395 : vector<16x1xf32> to vector<16x32xf32>
    %397 = arith.mulf %387, %396 : vector<16x32xf32>
    %398 = vector.broadcast %379 : vector<1x32xf32> to vector<16x32xf32>
    %399 = arith.mulf %397, %398 : vector<16x32xf32>
    %400 = vector.broadcast %381 : vector<1x32xf32> to vector<16x32xf32>
    %401 = arith.addf %399, %400 : vector<16x32xf32>
    %402 = vector.shape_cast %401 : vector<16x32xf32> to vector<2x8x32xf32>
    %cst_161 = arith.constant dense<0.000000e+00> : vector<2x32xf32>
    %403 = vector.multi_reduction <add>, %402, %cst_161 [1] : vector<2x8x32xf32> to vector<2x32xf32>
    %cst_162 = arith.constant 8.000000e+00 : f32
    %404 = vector.broadcast %cst_162 : f32 to vector<2x32xf32>
    %405 = arith.divf %403, %404 : vector<2x32xf32>
    %406 = arith.truncf %405 : vector<2x32xf32> to vector<2x32xbf16>
    %c0_163 = arith.constant 0 : index
    %c0_164 = arith.constant 0 : index
    %407 = vector.load %arg17[%c0_163, %c0_164] : memref<32x3xbf16, #tpu.memory_space<vmem>>, vector<32x3xbf16>
    %cst_165 = arith.constant dense<0.000000e+00> : vector<2x3xf32>
    %408 = tpu.matmul %406, %407, %cst_165 {dimension_numbers = #tpu.dot_dimension_numbers<[1], [0], [0], [1], [0, 0, 1, 1], [], []>} : vector<2x32xbf16>, vector<32x3xbf16>, vector<2x3xf32> -> vector<2x3xf32>
    %c0_166 = arith.constant 0 : index
    %c0_167 = arith.constant 0 : index
    %409 = vector.load %arg18[%c0_166, %c0_167] : memref<1x3xf32, #tpu.memory_space<vmem>>, vector<1x3xf32>
    %410 = vector.broadcast %409 : vector<1x3xf32> to vector<2x3xf32>
    %411 = arith.addf %408, %410 : vector<2x3xf32>
    %c0_168 = arith.constant 0 : index
    %c0_169 = arith.constant 0 : index
    %412 = vector.load %arg19[%c0_168, %c0_169] : memref<2x3xf32, #tpu.memory_space<vmem>>, vector<2x3xf32>
    tpu.vector_store %arg19[%c0_168, %c0_169], %411 {strides = array<i32>} : memref<2x3xf32, #tpu.memory_space<vmem>>, vector<2x3xf32>,
    %cst_170 = arith.constant dense<0xFF800000> : vector<2xf32>
    %413 = vector.multi_reduction <maximumf>, %411, %cst_170 [1] : vector<2x3xf32> to vector<2xf32>
    %414 = vector.shape_cast %413 : vector<2xf32> to vector<2x1xf32>
    %415 = vector.broadcast %414 : vector<2x1xf32> to vector<2x3xf32>
    %416 = arith.subf %411, %415 : vector<2x3xf32>
    %417 = math.exp %416 : vector<2x3xf32>
    %cst_171 = arith.constant dense<0.000000e+00> : vector<2xf32>
    %418 = vector.multi_reduction <add>, %417, %cst_171 [1] : vector<2x3xf32> to vector<2xf32>
    %419 = vector.shape_cast %418 : vector<2xf32> to vector<2x1xf32>
    %420 = math.log %419 : vector<2x1xf32>
    %421 = arith.addf %414, %420 : vector<2x1xf32>
    %422 = vector.broadcast %421 : vector<2x1xf32> to vector<2x3xf32>
    %423 = arith.subf %422, %411 : vector<2x3xf32>
    %c0_172 = arith.constant 0 : index
    %c0_173 = arith.constant 0 : index
    %424 = vector.load %arg2[%c0_172, %c0_173] : memref<2x3xf32, #tpu.memory_space<vmem>>, vector<2x3xf32>
    %425 = arith.mulf %423, %424 : vector<2x3xf32>
    %cst_174 = arith.constant dense<0.000000e+00> : vector<2xf32>
    %426 = vector.multi_reduction <add>, %425, %cst_174 [1] : vector<2x3xf32> to vector<2xf32>
    %427 = vector.shape_cast %426 : vector<2xf32> to vector<2x1xf32>
    %428 = vector.shape_cast %427 : vector<2x1xf32> to vector<1x2x1xf32>
    %cst_175 = arith.constant dense<0.000000e+00> : vector<1xf32>
    %429 = vector.multi_reduction <add>, %428, %cst_175 [1, 2] : vector<1x2x1xf32> to vector<1xf32>
    %430 = vector.shape_cast %429 : vector<1xf32> to vector<1x1x1xf32>
    %431 = vector.extract %430[0, 0, 0] : f32 from vector<1x1x1xf32>
    %cst_176 = arith.constant 2.000000e+00 : f32
    %432 = arith.divf %431, %cst_176 : f32
    %433 = vector.broadcast %432 : f32 to vector<1x1xf32>
    %c0_177 = arith.constant 0 : index
    %c0_178 = arith.constant 0 : index
    %434 = vector.load %arg20[%c0_177, %c0_178] : memref<1x1xf32, #tpu.memory_space<vmem>>, vector<1x1xf32>
    tpu.vector_store %arg20[%c0_177, %c0_178], %433 {strides = array<i32>} : memref<1x1xf32, #tpu.memory_space<vmem>>, vector<1x1xf32>,
    return
  }
}

</mosaic_0001>

<llo_original>
// kernel: tpu_custom_call.1
$region0: #{tpu_custom_call.1}
  #allocation0 [shape = 'u32[]', space=smem, size = 0x4, offset = 0x4, fixed_abs, tag = 'smem constant byte address 0x4 - core index']
  #allocation1 [shape = 'u32[144,128]{1,0:T(1,128)}', space=vmem, size = 0x12000, scoped, tag = 'internal scratch']
  %s0 = inlined_call_operand.hbm [shape: f32[16,32], index: 0, kind: input, shape index: {}]
  %s1 = inlined_call_operand.vmem [shape: f32[2,1,8], index: 1, kind: input, shape index: {}]
  %s2 = inlined_call_operand.vmem [shape: f32[2,3], index: 2, kind: input, shape index: {}]
  %s3 = inlined_call_operand.vmem [shape: f32[1,32], index: 3, kind: input, shape index: {}]
  %s4 = inlined_call_operand.hbm [shape: f32[1,32], index: 4, kind: input, shape index: {}]
  %s5 = inlined_call_operand.vmem [shape: bf16[2,32,96], index: 5, kind: input, shape index: {}]
  %s6 = inlined_call_operand.vmem [shape: f32[2,1,96], index: 6, kind: input, shape index: {}]
  %s7 = inlined_call_operand.vmem [shape: bf16[2,32,32], index: 7, kind: input, shape index: {}]
  %s8 = inlined_call_operand.vmem [shape: f32[2,1,32], index: 8, kind: input, shape index: {}]
  %s9 = inlined_call_operand.hbm [shape: f32[2,1,32], index: 9, kind: input, shape index: {}]
  %s10 = inlined_call_operand.hbm [shape: f32[2,1,32], index: 10, kind: input, shape index: {}]
  %s11 = inlined_call_operand.vmem [shape: bf16[2,32,64], index: 11, kind: input, shape index: {}]
  %s12 = inlined_call_operand.hbm [shape: f32[2,1,64], index: 12, kind: input, shape index: {}]
  %s13 = inlined_call_operand.vmem [shape: bf16[2,64,32], index: 13, kind: input, shape index: {}]
  %s14 = inlined_call_operand.hbm [shape: f32[2,1,32], index: 14, kind: input, shape index: {}]
  %s15 = inlined_call_operand.vmem [shape: f32[2,1,32], index: 15, kind: input, shape index: {}]
  %s16 = inlined_call_operand.vmem [shape: f32[2,1,32], index: 16, kind: input, shape index: {}]
  %s17 = inlined_call_operand.vmem [shape: bf16[32,3], index: 17, kind: input, shape index: {}]
  %s18 = inlined_call_operand.vmem [shape: f32[1,3], index: 18, kind: input, shape index: {}]
  %s19 = inlined_call_operand.hbm [shape: f32[2,3], index: 19, kind: output, shape index: {0}]
  %s20 = inlined_call_operand.hbm [shape: f32[1,1], index: 20, kind: output, shape index: {1}]
  %21 = xla_tuple %s19, %s20
  %s22 = sld [smem:[#allocation0]]
  $region118: #{tpu_custom_call.1} parent=0
    _
  %s24 = ssub.s32 1, %s22
  %s25 = scalar_select 0, %s24, %s22
  $region1: #{tpu_custom_call.1} parent=0
    #allocation2 [shape = 'u8[8192]{0}', space=vmem, size = 0x2000, scoped, tag = 'input window, operand 0, single buffered']
    #allocation3 [shape = 's32[1]{0}', space=sflag, size = 0x4, scoped, tag = 'scoped memory for tpu_custom_call.1']
    #allocation4 [shape = 's32[1]{0}', space=sflag, size = 0x4, scoped, tag = 'scoped memory for tpu_custom_call.1']
    #allocation5 [shape = 'u8[512]{0}', space=vmem, size = 0x400, scoped, tag = 'input window, operand 4, single buffered']
    #allocation6 [shape = 's32[1]{0}', space=sflag, size = 0x4, scoped, tag = 'scoped memory for tpu_custom_call.1']
    #allocation7 [shape = 'u8[1024]{0}', space=vmem, size = 0x400, scoped, tag = 'input window, operand 9, single buffered']
    #allocation8 [shape = 'u8[1024]{0}', space=vmem, size = 0x400, scoped, tag = 'input window, operand 10, single buffered']
    #allocation9 [shape = 's32[1]{0}', space=sflag, size = 0x4, scoped, tag = 'scoped memory for tpu_custom_call.1']
    #allocation10 [shape = 'u8[1024]{0}', space=vmem, size = 0x400, scoped, tag = 'input window, operand 12, single buffered']
    #allocation11 [shape = 'u8[1024]{0}', space=vmem, size = 0x400, scoped, tag = 'input window, operand 14, single buffered']
    #allocation12 [shape = 's32[1]{0}', space=sflag, size = 0x4, scoped, tag = 'scoped memory for tpu_custom_call.1']
    #allocation13 [shape = 'u8[1024]{0}', space=vmem, size = 0x400, scoped, tag = 'output window, operand 0, single buffered']
    #allocation14 [shape = 'u8[512]{0}', space=vmem, size = 0x400, scoped, tag = 'output window, operand 1, single buffered']
    #allocation15 [shape = 's32[1]{0}', space=sflag, size = 0x4, scoped, tag = 'scoped memory for tpu_custom_call.1']
    %26 = vsyncpa [#allocation3], 0
    %27 = vsyncpa [#allocation6], 0
    %28 = vsyncpa [#allocation9], 0
    %29 = vsyncpa [#allocation12], 0
    %30 = vsyncpa [#allocation4], 0
    %31 = vsyncpa [#allocation15], 0
    // Predicated region
    $region2: #{tpu_custom_call.1} parent=1 // pred_check
      _
    $region3: #{tpu_custom_call.1} parent=1 // pred_check_branch
      %33 = sbr.rel (0) target = $region5
    $region4: #{tpu_custom_call.1} parent=1 // pred_region
      %s35 = ssub.s32 256, 256
      %36 = vsyncadd [#allocation3], %s35
      %s37 = sshll.u32 [#allocation2], 4
      %s38 = int_to_ptr.vmem [resolvable:$true] %s37
      %43 = dma.hbm_to_vmem [thread:$0]  %s0, 256, %s38, [#allocation3], 128, 128, 8
    $region5: #{tpu_custom_call.1} parent=1 // pred_fallthru
      _
    // Predicated region
    $region6: #{tpu_custom_call.1} parent=1 // pred_check
      _
    $region7: #{tpu_custom_call.1} parent=1 // pred_check_branch
      %45 = sbr.rel (0) target = $region9
    $region8: #{tpu_custom_call.1} parent=1 // pred_region
      _
    $region9: #{tpu_custom_call.1} parent=1 // pred_fallthru
      _
    // Predicated region
    $region10: #{tpu_custom_call.1} parent=1 // pred_check
      _
    $region11: #{tpu_custom_call.1} parent=1 // pred_check_branch
      %47 = sbr.rel (0) target = $region13
    $region12: #{tpu_custom_call.1} parent=1 // pred_region
      _
    $region13: #{tpu_custom_call.1} parent=1 // pred_fallthru
      _
    // Predicated region
    $region14: #{tpu_custom_call.1} parent=1 // pred_check
      _
    $region15: #{tpu_custom_call.1} parent=1 // pred_check_branch
      %49 = sbr.rel (0) target = $region17
    $region16: #{tpu_custom_call.1} parent=1 // pred_region
      _
    $region17: #{tpu_custom_call.1} parent=1 // pred_fallthru
      _
    // Predicated region
    $region18: #{tpu_custom_call.1} parent=1 // pred_check
      _
    $region19: #{tpu_custom_call.1} parent=1 // pred_check_branch
      %51 = sbr.rel (0) target = $region21
    $region20: #{tpu_custom_call.1} parent=1 // pred_region
      %s53 = ssub.s32 16, 16
      %54 = vsyncadd [#allocation6], %s53
      %s56 = sshll.u32 [#allocation5], 4
      %s57 = int_to_ptr.vmem [resolvable:$true] %s56
      %59 = dma.hbm_to_vmem [thread:$0]  %s4, 16, %s57, [#allocation6]
    $region21: #{tpu_custom_call.1} parent=1 // pred_fallthru
      _
    // Predicated region
    $region22: #{tpu_custom_call.1} parent=1 // pred_check
      _
    $region23: #{tpu_custom_call.1} parent=1 // pred_check_branch
      %61 = sbr.rel (0) target = $region25
    $region24: #{tpu_custom_call.1} parent=1 // pred_region
      _
    $region25: #{tpu_custom_call.1} parent=1 // pred_fallthru
      _
    // Predicated region
    $region26: #{tpu_custom_call.1} parent=1 // pred_check
      _
    $region27: #{tpu_custom_call.1} parent=1 // pred_check_branch
      %63 = sbr.rel (0) target = $region29
    $region28: #{tpu_custom_call.1} parent=1 // pred_region
      _
    $region29: #{tpu_custom_call.1} parent=1 // pred_fallthru
      _
    // Predicated region
    $region30: #{tpu_custom_call.1} parent=1 // pred_check
      _
    $region31: #{tpu_custom_call.1} parent=1 // pred_check_branch
      %65 = sbr.rel (0) target = $region33
    $region32: #{tpu_custom_call.1} parent=1 // pred_region
      _
    $region33: #{tpu_custom_call.1} parent=1 // pred_fallthru
      _
    // Predicated region
    $region34: #{tpu_custom_call.1} parent=1 // pred_check
      _
    $region35: #{tpu_custom_call.1} parent=1 // pred_check_branch
      %67 = sbr.rel (0) target = $region37
    $region36: #{tpu_custom_call.1} parent=1 // pred_region
      _
    $region37: #{tpu_custom_call.1} parent=1 // pred_fallthru
      _
    // Predicated region
    $region38: #{tpu_custom_call.1} parent=1 // pred_check
      _
    $region39: #{tpu_custom_call.1} parent=1 // pred_check_branch
      %69 = sbr.rel (0) target = $region41
    $region40: #{tpu_custom_call.1} parent=1 // pred_region
      %s71 = ssub.s32 32, 32
      %72 = vsyncadd [#allocation6], %s71
      %s73 = sshll.u32 [#allocation7], 4
      %s74 = int_to_ptr.vmem [resolvable:$true] %s73
      %79 = dma.hbm_to_vmem [thread:$0]  %s9, 32, %s74, [#allocation6], 16, 16, 1
    $region41: #{tpu_custom_call.1} parent=1 // pred_fallthru
      _
    // Predicated region
    $region42: #{tpu_custom_call.1} parent=1 // pred_check
      _
    $region43: #{tpu_custom_call.1} parent=1 // pred_check_branch
      %81 = sbr.rel (0) target = $region45
    $region44: #{tpu_custom_call.1} parent=1 // pred_region
      %s83 = ssub.s32 32, 32
      %84 = vsyncadd [#allocation9], %s83
      %s85 = sshll.u32 [#allocation8], 4
      %s86 = int_to_ptr.vmem [resolvable:$true] %s85
      %91 = dma.hbm_to_vmem [thread:$0]  %s10, 32, %s86, [#allocation9], 16, 16, 1
    $region45: #{tpu_custom_call.1} parent=1 // pred_fallthru
      _
    // Predicated region
    $region46: #{tpu_custom_call.1} parent=1 // pred_check
      _
    $region47: #{tpu_custom_call.1} parent=1 // pred_check_branch
      %93 = sbr.rel (0) target = $region49
    $region48: #{tpu_custom_call.1} parent=1 // pred_region
      _
    $region49: #{tpu_custom_call.1} parent=1 // pred_fallthru
      _
    // Predicated region
    $region50: #{tpu_custom_call.1} parent=1 // pred_check
      _
    $region51: #{tpu_custom_call.1} parent=1 // pred_check_branch
      %95 = sbr.rel (0) target = $region53
    $region52: #{tpu_custom_call.1} parent=1 // pred_region
      %s97 = ssub.s32 32, 32
      %98 = vsyncadd [#allocation9], %s97
      %s99 = sshll.u32 [#allocation10], 4
      %s100 = int_to_ptr.vmem [resolvable:$true] %s99
      %105 = dma.hbm_to_vmem [thread:$0]  %s12, 32, %s100, [#allocation9], 16, 16, 1
    $region53: #{tpu_custom_call.1} parent=1 // pred_fallthru
      _
    // Predicated region
    $region54: #{tpu_custom_call.1} parent=1 // pred_check
      _
    $region55: #{tpu_custom_call.1} parent=1 // pred_check_branch
      %107 = sbr.rel (0) target = $region57
    $region56: #{tpu_custom_call.1} parent=1 // pred_region
      _
    $region57: #{tpu_custom_call.1} parent=1 // pred_fallthru
      _
    // Predicated region
    $region58: #{tpu_custom_call.1} parent=1 // pred_check
      _
    $region59: #{tpu_custom_call.1} parent=1 // pred_check_branch
      %109 = sbr.rel (0) target = $region61
    $region60: #{tpu_custom_call.1} parent=1 // pred_region
      %s111 = ssub.s32 32, 32
      %112 = vsyncadd [#allocation12], %s111
      %s113 = sshll.u32 [#allocation11], 4
      %s114 = int_to_ptr.vmem [resolvable:$true] %s113
      %119 = dma.hbm_to_vmem [thread:$0]  %s14, 32, %s114, [#allocation12], 16, 16, 1
    $region61: #{tpu_custom_call.1} parent=1 // pred_fallthru
      _
    // Predicated region
    $region62: #{tpu_custom_call.1} parent=1 // pred_check
      _
    $region63: #{tpu_custom_call.1} parent=1 // pred_check_branch
      %121 = sbr.rel (0) target = $region65
    $region64: #{tpu_custom_call.1} parent=1 // pred_region
      _
    $region65: #{tpu_custom_call.1} parent=1 // pred_fallthru
      _
    // Predicated region
    $region66: #{tpu_custom_call.1} parent=1 // pred_check
      _
    $region67: #{tpu_custom_call.1} parent=1 // pred_check_branch
      %123 = sbr.rel (0) target = $region69
    $region68: #{tpu_custom_call.1} parent=1 // pred_region
      _
    $region69: #{tpu_custom_call.1} parent=1 // pred_fallthru
      _
    // Predicated region
    $region70: #{tpu_custom_call.1} parent=1 // pred_check
      _
    $region71: #{tpu_custom_call.1} parent=1 // pred_check_branch
      %125 = sbr.rel (0) target = $region73
    $region72: #{tpu_custom_call.1} parent=1 // pred_region
      _
    $region73: #{tpu_custom_call.1} parent=1 // pred_fallthru
      _
    // Predicated region
    $region74: #{tpu_custom_call.1} parent=1 // pred_check
      _
    $region75: #{tpu_custom_call.1} parent=1 // pred_check_branch
      %127 = sbr.rel (0) target = $region77
    $region76: #{tpu_custom_call.1} parent=1 // pred_region
      _
    $region77: #{tpu_custom_call.1} parent=1 // pred_fallthru
      _
    // Predicated region
    $region78: #{tpu_custom_call.1} parent=1 // pred_check
      _
    $region79: #{tpu_custom_call.1} parent=1 // pred_check_branch
      %129 = sbr.rel (0) target = $region81
    $region80: #{tpu_custom_call.1} parent=1 // pred_region
      %130 = dma.done [#allocation3], 256
    $region81: #{tpu_custom_call.1} parent=1 // pred_fallthru
      _
    // Predicated region
    $region82: #{tpu_custom_call.1} parent=1 // pred_check
      _
    $region83: #{tpu_custom_call.1} parent=1 // pred_check_branch
      %132 = sbr.rel (0) target = $region85
    $region84: #{tpu_custom_call.1} parent=1 // pred_region
      %133 = dma.done [#allocation6], 16
    $region85: #{tpu_custom_call.1} parent=1 // pred_fallthru
      _
    // Predicated region
    $region86: #{tpu_custom_call.1} parent=1 // pred_check
      _
    $region87: #{tpu_custom_call.1} parent=1 // pred_check_branch
      %135 = sbr.rel (0) target = $region89
    $region88: #{tpu_custom_call.1} parent=1 // pred_region
      %136 = dma.done [#allocation6], 32
    $region89: #{tpu_custom_call.1} parent=1 // pred_fallthru
      _
    // Predicated region
    $region90: #{tpu_custom_call.1} parent=1 // pred_check
      _
    $region91: #{tpu_custom_call.1} parent=1 // pred_check_branch
      %138 = sbr.rel (0) target = $region93
    $region92: #{tpu_custom_call.1} parent=1 // pred_region
      %139 = dma.done [#allocation9], 32
    $region93: #{tpu_custom_call.1} parent=1 // pred_fallthru
      _
    // Predicated region
    $region94: #{tpu_custom_call.1} parent=1 // pred_check
      _
    $region95: #{tpu_custom_call.1} parent=1 // pred_check_branch
      %141 = sbr.rel (0) target = $region97
    $region96: #{tpu_custom_call.1} parent=1 // pred_region
      %142 = dma.done [#allocation9], 32
    $region97: #{tpu_custom_call.1} parent=1 // pred_fallthru
      _
    // Predicated region
    $region98: #{tpu_custom_call.1} parent=1 // pred_check
      _
    $region99: #{tpu_custom_call.1} parent=1 // pred_check_branch
      %144 = sbr.rel (0) target = $region101
    $region100: #{tpu_custom_call.1} parent=1 // pred_region
      %145 = dma.done [#allocation12], 32
    $region101: #{tpu_custom_call.1} parent=1 // pred_fallthru
      _
    %v147 = vld [vmem:[#allocation2] sm:$0xff]
    %v148 = vld [vmem:[#allocation2 + $0x8] sm:$0xff]
    %v149 = vld [vmem:[%s3] sm:$0x1]
    %v150 = vld [vmem:[#allocation5] sm:$0x1]
    %vm151 = vcmask 261120
    %v152 = vsel %vm151, %v147, 0.0
    %153 = vadd.xlane.f32.xlu0 %v152
    %v154 = vpop.xlane.xlu0 %153
    %v155 = vsel %vm151, %v148, 0.0
    %156 = vadd.xlane.f32.xlu0 %v155
    %v157 = vpop.xlane.xlu0 %156
    %v158 = vrcp.pop 32.0
    %v159 = vmul.f32 %v154, %v158
    %v160 = vmul.f32 %v157, %v158
    %v161 = vsub.f32 %v147, %v159
    %v162 = vsub.f32 %v148, %v160
    %v163 = vmul.f32 %v161, %v161
    %v164 = vmul.f32 %v162, %v162
    %v165 = vsel %vm151, %v163, 0.0
    %166 = vadd.xlane.f32.xlu0 %v165
    %v167 = vpop.xlane.xlu0 %166
    %v168 = vsel %vm151, %v164, 0.0
    %169 = vadd.xlane.f32.xlu0 %v168
    %v170 = vpop.xlane.xlu0 %169
    %v171 = vmul.f32 %v167, %v158
    %v172 = vmul.f32 %v170, %v158
    %v173 = vadd.f32 %v171, 1e-05
    %v174 = vadd.f32 %v172, 1e-05
    %v175 = vrsqrt.pop %v173
    %v176 = vrsqrt.pop %v174
    %v177 = vmul.f32 %v161, %v175
    %v178 = vmul.f32 %v162, %v176
    %v180 = vlaneseq
    %v181 = vshrl.u32 %v180, 7
    %v182 = vsub.s32 0, %v181
    %v183 = vrot.slane %v149, %v182
    %v185 = vmul.f32 %v177, %v183
    %v186 = vmul.f32 %v178, %v183
    %v188 = vlaneseq
    %v189 = vshrl.u32 %v188, 7
    %v190 = vsub.s32 0, %v189
    %v191 = vrot.slane %v150, %v190
    %v193 = vadd.f32 %v185, %v191
    %v194 = vadd.f32 %v186, %v191
    %v195 = vld [vmem:[%s1] sm:$0x1]
    %v196 = vld [vmem:[%s1 + $0x1] sm:$0x1]
    %v197 = vsub.f32 1.0, %v195
    %v198 = vsub.f32 1.0, %v196
    %v199 = vmul.f32 %v197, -1e+09
    %v200 = vmul.f32 %v198, -1e+09
    %v203 = vlaneseq
    %v204 = vshrl.u32 %v203, 7
    %v205 = vsub.s32 0, %v204
    %v206 = vrot.slane %v199, %v205
    %v207 = vlaneseq
    %v208 = vshrl.u32 %v207, 7
    %v209 = vsub.s32 0, %v208
    %v210 = vrot.slane %v200, %v209
    %v213 = vpack.c.bf16 %v194, %v193
    %v214 = vld [vmem:[%s5] sm:$0xf]
    %v215 = vld [vmem:[%s5 + $0x4] sm:$0xf]
    %v216 = vld [vmem:[%s5 + $0x8] sm:$0xf]
    %v217 = vld [vmem:[%s5 + $0xc] sm:$0xf]
    %v218 = vld [vmem:[%s6] sm:$0x1]
    %v220 = vlaneseq
    %v221 = vshrl.u32 %v220, 7
    %v222 = vsub.s32 0, %v221
    %v223 = vrot.slane %v218, %v222
    %v229 = vunpack.c.l.b16 %v214
    %v230 = vunpack.c.l.b16 %v215
    %v231 = vunpack.c.l.b16 %v216
    %v232 = vunpack.c.l.b16 %v217
    %v233 = vpack.c.b16 %v230, %v229
    %v234 = vpack.c.b16 %v232, %v231
    %v238 = vsel %vm151, %v213, 0
    %240 = vmatprep.subr.bf16.mxu0 0
    %241 = vmatpush1.bf16.msra.mxu0 0
    %242 = vmatprep.subr.bf16.mxu0 0
    %243 = vmatpush1.bf16.msra.mxu0 0
    %244 = vmatprep.subr.bf16.mxu0 0
    %245 = vmatpush1.bf16.msra.mxu0 0
    %246 = vmatprep.subr.bf16.mxu0 0
    %247 = vmatpush1.bf16.msra.mxu0 0
    %248 = vmatprep.subr.bf16.mxu0 0
    %249 = vmatpush1.bf16.msra.mxu0 0
    %250 = vmatprep.subr.bf16.mxu0 0
    %251 = vmatpush1.bf16.msra.mxu0 0
    %252 = vmatprep.subr.bf16.mxu0 0
    %253 = vmatpush1.bf16.msra.mxu0 %v234
    %254 = vmatprep.subr.bf16.mxu0 0
    %255 = vmatpush1.bf16.msra.mxu0 %v233
    %256 = vmatprep.subr.bf16.mxu0 0
    %257 = vmatpush2.bf16.msra.mxu0 0
    %258 = vmatprep.subr.bf16.mxu0 0
    %259 = vmatpush2.bf16.msra.mxu0 0
    %260 = vmatprep.subr.bf16.mxu0 0
    %261 = vmatpush2.bf16.msra.mxu0 0
    %262 = vmatprep.subr.bf16.mxu0 0
    %263 = vmatpush2.bf16.msra.mxu0 0
    %264 = vmatprep.subr.bf16.mxu0 0
    %265 = vmatpush2.bf16.msra.mxu0 0
    %266 = vmatprep.subr.bf16.mxu0 0
    %267 = vmatpush2.bf16.msra.mxu0 0
    %268 = vmatprep.subr.bf16.mxu0 0
    %269 = vmatpush2.bf16.msra.mxu0 0
    %270 = vmatprep.subr.bf16.mxu0 0
    %271 = vmatpush2.bf16.msra.mxu0 0
    %272 = vmatprep.mubr.bf16.mxu0 0
    %273 = vmatmul.mubr.bf16.gmra.mxu0 %v238
    %v274 = vpop.f32.mrf.mxu0
    %v275 = vadd.f32 %v223, %v274
    %v276 = vpop.f32.mrf.mxu0
    %v277 = vpop.f32.mrf.mxu0
    %v278 = vadd.f32 %v223, %v277
    %v279 = vpop.f32.mrf.mxu0
    %280 = vdwg.mxu0
    %v281 = vpack.c.bf16 %v278, %v275
    %v283 = vunpack.c.l.b16 %v281
    %v284 = vunpack.c.h.b16 %v281
    %v285 = vpack.c.b16 %v283, %v283
    %v286 = vpack.c.b16 %v284, %v284
    %287 = vrot.lane.b32.xlu0 %v285, 96
    %v288 = vpop.permute.xlu0 %287
    %vm289 = vcmask 64512
    %v291 = vsel %vm289, %v285, 0
    %v294 = vsel %vm289, %v288, 0
    %296 = vmatprep.subr.bf16.mxu0 0
    %297 = vmatpush1.bf16.xpose.msra.mxu0 0
    %298 = vmatprep.subr.bf16.mxu0 0
    %299 = vmatpush1.bf16.xpose.msra.mxu0 0
    %300 = vmatprep.subr.bf16.mxu0 0
    %301 = vmatpush1.bf16.xpose.msra.mxu0 0
    %302 = vmatprep.subr.bf16.mxu0 0
    %303 = vmatpush1.bf16.xpose.msra.mxu0 0
    %304 = vmatprep.subr.bf16.mxu0 0
    %305 = vmatpush1.bf16.xpose.msra.mxu0 0
    %306 = vmatprep.subr.bf16.mxu0 0
    %307 = vmatpush1.bf16.xpose.msra.mxu0 0
    %308 = vmatprep.subr.bf16.mxu0 0
    %309 = vmatpush1.bf16.xpose.msra.mxu0 0
    %310 = vmatprep.subr.bf16.mxu0 0
    %311 = vmatpush1.bf16.xpose.msra.mxu0 %v294
    %312 = vmatprep.subr.bf16.mxu0 0
    %313 = vmatpush2.bf16.xpose.msra.mxu0 0
    %314 = vmatprep.subr.bf16.mxu0 0
    %315 = vmatpush2.bf16.xpose.msra.mxu0 0
    %316 = vmatprep.subr.bf16.mxu0 0
    %317 = vmatpush2.bf16.xpose.msra.mxu0 0
    %318 = vmatprep.subr.bf16.mxu0 0
    %319 = vmatpush2.bf16.xpose.msra.mxu0 0
    %320 = vmatprep.subr.bf16.mxu0 0
    %321 = vmatpush2.bf16.xpose.msra.mxu0 0
    %322 = vmatprep.subr.bf16.mxu0 0
    %323 = vmatpush2.bf16.xpose.msra.mxu0 0
    %324 = vmatprep.subr.bf16.mxu0 0
    %325 = vmatpush2.bf16.xpose.msra.mxu0 0
    %326 = vmatprep.subr.bf16.mxu0 0
    %327 = vmatpush2.bf16.xpose.msra.mxu0 0
    %328 = vmatprep.mubr.bf16.mxu0 0
    %329 = vmatmul.mubr.bf16.gmra.mxu0 %v291
    %v330 = vpop.f32.mrf.mxu0
    %v331 = vadd.f32 0.0, %v330
    %v332 = vpop.f32.mrf.mxu0
    %v333 = vpop.f32.mrf.mxu0
    %v334 = vpop.f32.mrf.mxu0
    %335 = vdwg.mxu0
    %336 = vrot.lane.b32.xlu0 %v286, 96
    %v337 = vpop.permute.xlu0 %336
    %v339 = vsel %vm289, %v286, 0
    %v342 = vsel %vm289, %v337, 0
    %344 = vmatprep.subr.bf16.mxu0 0
    %345 = vmatpush1.bf16.xpose.msra.mxu0 0
    %346 = vmatprep.subr.bf16.mxu0 0
    %347 = vmatpush1.bf16.xpose.msra.mxu0 0
    %348 = vmatprep.subr.bf16.mxu0 0
    %349 = vmatpush1.bf16.xpose.msra.mxu0 0
    %350 = vmatprep.subr.bf16.mxu0 0
    %351 = vmatpush1.bf16.xpose.msra.mxu0 0
    %352 = vmatprep.subr.bf16.mxu0 0
    %353 = vmatpush1.bf16.xpose.msra.mxu0 0
    %354 = vmatprep.subr.bf16.mxu0 0
    %355 = vmatpush1.bf16.xpose.msra.mxu0 0
    %356 = vmatprep.subr.bf16.mxu0 0
    %357 = vmatpush1.bf16.xpose.msra.mxu0 0
    %358 = vmatprep.subr.bf16.mxu0 0
    %359 = vmatpush1.bf16.xpose.msra.mxu0 %v342
    %360 = vmatprep.subr.bf16.mxu0 0
    %361 = vmatpush2.bf16.xpose.msra.mxu0 0
    %362 = vmatprep.subr.bf16.mxu0 0
    %363 = vmatpush2.bf16.xpose.msra.mxu0 0
    %364 = vmatprep.subr.bf16.mxu0 0
    %365 = vmatpush2.bf16.xpose.msra.mxu0 0
    %366 = vmatprep.subr.bf16.mxu0 0
    %367 = vmatpush2.bf16.xpose.msra.mxu0 0
    %368 = vmatprep.subr.bf16.mxu0 0
    %369 = vmatpush2.bf16.xpose.msra.mxu0 0
    %370 = vmatprep.subr.bf16.mxu0 0
    %371 = vmatpush2.bf16.xpose.msra.mxu0 0
    %372 = vmatprep.subr.bf16.mxu0 0
    %373 = vmatpush2.bf16.xpose.msra.mxu0 0
    %374 = vmatprep.subr.bf16.mxu0 0
    %375 = vmatpush2.bf16.xpose.msra.mxu0 0
    %376 = vmatprep.mubr.bf16.mxu0 0
    %377 = vmatmul.mubr.bf16.gmra.mxu0 %v339
    %v378 = vpop.f32.mrf.mxu0
    %v379 = vadd.f32 0.0, %v378
    %v380 = vpop.f32.mrf.mxu0
    %v381 = vpop.f32.mrf.mxu0
    %v382 = vpop.f32.mrf.mxu0
    %383 = vdwg.mxu0
    %v384 = vmul.f32 %v331, 0.35355338
    %v385 = vmul.f32 %v379, 0.35355338
    %v386 = vadd.f32 %v384, %v206
    %v387 = vadd.f32 %v385, %v210
    %v388 = vsel %vm289, %v386, -inf
    %389 = vmax.xlane.f32.xlu0 %v388
    %v390 = vpop.xlane.xlu0 %389
    %v391 = vsel %vm289, %v387, -inf
    %392 = vmax.xlane.f32.xlu0 %v391
    %v393 = vpop.xlane.xlu0 %392
    %v394 = vsub.f32 %v386, %v390
    %v395 = vsub.f32 %v387, %v393
    %v396 = vmul.f32 %v394, 1.442695
    %v397 = vpow.pop %v396
    %v398 = vmul.f32 %v395, 1.442695
    %v399 = vpow.pop %v398
    %v400 = vsel %vm289, %v397, 0.0
    %401 = vadd.xlane.f32.xlu0 %v400
    %v402 = vpop.xlane.xlu0 %401
    %v403 = vsel %vm289, %v399, 0.0
    %404 = vadd.xlane.f32.xlu0 %v403
    %v405 = vpop.xlane.xlu0 %404
    %v406 = vrcp.pop %v402
    %v407 = vrcp.pop %v405
    %v408 = vmul.f32 %v397, %v406
    %v409 = vmul.f32 %v399, %v407
    %v410 = vpack.c.bf16 %v408, %v408
    %v411 = vpack.c.bf16 %v409, %v409
    %412 = vrot.lane.b32.xlu0 %v285, 64
    %v413 = vpop.permute.xlu0 %412
    %v415 = vsel %vm289, %v410, 0
    %vm417 = vcmask 1043456
    %v419 = vsel %vm417, %v413, 0
    %421 = vmatprep.subr.bf16.mxu0 0
    %422 = vmatpush1.bf16.msra.mxu0 0
    %423 = vmatprep.subr.bf16.mxu0 0
    %424 = vmatpush1.bf16.msra.mxu0 0
    %425 = vmatprep.subr.bf16.mxu0 0
    %426 = vmatpush1.bf16.msra.mxu0 0
    %427 = vmatprep.subr.bf16.mxu0 0
    %428 = vmatpush1.bf16.msra.mxu0 0
    %429 = vmatprep.subr.bf16.mxu0 0
    %430 = vmatpush1.bf16.msra.mxu0 0
    %431 = vmatprep.subr.bf16.mxu0 0
    %432 = vmatpush1.bf16.msra.mxu0 0
    %433 = vmatprep.subr.bf16.mxu0 0
    %434 = vmatpush1.bf16.msra.mxu0 0
    %435 = vmatprep.subr.bf16.mxu0 0
    %436 = vmatpush1.bf16.msra.mxu0 %v419
    %437 = vmatprep.subr.bf16.mxu0 0
    %438 = vmatpush2.bf16.msra.mxu0 0
    %439 = vmatprep.subr.bf16.mxu0 0
    %440 = vmatpush2.bf16.msra.mxu0 0
    %441 = vmatprep.subr.bf16.mxu0 0
    %442 = vmatpush2.bf16.msra.mxu0 0
    %443 = vmatprep.subr.bf16.mxu0 0
    %444 = vmatpush2.bf16.msra.mxu0 0
    %445 = vmatprep.subr.bf16.mxu0 0
    %446 = vmatpush2.bf16.msra.mxu0 0
    %447 = vmatprep.subr.bf16.mxu0 0
    %448 = vmatpush2.bf16.msra.mxu0 0
    %449 = vmatprep.subr.bf16.mxu0 0
    %450 = vmatpush2.bf16.msra.mxu0 0
    %451 = vmatprep.subr.bf16.mxu0 0
    %452 = vmatpush2.bf16.msra.mxu0 0
    %453 = vmatprep.mubr.bf16.mxu0 0
    %454 = vmatmul.mubr.bf16.gmra.mxu0 %v415
    %v455 = vpop.f32.mrf.mxu0
    %v456 = vadd.f32 0.0, %v455
    %v457 = vpop.f32.mrf.mxu0
    %v458 = vpop.f32.mrf.mxu0
    %v459 = vpop.f32.mrf.mxu0
    %460 = vdwg.mxu0
    %461 = vrot.lane.b32.xlu0 %v286, 64
    %v462 = vpop.permute.xlu0 %461
    %v464 = vsel %vm289, %v411, 0
    %v467 = vsel %vm417, %v462, 0
    %469 = vmatprep.subr.bf16.mxu0 0
    %470 = vmatpush1.bf16.msra.mxu0 0
    %471 = vmatprep.subr.bf16.mxu0 0
    %472 = vmatpush1.bf16.msra.mxu0 0
    %473 = vmatprep.subr.bf16.mxu0 0
    %474 = vmatpush1.bf16.msra.mxu0 0
    %475 = vmatprep.subr.bf16.mxu0 0
    %476 = vmatpush1.bf16.msra.mxu0 0
    %477 = vmatprep.subr.bf16.mxu0 0
    %478 = vmatpush1.bf16.msra.mxu0 0
    %479 = vmatprep.subr.bf16.mxu0 0
    %480 = vmatpush1.bf16.msra.mxu0 0
    %481 = vmatprep.subr.bf16.mxu0 0
    %482 = vmatpush1.bf16.msra.mxu0 0
    %483 = vmatprep.subr.bf16.mxu0 0
    %484 = vmatpush1.bf16.msra.mxu0 %v467
    %485 = vmatprep.subr.bf16.mxu0 0
    %486 = vmatpush2.bf16.msra.mxu0 0
    %487 = vmatprep.subr.bf16.mxu0 0
    %488 = vmatpush2.bf16.msra.mxu0 0
    %489 = vmatprep.subr.bf16.mxu0 0
    %490 = vmatpush2.bf16.msra.mxu0 0
    %491 = vmatprep.subr.bf16.mxu0 0
    %492 = vmatpush2.bf16.msra.mxu0 0
    %493 = vmatprep.subr.bf16.mxu0 0
    %494 = vmatpush2.bf16.msra.mxu0 0
    %495 = vmatprep.subr.bf16.mxu0 0
    %496 = vmatpush2.bf16.msra.mxu0 0
    %497 = vmatprep.subr.bf16.mxu0 0
    %498 = vmatpush2.bf16.msra.mxu0 0
    %499 = vmatprep.subr.bf16.mxu0 0
    %500 = vmatpush2.bf16.msra.mxu0 0
    %501 = vmatprep.mubr.bf16.mxu0 0
    %502 = vmatmul.mubr.bf16.gmra.mxu0 %v464
    %v503 = vpop.f32.mrf.mxu0
    %v504 = vadd.f32 0.0, %v503
    %v505 = vpop.f32.mrf.mxu0
    %v506 = vpop.f32.mrf.mxu0
    %v507 = vpop.f32.mrf.mxu0
    %508 = vdwg.mxu0
    %509 = vrot.lane.b32.xlu0 %v285, 120
    %v510 = vpop.permute.xlu0 %509
    %511 = vrot.lane.b32.xlu0 %v285, 88
    %v512 = vpop.permute.xlu0 %511
    %v514 = vsel %vm289, %v510, 0
    %v517 = vsel %vm289, %v512, 0
    %519 = vmatprep.subr.bf16.mxu0 0
    %520 = vmatpush1.bf16.xpose.msra.mxu0 0
    %521 = vmatprep.subr.bf16.mxu0 0
    %522 = vmatpush1.bf16.xpose.msra.mxu0 0
    %523 = vmatprep.subr.bf16.mxu0 0
    %524 = vmatpush1.bf16.xpose.msra.mxu0 0
    %525 = vmatprep.subr.bf16.mxu0 0
    %526 = vmatpush1.bf16.xpose.msra.mxu0 0
    %527 = vmatprep.subr.bf16.mxu0 0
    %528 = vmatpush1.bf16.xpose.msra.mxu0 0
    %529 = vmatprep.subr.bf16.mxu0 0
    %530 = vmatpush1.bf16.xpose.msra.mxu0 0
    %531 = vmatprep.subr.bf16.mxu0 0
    %532 = vmatpush1.bf16.xpose.msra.mxu0 0
    %533 = vmatprep.subr.bf16.mxu0 0
    %534 = vmatpush1.bf16.xpose.msra.mxu0 %v517
    %535 = vmatprep.subr.bf16.mxu0 0
    %536 = vmatpush2.bf16.xpose.msra.mxu0 0
    %537 = vmatprep.subr.bf16.mxu0 0
    %538 = vmatpush2.bf16.xpose.msra.mxu0 0
    %539 = vmatprep.subr.bf16.mxu0 0
    %540 = vmatpush2.bf16.xpose.msra.mxu0 0
    %541 = vmatprep.subr.bf16.mxu0 0
    %542 = vmatpush2.bf16.xpose.msra.mxu0 0
    %543 = vmatprep.subr.bf16.mxu0 0
    %544 = vmatpush2.bf16.xpose.msra.mxu0 0
    %545 = vmatprep.subr.bf16.mxu0 0
    %546 = vmatpush2.bf16.xpose.msra.mxu0 0
    %547 = vmatprep.subr.bf16.mxu0 0
    %548 = vmatpush2.bf16.xpose.msra.mxu0 0
    %549 = vmatprep.subr.bf16.mxu0 0
    %550 = vmatpush2.bf16.xpose.msra.mxu0 0
    %551 = vmatprep.mubr.bf16.mxu0 0
    %552 = vmatmul.mubr.bf16.gmra.mxu0 %v514
    %v553 = vpop.f32.mrf.mxu0
    %v554 = vadd.f32 0.0, %v553
    %v555 = vpop.f32.mrf.mxu0
    %v556 = vpop.f32.mrf.mxu0
    %v557 = vpop.f32.mrf.mxu0
    %558 = vdwg.mxu0
    %559 = vrot.lane.b32.xlu0 %v286, 120
    %v560 = vpop.permute.xlu0 %559
    %561 = vrot.lane.b32.xlu0 %v286, 88
    %v562 = vpop.permute.xlu0 %561
    %v564 = vsel %vm289, %v560, 0
    %v567 = vsel %vm289, %v562, 0
    %569 = vmatprep.subr.bf16.mxu0 0
    %570 = vmatpush1.bf16.xpose.msra.mxu0 0
    %571 = vmatprep.subr.bf16.mxu0 0
    %572 = vmatpush1.bf16.xpose.msra.mxu0 0
    %573 = vmatprep.subr.bf16.mxu0 0
    %574 = vmatpush1.bf16.xpose.msra.mxu0 0
    %575 = vmatprep.subr.bf16.mxu0 0
    %576 = vmatpush1.bf16.xpose.msra.mxu0 0
    %577 = vmatprep.subr.bf16.mxu0 0
    %578 = vmatpush1.bf16.xpose.msra.mxu0 0
    %579 = vmatprep.subr.bf16.mxu0 0
    %580 = vmatpush1.bf16.xpose.msra.mxu0 0
    %581 = vmatprep.subr.bf16.mxu0 0
    %582 = vmatpush1.bf16.xpose.msra.mxu0 0
    %583 = vmatprep.subr.bf16.mxu0 0
    %584 = vmatpush1.bf16.xpose.msra.mxu0 %v567
    %585 = vmatprep.subr.bf16.mxu0 0
    %586 = vmatpush2.bf16.xpose.msra.mxu0 0
    %587 = vmatprep.subr.bf16.mxu0 0
    %588 = vmatpush2.bf16.xpose.msra.mxu0 0
    %589 = vmatprep.subr.bf16.mxu0 0
    %590 = vmatpush2.bf16.xpose.msra.mxu0 0
    %591 = vmatprep.subr.bf16.mxu0 0
    %592 = vmatpush2.bf16.xpose.msra.mxu0 0
    %593 = vmatprep.subr.bf16.mxu0 0
    %594 = vmatpush2.bf16.xpose.msra.mxu0 0
    %595 = vmatprep.subr.bf16.mxu0 0
    %596 = vmatpush2.bf16.xpose.msra.mxu0 0
    %597 = vmatprep.subr.bf16.mxu0 0
    %598 = vmatpush2.bf16.xpose.msra.mxu0 0
    %599 = vmatprep.subr.bf16.mxu0 0
    %600 = vmatpush2.bf16.xpose.msra.mxu0 0
    %601 = vmatprep.mubr.bf16.mxu0 0
    %602 = vmatmul.mubr.bf16.gmra.mxu0 %v564
    %v603 = vpop.f32.mrf.mxu0
    %v604 = vadd.f32 0.0, %v603
    %v605 = vpop.f32.mrf.mxu0
    %v606 = vpop.f32.mrf.mxu0
    %v607 = vpop.f32.mrf.mxu0
    %608 = vdwg.mxu0
    %v609 = vmul.f32 %v554, 0.35355338
    %v610 = vmul.f32 %v604, 0.35355338
    %v611 = vadd.f32 %v609, %v206
    %v612 = vadd.f32 %v610, %v210
    %v613 = vsel %vm289, %v611, -inf
    %614 = vmax.xlane.f32.xlu0 %v613
    %v615 = vpop.xlane.xlu0 %614
    %v616 = vsel %vm289, %v612, -inf
    %617 = vmax.xlane.f32.xlu0 %v616
    %v618 = vpop.xlane.xlu0 %617
    %v619 = vsub.f32 %v611, %v615
    %v620 = vsub.f32 %v612, %v618
    %v621 = vmul.f32 %v619, 1.442695
    %v622 = vpow.pop %v621
    %v623 = vmul.f32 %v620, 1.442695
    %v624 = vpow.pop %v623
    %v625 = vsel %vm289, %v622, 0.0
    %626 = vadd.xlane.f32.xlu0 %v625
    %v627 = vpop.xlane.xlu0 %626
    %v628 = vsel %vm289, %v624, 0.0
    %629 = vadd.xlane.f32.xlu0 %v628
    %v630 = vpop.xlane.xlu0 %629
    %v631 = vrcp.pop %v627
    %v632 = vrcp.pop %v630
    %v633 = vmul.f32 %v622, %v631
    %v634 = vmul.f32 %v624, %v632
    %v635 = vpack.c.bf16 %v633, %v633
    %v636 = vpack.c.bf16 %v634, %v634
    %637 = vrot.lane.b32.xlu0 %v285, 56
    %v638 = vpop.permute.xlu0 %637
    %v640 = vsel %vm289, %v635, 0
    %v643 = vsel %vm417, %v638, 0
    %645 = vmatprep.subr.bf16.mxu0 0
    %646 = vmatpush1.bf16.msra.mxu0 0
    %647 = vmatprep.subr.bf16.mxu0 0
    %648 = vmatpush1.bf16.msra.mxu0 0
    %649 = vmatprep.subr.bf16.mxu0 0
    %650 = vmatpush1.bf16.msra.mxu0 0
    %651 = vmatprep.subr.bf16.mxu0 0
    %652 = vmatpush1.bf16.msra.mxu0 0
    %653 = vmatprep.subr.bf16.mxu0 0
    %654 = vmatpush1.bf16.msra.mxu0 0
    %655 = vmatprep.subr.bf16.mxu0 0
    %656 = vmatpush1.bf16.msra.mxu0 0
    %657 = vmatprep.subr.bf16.mxu0 0
    %658 = vmatpush1.bf16.msra.mxu0 0
    %659 = vmatprep.subr.bf16.mxu0 0
    %660 = vmatpush1.bf16.msra.mxu0 %v643
    %661 = vmatprep.subr.bf16.mxu0 0
    %662 = vmatpush2.bf16.msra.mxu0 0
    %663 = vmatprep.subr.bf16.mxu0 0
    %664 = vmatpush2.bf16.msra.mxu0 0
    %665 = vmatprep.subr.bf16.mxu0 0
    %666 = vmatpush2.bf16.msra.mxu0 0
    %667 = vmatprep.subr.bf16.mxu0 0
    %668 = vmatpush2.bf16.msra.mxu0 0
    %669 = vmatprep.subr.bf16.mxu0 0
    %670 = vmatpush2.bf16.msra.mxu0 0
    %671 = vmatprep.subr.bf16.mxu0 0
    %672 = vmatpush2.bf16.msra.mxu0 0
    %673 = vmatprep.subr.bf16.mxu0 0
    %674 = vmatpush2.bf16.msra.mxu0 0
    %675 = vmatprep.subr.bf16.mxu0 0
    %676 = vmatpush2.bf16.msra.mxu0 0
    %677 = vmatprep.mubr.bf16.mxu0 0
    %678 = vmatmul.mubr.bf16.gmra.mxu0 %v640
    %v679 = vpop.f32.mrf.mxu0
    %v680 = vadd.f32 0.0, %v679
    %v681 = vpop.f32.mrf.mxu0
    %v682 = vpop.f32.mrf.mxu0
    %v683 = vpop.f32.mrf.mxu0
    %684 = vdwg.mxu0
    %685 = vrot.lane.b32.xlu0 %v286, 56
    %v686 = vpop.permute.xlu0 %685
    %v688 = vsel %vm289, %v636, 0
    %v691 = vsel %vm417, %v686, 0
    %693 = vmatprep.subr.bf16.mxu0 0
    %694 = vmatpush1.bf16.msra.mxu0 0
    %695 = vmatprep.subr.bf16.mxu0 0
    %696 = vmatpush1.bf16.msra.mxu0 0
    %697 = vmatprep.subr.bf16.mxu0 0
    %698 = vmatpush1.bf16.msra.mxu0 0
    %699 = vmatprep.subr.bf16.mxu0 0
    %700 = vmatpush1.bf16.msra.mxu0 0
    %701 = vmatprep.subr.bf16.mxu0 0
    %702 = vmatpush1.bf16.msra.mxu0 0
    %703 = vmatprep.subr.bf16.mxu0 0
    %704 = vmatpush1.bf16.msra.mxu0 0
    %705 = vmatprep.subr.bf16.mxu0 0
    %706 = vmatpush1.bf16.msra.mxu0 0
    %707 = vmatprep.subr.bf16.mxu0 0
    %708 = vmatpush1.bf16.msra.mxu0 %v691
    %709 = vmatprep.subr.bf16.mxu0 0
    %710 = vmatpush2.bf16.msra.mxu0 0
    %711 = vmatprep.subr.bf16.mxu0 0
    %712 = vmatpush2.bf16.msra.mxu0 0
    %713 = vmatprep.subr.bf16.mxu0 0
    %714 = vmatpush2.bf16.msra.mxu0 0
    %715 = vmatprep.subr.bf16.mxu0 0
    %716 = vmatpush2.bf16.msra.mxu0 0
    %717 = vmatprep.subr.bf16.mxu0 0
    %718 = vmatpush2.bf16.msra.mxu0 0
    %719 = vmatprep.subr.bf16.mxu0 0
    %720 = vmatpush2.bf16.msra.mxu0 0
    %721 = vmatprep.subr.bf16.mxu0 0
    %722 = vmatpush2.bf16.msra.mxu0 0
    %723 = vmatprep.subr.bf16.mxu0 0
    %724 = vmatpush2.bf16.msra.mxu0 0
    %725 = vmatprep.mubr.bf16.mxu0 0
    %726 = vmatmul.mubr.bf16.gmra.mxu0 %v688
    %v727 = vpop.f32.mrf.mxu0
    %v728 = vadd.f32 0.0, %v727
    %v729 = vpop.f32.mrf.mxu0
    %v730 = vpop.f32.mrf.mxu0
    %v731 = vpop.f32.mrf.mxu0
    %732 = vdwg.mxu0
    %733 = vrot.lane.b32.xlu0 %v285, 112
    %v734 = vpop.permute.xlu0 %733
    %735 = vrot.lane.b32.xlu0 %v285, 80
    %v736 = vpop.permute.xlu0 %735
    %v738 = vsel %vm289, %v734, 0
    %v741 = vsel %vm289, %v736, 0
    %743 = vmatprep.subr.bf16.mxu0 0
    %744 = vmatpush1.bf16.xpose.msra.mxu0 0
    %745 = vmatprep.subr.bf16.mxu0 0
    %746 = vmatpush1.bf16.xpose.msra.mxu0 0
    %747 = vmatprep.subr.bf16.mxu0 0
    %748 = vmatpush1.bf16.xpose.msra.mxu0 0
    %749 = vmatprep.subr.bf16.mxu0 0
    %750 = vmatpush1.bf16.xpose.msra.mxu0 0
    %751 = vmatprep.subr.bf16.mxu0 0
    %752 = vmatpush1.bf16.xpose.msra.mxu0 0
    %753 = vmatprep.subr.bf16.mxu0 0
    %754 = vmatpush1.bf16.xpose.msra.mxu0 0
    %755 = vmatprep.subr.bf16.mxu0 0
    %756 = vmatpush1.bf16.xpose.msra.mxu0 0
    %757 = vmatprep.subr.bf16.mxu0 0
    %758 = vmatpush1.bf16.xpose.msra.mxu0 %v741
    %759 = vmatprep.subr.bf16.mxu0 0
    %760 = vmatpush2.bf16.xpose.msra.mxu0 0
    %761 = vmatprep.subr.bf16.mxu0 0
    %762 = vmatpush2.bf16.xpose.msra.mxu0 0
    %763 = vmatprep.subr.bf16.mxu0 0
    %764 = vmatpush2.bf16.xpose.msra.mxu0 0
    %765 = vmatprep.subr.bf16.mxu0 0
    %766 = vmatpush2.bf16.xpose.msra.mxu0 0
    %767 = vmatprep.subr.bf16.mxu0 0
    %768 = vmatpush2.bf16.xpose.msra.mxu0 0
    %769 = vmatprep.subr.bf16.mxu0 0
    %770 = vmatpush2.bf16.xpose.msra.mxu0 0
    %771 = vmatprep.subr.bf16.mxu0 0
    %772 = vmatpush2.bf16.xpose.msra.mxu0 0
    %773 = vmatprep.subr.bf16.mxu0 0
    %774 = vmatpush2.bf16.xpose.msra.mxu0 0
    %775 = vmatprep.mubr.bf16.mxu0 0
    %776 = vmatmul.mubr.bf16.gmra.mxu0 %v738
    %v777 = vpop.f32.mrf.mxu0
    %v778 = vadd.f32 0.0, %v777
    %v779 = vpop.f32.mrf.mxu0
    %v780 = vpop.f32.mrf.mxu0
    %v781 = vpop.f32.mrf.mxu0
    %782 = vdwg.mxu0
    %783 = vrot.lane.b32.xlu0 %v286, 112
    %v784 = vpop.permute.xlu0 %783
    %785 = vrot.lane.b32.xlu0 %v286, 80
    %v786 = vpop.permute.xlu0 %785
    %v788 = vsel %vm289, %v784, 0
    %v791 = vsel %vm289, %v786, 0
    %793 = vmatprep.subr.bf16.mxu0 0
    %794 = vmatpush1.bf16.xpose.msra.mxu0 0
    %795 = vmatprep.subr.bf16.mxu0 0
    %796 = vmatpush1.bf16.xpose.msra.mxu0 0
    %797 = vmatprep.subr.bf16.mxu0 0
    %798 = vmatpush1.bf16.xpose.msra.mxu0 0
    %799 = vmatprep.subr.bf16.mxu0 0
    %800 = vmatpush1.bf16.xpose.msra.mxu0 0
    %801 = vmatprep.subr.bf16.mxu0 0
    %802 = vmatpush1.bf16.xpose.msra.mxu0 0
    %803 = vmatprep.subr.bf16.mxu0 0
    %804 = vmatpush1.bf16.xpose.msra.mxu0 0
    %805 = vmatprep.subr.bf16.mxu0 0
    %806 = vmatpush1.bf16.xpose.msra.mxu0 0
    %807 = vmatprep.subr.bf16.mxu0 0
    %808 = vmatpush1.bf16.xpose.msra.mxu0 %v791
    %809 = vmatprep.subr.bf16.mxu0 0
    %810 = vmatpush2.bf16.xpose.msra.mxu0 0
    %811 = vmatprep.subr.bf16.mxu0 0
    %812 = vmatpush2.bf16.xpose.msra.mxu0 0
    %813 = vmatprep.subr.bf16.mxu0 0
    %814 = vmatpush2.bf16.xpose.msra.mxu0 0
    %815 = vmatprep.subr.bf16.mxu0 0
    %816 = vmatpush2.bf16.xpose.msra.mxu0 0
    %817 = vmatprep.subr.bf16.mxu0 0
    %818 = vmatpush2.bf16.xpose.msra.mxu0 0
    %819 = vmatprep.subr.bf16.mxu0 0
    %820 = vmatpush2.bf16.xpose.msra.mxu0 0
    %821 = vmatprep.subr.bf16.mxu0 0
    %822 = vmatpush2.bf16.xpose.msra.mxu0 0
    %823 = vmatprep.subr.bf16.mxu0 0
    %824 = vmatpush2.bf16.xpose.msra.mxu0 0
    %825 = vmatprep.mubr.bf16.mxu0 0
    %826 = vmatmul.mubr.bf16.gmra.mxu0 %v788
    %v827 = vpop.f32.mrf.mxu0
    %v828 = vadd.f32 0.0, %v827
    %v829 = vpop.f32.mrf.mxu0
    %v830 = vpop.f32.mrf.mxu0
    %v831 = vpop.f32.mrf.mxu0
    %832 = vdwg.mxu0
    %v833 = vmul.f32 %v778, 0.35355338
    %v834 = vmul.f32 %v828, 0.35355338
    %v835 = vadd.f32 %v833, %v206
    %v836 = vadd.f32 %v834, %v210
    %v837 = vsel %vm289, %v835, -inf
    %838 = vmax.xlane.f32.xlu0 %v837
    %v839 = vpop.xlane.xlu0 %838
    %v840 = vsel %vm289, %v836, -inf
    %841 = vmax.xlane.f32.xlu0 %v840
    %v842 = vpop.xlane.xlu0 %841
    %v843 = vsub.f32 %v835, %v839
    %v844 = vsub.f32 %v836, %v842
    %v845 = vmul.f32 %v843, 1.442695
    %v846 = vpow.pop %v845
    %v847 = vmul.f32 %v844, 1.442695
    %v848 = vpow.pop %v847
    %v849 = vsel %vm289, %v846, 0.0
    %850 = vadd.xlane.f32.xlu0 %v849
    %v851 = vpop.xlane.xlu0 %850
    %v852 = vsel %vm289, %v848, 0.0
    %853 = vadd.xlane.f32.xlu0 %v852
    %v854 = vpop.xlane.xlu0 %853
    %v855 = vrcp.pop %v851
    %v856 = vrcp.pop %v854
    %v857 = vmul.f32 %v846, %v855
    %v858 = vmul.f32 %v848, %v856
    %v859 = vpack.c.bf16 %v857, %v857
    %v860 = vpack.c.bf16 %v858, %v858
    %861 = vrot.lane.b32.xlu0 %v285, 48
    %v862 = vpop.permute.xlu0 %861
    %v864 = vsel %vm289, %v859, 0
    %v867 = vsel %vm417, %v862, 0
    %869 = vmatprep.subr.bf16.mxu0 0
    %870 = vmatpush1.bf16.msra.mxu0 0
    %871 = vmatprep.subr.bf16.mxu0 0
    %872 = vmatpush1.bf16.msra.mxu0 0
    %873 = vmatprep.subr.bf16.mxu0 0
    %874 = vmatpush1.bf16.msra.mxu0 0
    %875 = vmatprep.subr.bf16.mxu0 0
    %876 = vmatpush1.bf16.msra.mxu0 0
    %877 = vmatprep.subr.bf16.mxu0 0
    %878 = vmatpush1.bf16.msra.mxu0 0
    %879 = vmatprep.subr.bf16.mxu0 0
    %880 = vmatpush1.bf16.msra.mxu0 0
    %881 = vmatprep.subr.bf16.mxu0 0
    %882 = vmatpush1.bf16.msra.mxu0 0
    %883 = vmatprep.subr.bf16.mxu0 0
    %884 = vmatpush1.bf16.msra.mxu0 %v867
    %885 = vmatprep.subr.bf16.mxu0 0
    %886 = vmatpush2.bf16.msra.mxu0 0
    %887 = vmatprep.subr.bf16.mxu0 0
    %888 = vmatpush2.bf16.msra.mxu0 0
    %889 = vmatprep.subr.bf16.mxu0 0
    %890 = vmatpush2.bf16.msra.mxu0 0
    %891 = vmatprep.subr.bf16.mxu0 0
    %892 = vmatpush2.bf16.msra.mxu0 0
    %893 = vmatprep.subr.bf16.mxu0 0
    %894 = vmatpush2.bf16.msra.mxu0 0
    %895 = vmatprep.subr.bf16.mxu0 0
    %896 = vmatpush2.bf16.msra.mxu0 0
    %897 = vmatprep.subr.bf16.mxu0 0
    %898 = vmatpush2.bf16.msra.mxu0 0
    %899 = vmatprep.subr.bf16.mxu0 0
    %900 = vmatpush2.bf16.msra.mxu0 0
    %901 = vmatprep.mubr.bf16.mxu0 0
    %902 = vmatmul.mubr.bf16.gmra.mxu0 %v864
    %v903 = vpop.f32.mrf.mxu0
    %v904 = vadd.f32 0.0, %v903
    %v905 = vpop.f32.mrf.mxu0
    %v906 = vpop.f32.mrf.mxu0
    %v907 = vpop.f32.mrf.mxu0
    %908 = vdwg.mxu0
    %909 = vrot.lane.b32.xlu0 %v286, 48
    %v910 = vpop.permute.xlu0 %909
    %v912 = vsel %vm289, %v860, 0
    %v915 = vsel %vm417, %v910, 0
    %917 = vmatprep.subr.bf16.mxu0 0
    %918 = vmatpush1.bf16.msra.mxu0 0
    %919 = vmatprep.subr.bf16.mxu0 0
    %920 = vmatpush1.bf16.msra.mxu0 0
    %921 = vmatprep.subr.bf16.mxu0 0
    %922 = vmatpush1.bf16.msra.mxu0 0
    %923 = vmatprep.subr.bf16.mxu0 0
    %924 = vmatpush1.bf16.msra.mxu0 0
    %925 = vmatprep.subr.bf16.mxu0 0
    %926 = vmatpush1.bf16.msra.mxu0 0
    %927 = vmatprep.subr.bf16.mxu0 0
    %928 = vmatpush1.bf16.msra.mxu0 0
    %929 = vmatprep.subr.bf16.mxu0 0
    %930 = vmatpush1.bf16.msra.mxu0 0
    %931 = vmatprep.subr.bf16.mxu0 0
    %932 = vmatpush1.bf16.msra.mxu0 %v915
    %933 = vmatprep.subr.bf16.mxu0 0
    %934 = vmatpush2.bf16.msra.mxu0 0
    %935 = vmatprep.subr.bf16.mxu0 0
    %936 = vmatpush2.bf16.msra.mxu0 0
    %937 = vmatprep.subr.bf16.mxu0 0
    %938 = vmatpush2.bf16.msra.mxu0 0
    %939 = vmatprep.subr.bf16.mxu0 0
    %940 = vmatpush2.bf16.msra.mxu0 0
    %941 = vmatprep.subr.bf16.mxu0 0
    %942 = vmatpush2.bf16.msra.mxu0 0
    %943 = vmatprep.subr.bf16.mxu0 0
    %944 = vmatpush2.bf16.msra.mxu0 0
    %945 = vmatprep.subr.bf16.mxu0 0
    %946 = vmatpush2.bf16.msra.mxu0 0
    %947 = vmatprep.subr.bf16.mxu0 0
    %948 = vmatpush2.bf16.msra.mxu0 0
    %949 = vmatprep.mubr.bf16.mxu0 0
    %950 = vmatmul.mubr.bf16.gmra.mxu0 %v912
    %v951 = vpop.f32.mrf.mxu0
    %v952 = vadd.f32 0.0, %v951
    %v953 = vpop.f32.mrf.mxu0
    %v954 = vpop.f32.mrf.mxu0
    %v955 = vpop.f32.mrf.mxu0
    %956 = vdwg.mxu0
    %957 = vrot.lane.b32.xlu0 %v285, 104
    %v958 = vpop.permute.xlu0 %957
    %959 = vrot.lane.b32.xlu0 %v285, 72
    %v960 = vpop.permute.xlu0 %959
    %v962 = vsel %vm289, %v958, 0
    %v965 = vsel %vm289, %v960, 0
    %967 = vmatprep.subr.bf16.mxu0 0
    %968 = vmatpush1.bf16.xpose.msra.mxu0 0
    %969 = vmatprep.subr.bf16.mxu0 0
    %970 = vmatpush1.bf16.xpose.msra.mxu0 0
    %971 = vmatprep.subr.bf16.mxu0 0
    %972 = vmatpush1.bf16.xpose.msra.mxu0 0
    %973 = vmatprep.subr.bf16.mxu0 0
    %974 = vmatpush1.bf16.xpose.msra.mxu0 0
    %975 = vmatprep.subr.bf16.mxu0 0
    %976 = vmatpush1.bf16.xpose.msra.mxu0 0
    %977 = vmatprep.subr.bf16.mxu0 0
    %978 = vmatpush1.bf16.xpose.msra.mxu0 0
    %979 = vmatprep.subr.bf16.mxu0 0
    %980 = vmatpush1.bf16.xpose.msra.mxu0 0
    %981 = vmatprep.subr.bf16.mxu0 0
    %982 = vmatpush1.bf16.xpose.msra.mxu0 %v965
    %983 = vmatprep.subr.bf16.mxu0 0
    %984 = vmatpush2.bf16.xpose.msra.mxu0 0
    %985 = vmatprep.subr.bf16.mxu0 0
    %986 = vmatpush2.bf16.xpose.msra.mxu0 0
    %987 = vmatprep.subr.bf16.mxu0 0
    %988 = vmatpush2.bf16.xpose.msra.mxu0 0
    %989 = vmatprep.subr.bf16.mxu0 0
    %990 = vmatpush2.bf16.xpose.msra.mxu0 0
    %991 = vmatprep.subr.bf16.mxu0 0
    %992 = vmatpush2.bf16.xpose.msra.mxu0 0
    %993 = vmatprep.subr.bf16.mxu0 0
    %994 = vmatpush2.bf16.xpose.msra.mxu0 0
    %995 = vmatprep.subr.bf16.mxu0 0
    %996 = vmatpush2.bf16.xpose.msra.mxu0 0
    %997 = vmatprep.subr.bf16.mxu0 0
    %998 = vmatpush2.bf16.xpose.msra.mxu0 0
    %999 = vmatprep.mubr.bf16.mxu0 0
    %1000 = vmatmul.mubr.bf16.gmra.mxu0 %v962
    %v1001 = vpop.f32.mrf.mxu0
    %v1002 = vadd.f32 0.0, %v1001
    %v1003 = vpop.f32.mrf.mxu0
    %v1004 = vpop.f32.mrf.mxu0
    %v1005 = vpop.f32.mrf.mxu0
    %1006 = vdwg.mxu0
    %1007 = vrot.lane.b32.xlu0 %v286, 104
    %v1008 = vpop.permute.xlu0 %1007
    %1009 = vrot.lane.b32.xlu0 %v286, 72
    %v1010 = vpop.permute.xlu0 %1009
    %v1012 = vsel %vm289, %v1008, 0
    %v1015 = vsel %vm289, %v1010, 0
    %1017 = vmatprep.subr.bf16.mxu0 0
    %1018 = vmatpush1.bf16.xpose.msra.mxu0 0
    %1019 = vmatprep.subr.bf16.mxu0 0
    %1020 = vmatpush1.bf16.xpose.msra.mxu0 0
    %1021 = vmatprep.subr.bf16.mxu0 0
    %1022 = vmatpush1.bf16.xpose.msra.mxu0 0
    %1023 = vmatprep.subr.bf16.mxu0 0
    %1024 = vmatpush1.bf16.xpose.msra.mxu0 0
    %1025 = vmatprep.subr.bf16.mxu0 0
    %1026 = vmatpush1.bf16.xpose.msra.mxu0 0
    %1027 = vmatprep.subr.bf16.mxu0 0
    %1028 = vmatpush1.bf16.xpose.msra.mxu0 0
    %1029 = vmatprep.subr.bf16.mxu0 0
    %1030 = vmatpush1.bf16.xpose.msra.mxu0 0
    %1031 = vmatprep.subr.bf16.mxu0 0
    %1032 = vmatpush1.bf16.xpose.msra.mxu0 %v1015
    %1033 = vmatprep.subr.bf16.mxu0 0
    %1034 = vmatpush2.bf16.xpose.msra.mxu0 0
    %1035 = vmatprep.subr.bf16.mxu0 0
    %1036 = vmatpush2.bf16.xpose.msra.mxu0 0
    %1037 = vmatprep.subr.bf16.mxu0 0
    %1038 = vmatpush2.bf16.xpose.msra.mxu0 0
    %1039 = vmatprep.subr.bf16.mxu0 0
    %1040 = vmatpush2.bf16.xpose.msra.mxu0 0
    %1041 = vmatprep.subr.bf16.mxu0 0
    %1042 = vmatpush2.bf16.xpose.msra.mxu0 0
    %1043 = vmatprep.subr.bf16.mxu0 0
    %1044 = vmatpush2.bf16.xpose.msra.mxu0 0
    %1045 = vmatprep.subr.bf16.mxu0 0
    %1046 = vmatpush2.bf16.xpose.msra.mxu0 0
    %1047 = vmatprep.subr.bf16.mxu0 0
    %1048 = vmatpush2.bf16.xpose.msra.mxu0 0
    %1049 = vmatprep.mubr.bf16.mxu0 0
    %1050 = vmatmul.mubr.bf16.gmra.mxu0 %v1012
    %v1051 = vpop.f32.mrf.mxu0
    %v1052 = vadd.f32 0.0, %v1051
    %v1053 = vpop.f32.mrf.mxu0
    %v1054 = vpop.f32.mrf.mxu0
    %v1055 = vpop.f32.mrf.mxu0
    %1056 = vdwg.mxu0
    %v1057 = vmul.f32 %v1002, 0.35355338
    %v1058 = vmul.f32 %v1052, 0.35355338
    %v1059 = vadd.f32 %v1057, %v206
    %v1060 = vadd.f32 %v1058, %v210
    %v1061 = vsel %vm289, %v1059, -inf
    %1062 = vmax.xlane.f32.xlu0 %v1061
    %v1063 = vpop.xlane.xlu0 %1062
    %v1064 = vsel %vm289, %v1060, -inf
    %1065 = vmax.xlane.f32.xlu0 %v1064
    %v1066 = vpop.xlane.xlu0 %1065
    %v1067 = vsub.f32 %v1059, %v1063
    %v1068 = vsub.f32 %v1060, %v1066
    %v1069 = vmul.f32 %v1067, 1.442695
    %v1070 = vpow.pop %v1069
    %v1071 = vmul.f32 %v1068, 1.442695
    %v1072 = vpow.pop %v1071
    %v1073 = vsel %vm289, %v1070, 0.0
    %1074 = vadd.xlane.f32.xlu0 %v1073
    %v1075 = vpop.xlane.xlu0 %1074
    %v1076 = vsel %vm289, %v1072, 0.0
    %1077 = vadd.xlane.f32.xlu0 %v1076
    %v1078 = vpop.xlane.xlu0 %1077
    %v1079 = vrcp.pop %v1075
    %v1080 = vrcp.pop %v1078
    %v1081 = vmul.f32 %v1070, %v1079
    %v1082 = vmul.f32 %v1072, %v1080
    %v1083 = vpack.c.bf16 %v1081, %v1081
    %v1084 = vpack.c.bf16 %v1082, %v1082
    %1085 = vrot.lane.b32.xlu0 %v285, 40
    %v1086 = vpop.permute.xlu0 %1085
    %v1088 = vsel %vm289, %v1083, 0
    %v1091 = vsel %vm417, %v1086, 0
    %1093 = vmatprep.subr.bf16.mxu0 0
    %1094 = vmatpush1.bf16.msra.mxu0 0
    %1095 = vmatprep.subr.bf16.mxu0 0
    %1096 = vmatpush1.bf16.msra.mxu0 0
    %1097 = vmatprep.subr.bf16.mxu0 0
    %1098 = vmatpush1.bf16.msra.mxu0 0
    %1099 = vmatprep.subr.bf16.mxu0 0
    %1100 = vmatpush1.bf16.msra.mxu0 0
    %1101 = vmatprep.subr.bf16.mxu0 0
    %1102 = vmatpush1.bf16.msra.mxu0 0
    %1103 = vmatprep.subr.bf16.mxu0 0
    %1104 = vmatpush1.bf16.msra.mxu0 0
    %1105 = vmatprep.subr.bf16.mxu0 0
    %1106 = vmatpush1.bf16.msra.mxu0 0
    %1107 = vmatprep.subr.bf16.mxu0 0
    %1108 = vmatpush1.bf16.msra.mxu0 %v1091
    %1109 = vmatprep.subr.bf16.mxu0 0
    %1110 = vmatpush2.bf16.msra.mxu0 0
    %1111 = vmatprep.subr.bf16.mxu0 0
    %1112 = vmatpush2.bf16.msra.mxu0 0
    %1113 = vmatprep.subr.bf16.mxu0 0
    %1114 = vmatpush2.bf16.msra.mxu0 0
    %1115 = vmatprep.subr.bf16.mxu0 0
    %1116 = vmatpush2.bf16.msra.mxu0 0
    %1117 = vmatprep.subr.bf16.mxu0 0
    %1118 = vmatpush2.bf16.msra.mxu0 0
    %1119 = vmatprep.subr.bf16.mxu0 0
    %1120 = vmatpush2.bf16.msra.mxu0 0
    %1121 = vmatprep.subr.bf16.mxu0 0
    %1122 = vmatpush2.bf16.msra.mxu0 0
    %1123 = vmatprep.subr.bf16.mxu0 0
    %1124 = vmatpush2.bf16.msra.mxu0 0
    %1125 = vmatprep.mubr.bf16.mxu0 0
    %1126 = vmatmul.mubr.bf16.gmra.mxu0 %v1088
    %v1127 = vpop.f32.mrf.mxu0
    %v1128 = vadd.f32 0.0, %v1127
    %v1129 = vpop.f32.mrf.mxu0
    %v1130 = vpop.f32.mrf.mxu0
    %v1131 = vpop.f32.mrf.mxu0
    %1132 = vdwg.mxu0
    %1133 = vrot.lane.b32.xlu0 %v286, 40
    %v1134 = vpop.permute.xlu0 %1133
    %v1136 = vsel %vm289, %v1084, 0
    %v1139 = vsel %vm417, %v1134, 0
    %1141 = vmatprep.subr.bf16.mxu0 0
    %1142 = vmatpush1.bf16.msra.mxu0 0
    %1143 = vmatprep.subr.bf16.mxu0 0
    %1144 = vmatpush1.bf16.msra.mxu0 0
    %1145 = vmatprep.subr.bf16.mxu0 0
    %1146 = vmatpush1.bf16.msra.mxu0 0
    %1147 = vmatprep.subr.bf16.mxu0 0
    %1148 = vmatpush1.bf16.msra.mxu0 0
    %1149 = vmatprep.subr.bf16.mxu0 0
    %1150 = vmatpush1.bf16.msra.mxu0 0
    %1151 = vmatprep.subr.bf16.mxu0 0
    %1152 = vmatpush1.bf16.msra.mxu0 0
    %1153 = vmatprep.subr.bf16.mxu0 0
    %1154 = vmatpush1.bf16.msra.mxu0 0
    %1155 = vmatprep.subr.bf16.mxu0 0
    %1156 = vmatpush1.bf16.msra.mxu0 %v1139
    %1157 = vmatprep.subr.bf16.mxu0 0
    %1158 = vmatpush2.bf16.msra.mxu0 0
    %1159 = vmatprep.subr.bf16.mxu0 0
    %1160 = vmatpush2.bf16.msra.mxu0 0
    %1161 = vmatprep.subr.bf16.mxu0 0
    %1162 = vmatpush2.bf16.msra.mxu0 0
    %1163 = vmatprep.subr.bf16.mxu0 0
    %1164 = vmatpush2.bf16.msra.mxu0 0
    %1165 = vmatprep.subr.bf16.mxu0 0
    %1166 = vmatpush2.bf16.msra.mxu0 0
    %1167 = vmatprep.subr.bf16.mxu0 0
    %1168 = vmatpush2.bf16.msra.mxu0 0
    %1169 = vmatprep.subr.bf16.mxu0 0
    %1170 = vmatpush2.bf16.msra.mxu0 0
    %1171 = vmatprep.subr.bf16.mxu0 0
    %1172 = vmatpush2.bf16.msra.mxu0 0
    %1173 = vmatprep.mubr.bf16.mxu0 0
    %1174 = vmatmul.mubr.bf16.gmra.mxu0 %v1136
    %v1175 = vpop.f32.mrf.mxu0
    %v1176 = vadd.f32 0.0, %v1175
    %v1177 = vpop.f32.mrf.mxu0
    %v1178 = vpop.f32.mrf.mxu0
    %v1179 = vpop.f32.mrf.mxu0
    %1180 = vdwg.mxu0
    %1183 = vrot.lane.b32.xlu0 %v680, 8
    %v1184 = vpop.permute.xlu0 %1183
    %1185 = vrot.lane.b32.xlu0 %v728, 8
    %v1186 = vpop.permute.xlu0 %1185
    %1191 = vrot.lane.b32.xlu0 %v904, 16
    %v1192 = vpop.permute.xlu0 %1191
    %1193 = vrot.lane.b32.xlu0 %v952, 16
    %v1194 = vpop.permute.xlu0 %1193
    %1199 = vrot.lane.b32.xlu0 %v1128, 24
    %v1200 = vpop.permute.xlu0 %1199
    %1201 = vrot.lane.b32.xlu0 %v1176, 24
    %v1202 = vpop.permute.xlu0 %1201
    %v1205 = vsel %vm289, %v456, %v1184
    %v1206 = vsel %vm289, %v504, %v1186
    %vm1207 = vcmask 130048
    %v1208 = vsel %vm1207, %v1205, %v1192
    %v1209 = vsel %vm1207, %v1206, %v1194
    %vm1210 = vcmask 195584
    %v1211 = vsel %vm1210, %v1208, %v1200
    %v1212 = vsel %vm1210, %v1209, %v1202
    %v1213 = vpack.c.bf16 %v1212, %v1211
    %v1214 = vld [vmem:[%s7] sm:$0xf]
    %v1215 = vld [vmem:[%s7 + $0x4] sm:$0xf]
    %v1216 = vld [vmem:[%s7 + $0x8] sm:$0xf]
    %v1217 = vld [vmem:[%s7 + $0xc] sm:$0xf]
    %v1218 = vld [vmem:[%s8] sm:$0x1]
    %v1220 = vlaneseq
    %v1221 = vshrl.u32 %v1220, 7
    %v1222 = vsub.s32 0, %v1221
    %v1223 = vrot.slane %v1218, %v1222
    %v1229 = vunpack.c.l.b16 %v1214
    %v1230 = vunpack.c.l.b16 %v1215
    %v1231 = vunpack.c.l.b16 %v1216
    %v1232 = vunpack.c.l.b16 %v1217
    %v1233 = vpack.c.b16 %v1230, %v1229
    %v1234 = vpack.c.b16 %v1232, %v1231
    %v1238 = vsel %vm151, %v1213, 0
    %1240 = vmatprep.subr.bf16.mxu0 0
    %1241 = vmatpush1.bf16.msra.mxu0 0
    %1242 = vmatprep.subr.bf16.mxu0 0
    %1243 = vmatpush1.bf16.msra.mxu0 0
    %1244 = vmatprep.subr.bf16.mxu0 0
    %1245 = vmatpush1.bf16.msra.mxu0 0
    %1246 = vmatprep.subr.bf16.mxu0 0
    %1247 = vmatpush1.bf16.msra.mxu0 0
    %1248 = vmatprep.subr.bf16.mxu0 0
    %1249 = vmatpush1.bf16.msra.mxu0 0
    %1250 = vmatprep.subr.bf16.mxu0 0
    %1251 = vmatpush1.bf16.msra.mxu0 0
    %1252 = vmatprep.subr.bf16.mxu0 0
    %1253 = vmatpush1.bf16.msra.mxu0 %v1234
    %1254 = vmatprep.subr.bf16.mxu0 0
    %1255 = vmatpush1.bf16.msra.mxu0 %v1233
    %1256 = vmatprep.subr.bf16.mxu0 0
    %1257 = vmatpush2.bf16.msra.mxu0 0
    %1258 = vmatprep.subr.bf16.mxu0 0
    %1259 = vmatpush2.bf16.msra.mxu0 0
    %1260 = vmatprep.subr.bf16.mxu0 0
    %1261 = vmatpush2.bf16.msra.mxu0 0
    %1262 = vmatprep.subr.bf16.mxu0 0
    %1263 = vmatpush2.bf16.msra.mxu0 0
    %1264 = vmatprep.subr.bf16.mxu0 0
    %1265 = vmatpush2.bf16.msra.mxu0 0
    %1266 = vmatprep.subr.bf16.mxu0 0
    %1267 = vmatpush2.bf16.msra.mxu0 0
    %1268 = vmatprep.subr.bf16.mxu0 0
    %1269 = vmatpush2.bf16.msra.mxu0 0
    %1270 = vmatprep.subr.bf16.mxu0 0
    %1271 = vmatpush2.bf16.msra.mxu0 0
    %1272 = vmatprep.mubr.bf16.mxu0 0
    %1273 = vmatmul.mubr.bf16.gmra.mxu0 %v1238
    %v1274 = vpop.f32.mrf.mxu0
    %v1275 = vadd.f32 %v1223, %v1274
    %v1276 = vpop.f32.mrf.mxu0
    %v1277 = vpop.f32.mrf.mxu0
    %v1278 = vadd.f32 %v1223, %v1277
    %v1279 = vpop.f32.mrf.mxu0
    %1280 = vdwg.mxu0
    %v1281 = vadd.f32 %v1275, %v193
    %v1282 = vadd.f32 %v1278, %v194
    %v1283 = vld [vmem:[#allocation7] sm:$0x1]
    %v1284 = vld [vmem:[#allocation8] sm:$0x1]
    %v1285 = vsel %vm151, %v1281, 0.0
    %1286 = vadd.xlane.f32.xlu0 %v1285
    %v1287 = vpop.xlane.xlu0 %1286
    %v1288 = vsel %vm151, %v1282, 0.0
    %1289 = vadd.xlane.f32.xlu0 %v1288
    %v1290 = vpop.xlane.xlu0 %1289
    %v1291 = vmul.f32 %v1287, %v158
    %v1292 = vmul.f32 %v1290, %v158
    %v1293 = vsub.f32 %v1281, %v1291
    %v1294 = vsub.f32 %v1282, %v1292
    %v1295 = vmul.f32 %v1293, %v1293
    %v1296 = vmul.f32 %v1294, %v1294
    %v1297 = vsel %vm151, %v1295, 0.0
    %1298 = vadd.xlane.f32.xlu0 %v1297
    %v1299 = vpop.xlane.xlu0 %1298
    %v1300 = vsel %vm151, %v1296, 0.0
    %1301 = vadd.xlane.f32.xlu0 %v1300
    %v1302 = vpop.xlane.xlu0 %1301
    %v1303 = vmul.f32 %v1299, %v158
    %v1304 = vmul.f32 %v1302, %v158
    %v1305 = vadd.f32 %v1303, 1e-05
    %v1306 = vadd.f32 %v1304, 1e-05
    %v1307 = vrsqrt.pop %v1305
    %v1308 = vrsqrt.pop %v1306
    %v1309 = vmul.f32 %v1293, %v1307
    %v1310 = vmul.f32 %v1294, %v1308
    %v1312 = vlaneseq
    %v1313 = vshrl.u32 %v1312, 7
    %v1314 = vsub.s32 0, %v1313
    %v1315 = vrot.slane %v1283, %v1314
    %v1317 = vmul.f32 %v1309, %v1315
    %v1318 = vmul.f32 %v1310, %v1315
    %v1320 = vlaneseq
    %v1321 = vshrl.u32 %v1320, 7
    %v1322 = vsub.s32 0, %v1321
    %v1323 = vrot.slane %v1284, %v1322
    %v1325 = vadd.f32 %v1317, %v1323
    %v1326 = vadd.f32 %v1318, %v1323
    %v1327 = vpack.c.bf16 %v1326, %v1325
    %v1328 = vld [vmem:[%s11] sm:$0xf]
    %v1329 = vld [vmem:[%s11 + $0x4] sm:$0xf]
    %v1330 = vld [vmem:[%s11 + $0x8] sm:$0xf]
    %v1331 = vld [vmem:[%s11 + $0xc] sm:$0xf]
    %v1332 = vld [vmem:[#allocation10] sm:$0x1]
    %v1334 = vlaneseq
    %v1335 = vshrl.u32 %v1334, 7
    %v1336 = vsub.s32 0, %v1335
    %v1337 = vrot.slane %v1332, %v1336
    %v1343 = vunpack.c.l.b16 %v1328
    %v1344 = vunpack.c.l.b16 %v1329
    %v1345 = vunpack.c.l.b16 %v1330
    %v1346 = vunpack.c.l.b16 %v1331
    %v1347 = vpack.c.b16 %v1344, %v1343
    %v1348 = vpack.c.b16 %v1346, %v1345
    %v1352 = vsel %vm151, %v1327, 0
    %1354 = vmatprep.subr.bf16.mxu0 0
    %1355 = vmatpush1.bf16.msra.mxu0 0
    %1356 = vmatprep.subr.bf16.mxu0 0
    %1357 = vmatpush1.bf16.msra.mxu0 0
    %1358 = vmatprep.subr.bf16.mxu0 0
    %1359 = vmatpush1.bf16.msra.mxu0 0
    %1360 = vmatprep.subr.bf16.mxu0 0
    %1361 = vmatpush1.bf16.msra.mxu0 0
    %1362 = vmatprep.subr.bf16.mxu0 0
    %1363 = vmatpush1.bf16.msra.mxu0 0
    %1364 = vmatprep.subr.bf16.mxu0 0
    %1365 = vmatpush1.bf16.msra.mxu0 0
    %1366 = vmatprep.subr.bf16.mxu0 0
    %1367 = vmatpush1.bf16.msra.mxu0 %v1348
    %1368 = vmatprep.subr.bf16.mxu0 0
    %1369 = vmatpush1.bf16.msra.mxu0 %v1347
    %1370 = vmatprep.subr.bf16.mxu0 0
    %1371 = vmatpush2.bf16.msra.mxu0 0
    %1372 = vmatprep.subr.bf16.mxu0 0
    %1373 = vmatpush2.bf16.msra.mxu0 0
    %1374 = vmatprep.subr.bf16.mxu0 0
    %1375 = vmatpush2.bf16.msra.mxu0 0
    %1376 = vmatprep.subr.bf16.mxu0 0
    %1377 = vmatpush2.bf16.msra.mxu0 0
    %1378 = vmatprep.subr.bf16.mxu0 0
    %1379 = vmatpush2.bf16.msra.mxu0 0
    %1380 = vmatprep.subr.bf16.mxu0 0
    %1381 = vmatpush2.bf16.msra.mxu0 0
    %1382 = vmatprep.subr.bf16.mxu0 0
    %1383 = vmatpush2.bf16.msra.mxu0 0
    %1384 = vmatprep.subr.bf16.mxu0 0
    %1385 = vmatpush2.bf16.msra.mxu0 0
    %1386 = vmatprep.mubr.bf16.mxu0 0
    %1387 = vmatmul.mubr.bf16.gmra.mxu0 %v1352
    %v1388 = vpop.f32.mrf.mxu0
    %v1389 = vadd.f32 %v1337, %v1388
    %v1390 = vpop.f32.mrf.mxu0
    %v1391 = vpop.f32.mrf.mxu0
    %v1392 = vadd.f32 %v1337, %v1391
    %v1393 = vpop.f32.mrf.mxu0
    %1394 = vdwg.mxu0
    %v1395 = vmul.f32 %v1389, 0.5
    %v1396 = vmul.f32 %v1392, 0.5
    %v1397 = vmul.f32 %v1389, 0.044715
    %v1398 = vmul.f32 %v1392, 0.044715
    %v1399 = vmul.f32 %v1397, %v1389
    %v1400 = vmul.f32 %v1398, %v1392
    %v1401 = vmul.f32 %v1399, %v1389
    %v1402 = vmul.f32 %v1400, %v1392
    %v1403 = vadd.f32 %v1389, %v1401
    %v1404 = vadd.f32 %v1392, %v1402
    %v1405 = vmul.f32 %v1403, 0.7978846
    %v1406 = vmul.f32 %v1404, 0.7978846
    %v1407 = vtanh.pop %v1405
    %v1408 = vtanh.pop %v1406
    %v1409 = vadd.f32 %v1407, 1.0
    %v1410 = vadd.f32 %v1408, 1.0
    %v1411 = vmul.f32 %v1395, %v1409
    %v1412 = vmul.f32 %v1396, %v1410
    %v1413 = vpack.c.bf16 %v1412, %v1411
    %v1414 = vld [vmem:[%s13] sm:$0xf]
    %v1415 = vld [vmem:[%s13 + $0x4] sm:$0xf]
    %v1416 = vld [vmem:[%s13 + $0x8] sm:$0xf]
    %v1417 = vld [vmem:[%s13 + $0xc] sm:$0xf]
    %v1418 = vld [vmem:[%s13 + $0x10] sm:$0xf]
    %v1419 = vld [vmem:[%s13 + $0x14] sm:$0xf]
    %v1420 = vld [vmem:[%s13 + $0x18] sm:$0xf]
    %v1421 = vld [vmem:[%s13 + $0x1c] sm:$0xf]
    %v1422 = vld [vmem:[#allocation11] sm:$0x1]
    %v1424 = vlaneseq
    %v1425 = vshrl.u32 %v1424, 7
    %v1426 = vsub.s32 0, %v1425
    %v1427 = vrot.slane %v1422, %v1426
    %v1437 = vunpack.c.l.b16 %v1414
    %v1438 = vunpack.c.l.b16 %v1415
    %v1439 = vunpack.c.l.b16 %v1416
    %v1440 = vunpack.c.l.b16 %v1417
    %v1441 = vunpack.c.l.b16 %v1418
    %v1442 = vunpack.c.l.b16 %v1419
    %v1443 = vunpack.c.l.b16 %v1420
    %v1444 = vunpack.c.l.b16 %v1421
    %v1445 = vpack.c.b16 %v1438, %v1437
    %v1446 = vpack.c.b16 %v1440, %v1439
    %v1447 = vpack.c.b16 %v1442, %v1441
    %v1448 = vpack.c.b16 %v1444, %v1443
    %vm1453 = vcmask 523264
    %v1455 = vsel %vm1453, %v1413, 0
    %1457 = vmatprep.subr.bf16.mxu0 0
    %1458 = vmatpush1.bf16.msra.mxu0 0
    %1459 = vmatprep.subr.bf16.mxu0 0
    %1460 = vmatpush1.bf16.msra.mxu0 0
    %1461 = vmatprep.subr.bf16.mxu0 0
    %1462 = vmatpush1.bf16.msra.mxu0 0
    %1463 = vmatprep.subr.bf16.mxu0 0
    %1464 = vmatpush1.bf16.msra.mxu0 0
    %1465 = vmatprep.subr.bf16.mxu0 0
    %1466 = vmatpush1.bf16.msra.mxu0 %v1448
    %1467 = vmatprep.subr.bf16.mxu0 0
    %1468 = vmatpush1.bf16.msra.mxu0 %v1447
    %1469 = vmatprep.subr.bf16.mxu0 0
    %1470 = vmatpush1.bf16.msra.mxu0 %v1446
    %1471 = vmatprep.subr.bf16.mxu0 0
    %1472 = vmatpush1.bf16.msra.mxu0 %v1445
    %1473 = vmatprep.subr.bf16.mxu0 0
    %1474 = vmatpush2.bf16.msra.mxu0 0
    %1475 = vmatprep.subr.bf16.mxu0 0
    %1476 = vmatpush2.bf16.msra.mxu0 0
    %1477 = vmatprep.subr.bf16.mxu0 0
    %1478 = vmatpush2.bf16.msra.mxu0 0
    %1479 = vmatprep.subr.bf16.mxu0 0
    %1480 = vmatpush2.bf16.msra.mxu0 0
    %1481 = vmatprep.subr.bf16.mxu0 0
    %1482 = vmatpush2.bf16.msra.mxu0 0
    %1483 = vmatprep.subr.bf16.mxu0 0
    %1484 = vmatpush2.bf16.msra.mxu0 0
    %1485 = vmatprep.subr.bf16.mxu0 0
    %1486 = vmatpush2.bf16.msra.mxu0 0
    %1487 = vmatprep.subr.bf16.mxu0 0
    %1488 = vmatpush2.bf16.msra.mxu0 0
    %1489 = vmatprep.mubr.bf16.mxu0 0
    %1490 = vmatmul.mubr.bf16.gmra.mxu0 %v1455
    %v1491 = vpop.f32.mrf.mxu0
    %v1492 = vadd.f32 %v1427, %v1491
    %v1493 = vpop.f32.mrf.mxu0
    %v1494 = vpop.f32.mrf.mxu0
    %v1495 = vadd.f32 %v1427, %v1494
    %v1496 = vpop.f32.mrf.mxu0
    %1497 = vdwg.mxu0
    %v1498 = vadd.f32 %v1492, %v1325
    %v1499 = vadd.f32 %v1495, %v1326
    %v1500 = vld [vmem:[%s15] sm:$0x1]
    %v1501 = vld [vmem:[%s16] sm:$0x1]
    %v1502 = vsel %vm151, %v1498, 0.0
    %1503 = vadd.xlane.f32.xlu0 %v1502
    %v1504 = vpop.xlane.xlu0 %1503
    %v1505 = vsel %vm151, %v1499, 0.0
    %1506 = vadd.xlane.f32.xlu0 %v1505
    %v1507 = vpop.xlane.xlu0 %1506
    %v1508 = vmul.f32 %v1504, %v158
    %v1509 = vmul.f32 %v1507, %v158
    %v1510 = vsub.f32 %v1498, %v1508
    %v1511 = vsub.f32 %v1499, %v1509
    %v1512 = vmul.f32 %v1510, %v1510
    %v1513 = vmul.f32 %v1511, %v1511
    %v1514 = vsel %vm151, %v1512, 0.0
    %1515 = vadd.xlane.f32.xlu0 %v1514
    %v1516 = vpop.xlane.xlu0 %1515
    %v1517 = vsel %vm151, %v1513, 0.0
    %1518 = vadd.xlane.f32.xlu0 %v1517
    %v1519 = vpop.xlane.xlu0 %1518
    %v1520 = vmul.f32 %v1516, %v158
    %v1521 = vmul.f32 %v1519, %v158
    %v1522 = vadd.f32 %v1520, 1e-05
    %v1523 = vadd.f32 %v1521, 1e-05
    %v1524 = vrsqrt.pop %v1522
    %v1525 = vrsqrt.pop %v1523
    %v1526 = vmul.f32 %v1510, %v1524
    %v1527 = vmul.f32 %v1511, %v1525
    %v1529 = vlaneseq
    %v1530 = vshrl.u32 %v1529, 7
    %v1531 = vsub.s32 0, %v1530
    %v1532 = vrot.slane %v1500, %v1531
    %v1534 = vmul.f32 %v1526, %v1532
    %v1535 = vmul.f32 %v1527, %v1532
    %v1537 = vlaneseq
    %v1538 = vshrl.u32 %v1537, 7
    %v1539 = vsub.s32 0, %v1538
    %v1540 = vrot.slane %v1501, %v1539
    %v1542 = vadd.f32 %v1534, %v1540
    %v1543 = vadd.f32 %v1535, %v1540
    %v1544 = vpack.c.bf16 %v1543, %v1542
    %s1545 = scalar_lea.vmem %s5, 16
    %v1546 = vld [vmem:[%s1545] sm:$0xf]
    %v1547 = vld [vmem:[%s1545 + $0x4] sm:$0xf]
    %v1548 = vld [vmem:[%s1545 + $0x8] sm:$0xf]
    %v1549 = vld [vmem:[%s1545 + $0xc] sm:$0xf]
    %s1550 = scalar_lea.vmem %s6, 1
    %v1551 = vld [vmem:[%s1550] sm:$0x1]
    %v1553 = vlaneseq
    %v1554 = vshrl.u32 %v1553, 7
    %v1555 = vsub.s32 0, %v1554
    %v1556 = vrot.slane %v1551, %v1555
    %v1562 = vunpack.c.l.b16 %v1546
    %v1563 = vunpack.c.l.b16 %v1547
    %v1564 = vunpack.c.l.b16 %v1548
    %v1565 = vunpack.c.l.b16 %v1549
    %v1566 = vpack.c.b16 %v1563, %v1562
    %v1567 = vpack.c.b16 %v1565, %v1564
    %v1571 = vsel %vm151, %v1544, 0
    %1573 = vmatprep.subr.bf16.mxu0 0
    %1574 = vmatpush1.bf16.msra.mxu0 0
    %1575 = vmatprep.subr.bf16.mxu0 0
    %1576 = vmatpush1.bf16.msra.mxu0 0
    %1577 = vmatprep.subr.bf16.mxu0 0
    %1578 = vmatpush1.bf16.msra.mxu0 0
    %1579 = vmatprep.subr.bf16.mxu0 0
    %1580 = vmatpush1.bf16.msra.mxu0 0
    %1581 = vmatprep.subr.bf16.mxu0 0
    %1582 = vmatpush1.bf16.msra.mxu0 0
    %1583 = vmatprep.subr.bf16.mxu0 0
    %1584 = vmatpush1.bf16.msra.mxu0 0
    %1585 = vmatprep.subr.bf16.mxu0 0
    %1586 = vmatpush1.bf16.msra.mxu0 %v1567
    %1587 = vmatprep.subr.bf16.mxu0 0
    %1588 = vmatpush1.bf16.msra.mxu0 %v1566
    %1589 = vmatprep.subr.bf16.mxu0 0
    %1590 = vmatpush2.bf16.msra.mxu0 0
    %1591 = vmatprep.subr.bf16.mxu0 0
    %1592 = vmatpush2.bf16.msra.mxu0 0
    %1593 = vmatprep.subr.bf16.mxu0 0
    %1594 = vmatpush2.bf16.msra.mxu0 0
    %1595 = vmatprep.subr.bf16.mxu0 0
    %1596 = vmatpush2.bf16.msra.mxu0 0
    %1597 = vmatprep.subr.bf16.mxu0 0
    %1598 = vmatpush2.bf16.msra.mxu0 0
    %1599 = vmatprep.subr.bf16.mxu0 0
    %1600 = vmatpush2.bf16.msra.mxu0 0
    %1601 = vmatprep.subr.bf16.mxu0 0
    %1602 = vmatpush2.bf16.msra.mxu0 0
    %1603 = vmatprep.subr.bf16.mxu0 0
    %1604 = vmatpush2.bf16.msra.mxu0 0
    %1605 = vmatprep.mubr.bf16.mxu0 0
    %1606 = vmatmul.mubr.bf16.gmra.mxu0 %v1571
    %v1607 = vpop.f32.mrf.mxu0
    %v1608 = vadd.f32 %v1556, %v1607
    %v1609 = vpop.f32.mrf.mxu0
    %v1610 = vpop.f32.mrf.mxu0
    %v1611 = vadd.f32 %v1556, %v1610
    %v1612 = vpop.f32.mrf.mxu0
    %1613 = vdwg.mxu0
    %v1614 = vpack.c.bf16 %v1611, %v1608
    %v1616 = vunpack.c.l.b16 %v1614
    %v1617 = vunpack.c.h.b16 %v1614
    %v1618 = vpack.c.b16 %v1616, %v1616
    %v1619 = vpack.c.b16 %v1617, %v1617
    %1620 = vrot.lane.b32.xlu0 %v1618, 96
    %v1621 = vpop.permute.xlu0 %1620
    %v1623 = vsel %vm289, %v1618, 0
    %v1626 = vsel %vm289, %v1621, 0
    %1628 = vmatprep.subr.bf16.mxu0 0
    %1629 = vmatpush1.bf16.xpose.msra.mxu0 0
    %1630 = vmatprep.subr.bf16.mxu0 0
    %1631 = vmatpush1.bf16.xpose.msra.mxu0 0
    %1632 = vmatprep.subr.bf16.mxu0 0
    %1633 = vmatpush1.bf16.xpose.msra.mxu0 0
    %1634 = vmatprep.subr.bf16.mxu0 0
    %1635 = vmatpush1.bf16.xpose.msra.mxu0 0
    %1636 = vmatprep.subr.bf16.mxu0 0
    %1637 = vmatpush1.bf16.xpose.msra.mxu0 0
    %1638 = vmatprep.subr.bf16.mxu0 0
    %1639 = vmatpush1.bf16.xpose.msra.mxu0 0
    %1640 = vmatprep.subr.bf16.mxu0 0
    %1641 = vmatpush1.bf16.xpose.msra.mxu0 0
    %1642 = vmatprep.subr.bf16.mxu0 0
    %1643 = vmatpush1.bf16.xpose.msra.mxu0 %v1626
    %1644 = vmatprep.subr.bf16.mxu0 0
    %1645 = vmatpush2.bf16.xpose.msra.mxu0 0
    %1646 = vmatprep.subr.bf16.mxu0 0
    %1647 = vmatpush2.bf16.xpose.msra.mxu0 0
    %1648 = vmatprep.subr.bf16.mxu0 0
    %1649 = vmatpush2.bf16.xpose.msra.mxu0 0
    %1650 = vmatprep.subr.bf16.mxu0 0
    %1651 = vmatpush2.bf16.xpose.msra.mxu0 0
    %1652 = vmatprep.subr.bf16.mxu0 0
    %1653 = vmatpush2.bf16.xpose.msra.mxu0 0
    %1654 = vmatprep.subr.bf16.mxu0 0
    %1655 = vmatpush2.bf16.xpose.msra.mxu0 0
    %1656 = vmatprep.subr.bf16.mxu0 0
    %1657 = vmatpush2.bf16.xpose.msra.mxu0 0
    %1658 = vmatprep.subr.bf16.mxu0 0
    %1659 = vmatpush2.bf16.xpose.msra.mxu0 0
    %1660 = vmatprep.mubr.bf16.mxu0 0
    %1661 = vmatmul.mubr.bf16.gmra.mxu0 %v1623
    %v1662 = vpop.f32.mrf.mxu0
    %v1663 = vadd.f32 0.0, %v1662
    %v1664 = vpop.f32.mrf.mxu0
    %v1665 = vpop.f32.mrf.mxu0
    %v1666 = vpop.f32.mrf.mxu0
    %1667 = vdwg.mxu0
    %1668 = vrot.lane.b32.xlu0 %v1619, 96
    %v1669 = vpop.permute.xlu0 %1668
    %v1671 = vsel %vm289, %v1619, 0
    %v1674 = vsel %vm289, %v1669, 0
    %1676 = vmatprep.subr.bf16.mxu0 0
    %1677 = vmatpush1.bf16.xpose.msra.mxu0 0
    %1678 = vmatprep.subr.bf16.mxu0 0
    %1679 = vmatpush1.bf16.xpose.msra.mxu0 0
    %1680 = vmatprep.subr.bf16.mxu0 0
    %1681 = vmatpush1.bf16.xpose.msra.mxu0 0
    %1682 = vmatprep.subr.bf16.mxu0 0
    %1683 = vmatpush1.bf16.xpose.msra.mxu0 0
    %1684 = vmatprep.subr.bf16.mxu0 0
    %1685 = vmatpush1.bf16.xpose.msra.mxu0 0
    %1686 = vmatprep.subr.bf16.mxu0 0
    %1687 = vmatpush1.bf16.xpose.msra.mxu0 0
    %1688 = vmatprep.subr.bf16.mxu0 0
    %1689 = vmatpush1.bf16.xpose.msra.mxu0 0
    %1690 = vmatprep.subr.bf16.mxu0 0
    %1691 = vmatpush1.bf16.xpose.msra.mxu0 %v1674
    %1692 = vmatprep.subr.bf16.mxu0 0
    %1693 = vmatpush2.bf16.xpose.msra.mxu0 0
    %1694 = vmatprep.subr.bf16.mxu0 0
    %1695 = vmatpush2.bf16.xpose.msra.mxu0 0
    %1696 = vmatprep.subr.bf16.mxu0 0
    %1697 = vmatpush2.bf16.xpose.msra.mxu0 0
    %1698 = vmatprep.subr.bf16.mxu0 0
    %1699 = vmatpush2.bf16.xpose.msra.mxu0 0
    %1700 = vmatprep.subr.bf16.mxu0 0
    %1701 = vmatpush2.bf16.xpose.msra.mxu0 0
    %1702 = vmatprep.subr.bf16.mxu0 0
    %1703 = vmatpush2.bf16.xpose.msra.mxu0 0
    %1704 = vmatprep.subr.bf16.mxu0 0
    %1705 = vmatpush2.bf16.xpose.msra.mxu0 0
    %1706 = vmatprep.subr.bf16.mxu0 0
    %1707 = vmatpush2.bf16.xpose.msra.mxu0 0
    %1708 = vmatprep.mubr.bf16.mxu0 0
    %1709 = vmatmul.mubr.bf16.gmra.mxu0 %v1671
    %v1710 = vpop.f32.mrf.mxu0
    %v1711 = vadd.f32 0.0, %v1710
    %v1712 = vpop.f32.mrf.mxu0
    %v1713 = vpop.f32.mrf.mxu0
    %v1714 = vpop.f32.mrf.mxu0
    %1715 = vdwg.mxu0
    %v1716 = vmul.f32 %v1663, 0.35355338
    %v1717 = vmul.f32 %v1711, 0.35355338
    %v1718 = vadd.f32 %v1716, %v206
    %v1719 = vadd.f32 %v1717, %v210
    %v1720 = vsel %vm289, %v1718, -inf
    %1721 = vmax.xlane.f32.xlu0 %v1720
    %v1722 = vpop.xlane.xlu0 %1721
    %v1723 = vsel %vm289, %v1719, -inf
    %1724 = vmax.xlane.f32.xlu0 %v1723
    %v1725 = vpop.xlane.xlu0 %1724
    %v1726 = vsub.f32 %v1718, %v1722
    %v1727 = vsub.f32 %v1719, %v1725
    %v1728 = vmul.f32 %v1726, 1.442695
    %v1729 = vpow.pop %v1728
    %v1730 = vmul.f32 %v1727, 1.442695
    %v1731 = vpow.pop %v1730
    %v1732 = vsel %vm289, %v1729, 0.0
    %1733 = vadd.xlane.f32.xlu0 %v1732
    %v1734 = vpop.xlane.xlu0 %1733
    %v1735 = vsel %vm289, %v1731, 0.0
    %1736 = vadd.xlane.f32.xlu0 %v1735
    %v1737 = vpop.xlane.xlu0 %1736
    %v1738 = vrcp.pop %v1734
    %v1739 = vrcp.pop %v1737
    %v1740 = vmul.f32 %v1729, %v1738
    %v1741 = vmul.f32 %v1731, %v1739
    %v1742 = vpack.c.bf16 %v1740, %v1740
    %v1743 = vpack.c.bf16 %v1741, %v1741
    %1744 = vrot.lane.b32.xlu0 %v1618, 64
    %v1745 = vpop.permute.xlu0 %1744
    %v1747 = vsel %vm289, %v1742, 0
    %v1750 = vsel %vm417, %v1745, 0
    %1752 = vmatprep.subr.bf16.mxu0 0
    %1753 = vmatpush1.bf16.msra.mxu0 0
    %1754 = vmatprep.subr.bf16.mxu0 0
    %1755 = vmatpush1.bf16.msra.mxu0 0
    %1756 = vmatprep.subr.bf16.mxu0 0
    %1757 = vmatpush1.bf16.msra.mxu0 0
    %1758 = vmatprep.subr.bf16.mxu0 0
    %1759 = vmatpush1.bf16.msra.mxu0 0
    %1760 = vmatprep.subr.bf16.mxu0 0
    %1761 = vmatpush1.bf16.msra.mxu0 0
    %1762 = vmatprep.subr.bf16.mxu0 0
    %1763 = vmatpush1.bf16.msra.mxu0 0
    %1764 = vmatprep.subr.bf16.mxu0 0
    %1765 = vmatpush1.bf16.msra.mxu0 0
    %1766 = vmatprep.subr.bf16.mxu0 0
    %1767 = vmatpush1.bf16.msra.mxu0 %v1750
    %1768 = vmatprep.subr.bf16.mxu0 0
    %1769 = vmatpush2.bf16.msra.mxu0 0
    %1770 = vmatprep.subr.bf16.mxu0 0
    %1771 = vmatpush2.bf16.msra.mxu0 0
    %1772 = vmatprep.subr.bf16.mxu0 0
    %1773 = vmatpush2.bf16.msra.mxu0 0
    %1774 = vmatprep.subr.bf16.mxu0 0
    %1775 = vmatpush2.bf16.msra.mxu0 0
    %1776 = vmatprep.subr.bf16.mxu0 0
    %1777 = vmatpush2.bf16.msra.mxu0 0
    %1778 = vmatprep.subr.bf16.mxu0 0
    %1779 = vmatpush2.bf16.msra.mxu0 0
    %1780 = vmatprep.subr.bf16.mxu0 0
    %1781 = vmatpush2.bf16.msra.mxu0 0
    %1782 = vmatprep.subr.bf16.mxu0 0
    %1783 = vmatpush2.bf16.msra.mxu0 0
    %1784 = vmatprep.mubr.bf16.mxu0 0
    %1785 = vmatmul.mubr.bf16.gmra.mxu0 %v1747
    %v1786 = vpop.f32.mrf.mxu0
    %v1787 = vadd.f32 0.0, %v1786
    %v1788 = vpop.f32.mrf.mxu0
    %v1789 = vpop.f32.mrf.mxu0
    %v1790 = vpop.f32.mrf.mxu0
    %1791 = vdwg.mxu0
    %1792 = vrot.lane.b32.xlu0 %v1619, 64
    %v1793 = vpop.permute.xlu0 %1792
    %v1795 = vsel %vm289, %v1743, 0
    %v1798 = vsel %vm417, %v1793, 0
    %1800 = vmatprep.subr.bf16.mxu0 0
    %1801 = vmatpush1.bf16.msra.mxu0 0
    %1802 = vmatprep.subr.bf16.mxu0 0
    %1803 = vmatpush1.bf16.msra.mxu0 0
    %1804 = vmatprep.subr.bf16.mxu0 0
    %1805 = vmatpush1.bf16.msra.mxu0 0
    %1806 = vmatprep.subr.bf16.mxu0 0
    %1807 = vmatpush1.bf16.msra.mxu0 0
    %1808 = vmatprep.subr.bf16.mxu0 0
    %1809 = vmatpush1.bf16.msra.mxu0 0
    %1810 = vmatprep.subr.bf16.mxu0 0
    %1811 = vmatpush1.bf16.msra.mxu0 0
    %1812 = vmatprep.subr.bf16.mxu0 0
    %1813 = vmatpush1.bf16.msra.mxu0 0
    %1814 = vmatprep.subr.bf16.mxu0 0
    %1815 = vmatpush1.bf16.msra.mxu0 %v1798
    %1816 = vmatprep.subr.bf16.mxu0 0
    %1817 = vmatpush2.bf16.msra.mxu0 0
    %1818 = vmatprep.subr.bf16.mxu0 0
    %1819 = vmatpush2.bf16.msra.mxu0 0
    %1820 = vmatprep.subr.bf16.mxu0 0
    %1821 = vmatpush2.bf16.msra.mxu0 0
    %1822 = vmatprep.subr.bf16.mxu0 0
    %1823 = vmatpush2.bf16.msra.mxu0 0
    %1824 = vmatprep.subr.bf16.mxu0 0
    %1825 = vmatpush2.bf16.msra.mxu0 0
    %1826 = vmatprep.subr.bf16.mxu0 0
    %1827 = vmatpush2.bf16.msra.mxu0 0
    %1828 = vmatprep.subr.bf16.mxu0 0
    %1829 = vmatpush2.bf16.msra.mxu0 0
    %1830 = vmatprep.subr.bf16.mxu0 0
    %1831 = vmatpush2.bf16.msra.mxu0 0
    %1832 = vmatprep.mubr.bf16.mxu0 0
    %1833 = vmatmul.mubr.bf16.gmra.mxu0 %v1795
    %v1834 = vpop.f32.mrf.mxu0
    %v1835 = vadd.f32 0.0, %v1834
    %v1836 = vpop.f32.mrf.mxu0
    %v1837 = vpop.f32.mrf.mxu0
    %v1838 = vpop.f32.mrf.mxu0
    %1839 = vdwg.mxu0
    %1840 = vrot.lane.b32.xlu0 %v1618, 120
    %v1841 = vpop.permute.xlu0 %1840
    %1842 = vrot.lane.b32.xlu0 %v1618, 88
    %v1843 = vpop.permute.xlu0 %1842
    %v1845 = vsel %vm289, %v1841, 0
    %v1848 = vsel %vm289, %v1843, 0
    %1850 = vmatprep.subr.bf16.mxu0 0
    %1851 = vmatpush1.bf16.xpose.msra.mxu0 0
    %1852 = vmatprep.subr.bf16.mxu0 0
    %1853 = vmatpush1.bf16.xpose.msra.mxu0 0
    %1854 = vmatprep.subr.bf16.mxu0 0
    %1855 = vmatpush1.bf16.xpose.msra.mxu0 0
    %1856 = vmatprep.subr.bf16.mxu0 0
    %1857 = vmatpush1.bf16.xpose.msra.mxu0 0
    %1858 = vmatprep.subr.bf16.mxu0 0
    %1859 = vmatpush1.bf16.xpose.msra.mxu0 0
    %1860 = vmatprep.subr.bf16.mxu0 0
    %1861 = vmatpush1.bf16.xpose.msra.mxu0 0
    %1862 = vmatprep.subr.bf16.mxu0 0
    %1863 = vmatpush1.bf16.xpose.msra.mxu0 0
    %1864 = vmatprep.subr.bf16.mxu0 0
    %1865 = vmatpush1.bf16.xpose.msra.mxu0 %v1848
    %1866 = vmatprep.subr.bf16.mxu0 0
    %1867 = vmatpush2.bf16.xpose.msra.mxu0 0
    %1868 = vmatprep.subr.bf16.mxu0 0
    %1869 = vmatpush2.bf16.xpose.msra.mxu0 0
    %1870 = vmatprep.subr.bf16.mxu0 0
    %1871 = vmatpush2.bf16.xpose.msra.mxu0 0
    %1872 = vmatprep.subr.bf16.mxu0 0
    %1873 = vmatpush2.bf16.xpose.msra.mxu0 0
    %1874 = vmatprep.subr.bf16.mxu0 0
    %1875 = vmatpush2.bf16.xpose.msra.mxu0 0
    %1876 = vmatprep.subr.bf16.mxu0 0
    %1877 = vmatpush2.bf16.xpose.msra.mxu0 0
    %1878 = vmatprep.subr.bf16.mxu0 0
    %1879 = vmatpush2.bf16.xpose.msra.mxu0 0
    %1880 = vmatprep.subr.bf16.mxu0 0
    %1881 = vmatpush2.bf16.xpose.msra.mxu0 0
    %1882 = vmatprep.mubr.bf16.mxu0 0
    %1883 = vmatmul.mubr.bf16.gmra.mxu0 %v1845
    %v1884 = vpop.f32.mrf.mxu0
    %v1885 = vadd.f32 0.0, %v1884
    %v1886 = vpop.f32.mrf.mxu0
    %v1887 = vpop.f32.mrf.mxu0
    %v1888 = vpop.f32.mrf.mxu0
    %1889 = vdwg.mxu0
    %1890 = vrot.lane.b32.xlu0 %v1619, 120
    %v1891 = vpop.permute.xlu0 %1890
    %1892 = vrot.lane.b32.xlu0 %v1619, 88
    %v1893 = vpop.permute.xlu0 %1892
    %v1895 = vsel %vm289, %v1891, 0
    %v1898 = vsel %vm289, %v1893, 0
    %1900 = vmatprep.subr.bf16.mxu0 0
    %1901 = vmatpush1.bf16.xpose.msra.mxu0 0
    %1902 = vmatprep.subr.bf16.mxu0 0
    %1903 = vmatpush1.bf16.xpose.msra.mxu0 0
    %1904 = vmatprep.subr.bf16.mxu0 0
    %1905 = vmatpush1.bf16.xpose.msra.mxu0 0
    %1906 = vmatprep.subr.bf16.mxu0 0
    %1907 = vmatpush1.bf16.xpose.msra.mxu0 0
    %1908 = vmatprep.subr.bf16.mxu0 0
    %1909 = vmatpush1.bf16.xpose.msra.mxu0 0
    %1910 = vmatprep.subr.bf16.mxu0 0
    %1911 = vmatpush1.bf16.xpose.msra.mxu0 0
    %1912 = vmatprep.subr.bf16.mxu0 0
    %1913 = vmatpush1.bf16.xpose.msra.mxu0 0
    %1914 = vmatprep.subr.bf16.mxu0 0
    %1915 = vmatpush1.bf16.xpose.msra.mxu0 %v1898
    %1916 = vmatprep.subr.bf16.mxu0 0
    %1917 = vmatpush2.bf16.xpose.msra.mxu0 0
    %1918 = vmatprep.subr.bf16.mxu0 0
    %1919 = vmatpush2.bf16.xpose.msra.mxu0 0
    %1920 = vmatprep.subr.bf16.mxu0 0
    %1921 = vmatpush2.bf16.xpose.msra.mxu0 0
    %1922 = vmatprep.subr.bf16.mxu0 0
    %1923 = vmatpush2.bf16.xpose.msra.mxu0 0
    %1924 = vmatprep.subr.bf16.mxu0 0
    %1925 = vmatpush2.bf16.xpose.msra.mxu0 0
    %1926 = vmatprep.subr.bf16.mxu0 0
    %1927 = vmatpush2.bf16.xpose.msra.mxu0 0
    %1928 = vmatprep.subr.bf16.mxu0 0
    %1929 = vmatpush2.bf16.xpose.msra.mxu0 0
    %1930 = vmatprep.subr.bf16.mxu0 0
    %1931 = vmatpush2.bf16.xpose.msra.mxu0 0
    %1932 = vmatprep.mubr.bf16.mxu0 0
    %1933 = vmatmul.mubr.bf16.gmra.mxu0 %v1895
    %v1934 = vpop.f32.mrf.mxu0
    %v1935 = vadd.f32 0.0, %v1934
    %v1936 = vpop.f32.mrf.mxu0
    %v1937 = vpop.f32.mrf.mxu0
    %v1938 = vpop.f32.mrf.mxu0
    %1939 = vdwg.mxu0
    %v1940 = vmul.f32 %v1885, 0.35355338
    %v1941 = vmul.f32 %v1935, 0.35355338
    %v1942 = vadd.f32 %v1940, %v206
    %v1943 = vadd.f32 %v1941, %v210
    %v1944 = vsel %vm289, %v1942, -inf
    %1945 = vmax.xlane.f32.xlu0 %v1944
    %v1946 = vpop.xlane.xlu0 %1945
    %v1947 = vsel %vm289, %v1943, -inf
    %1948 = vmax.xlane.f32.xlu0 %v1947
    %v1949 = vpop.xlane.xlu0 %1948
    %v1950 = vsub.f32 %v1942, %v1946
    %v1951 = vsub.f32 %v1943, %v1949
    %v1952 = vmul.f32 %v1950, 1.442695
    %v1953 = vpow.pop %v1952
    %v1954 = vmul.f32 %v1951, 1.442695
    %v1955 = vpow.pop %v1954
    %v1956 = vsel %vm289, %v1953, 0.0
    %1957 = vadd.xlane.f32.xlu0 %v1956
    %v1958 = vpop.xlane.xlu0 %1957
    %v1959 = vsel %vm289, %v1955, 0.0
    %1960 = vadd.xlane.f32.xlu0 %v1959
    %v1961 = vpop.xlane.xlu0 %1960
    %v1962 = vrcp.pop %v1958
    %v1963 = vrcp.pop %v1961
    %v1964 = vmul.f32 %v1953, %v1962
    %v1965 = vmul.f32 %v1955, %v1963
    %v1966 = vpack.c.bf16 %v1964, %v1964
    %v1967 = vpack.c.bf16 %v1965, %v1965
    %1968 = vrot.lane.b32.xlu0 %v1618, 56
    %v1969 = vpop.permute.xlu0 %1968
    %v1971 = vsel %vm289, %v1966, 0
    %v1974 = vsel %vm417, %v1969, 0
    %1976 = vmatprep.subr.bf16.mxu0 0
    %1977 = vmatpush1.bf16.msra.mxu0 0
    %1978 = vmatprep.subr.bf16.mxu0 0
    %1979 = vmatpush1.bf16.msra.mxu0 0
    %1980 = vmatprep.subr.bf16.mxu0 0
    %1981 = vmatpush1.bf16.msra.mxu0 0
    %1982 = vmatprep.subr.bf16.mxu0 0
    %1983 = vmatpush1.bf16.msra.mxu0 0
    %1984 = vmatprep.subr.bf16.mxu0 0
    %1985 = vmatpush1.bf16.msra.mxu0 0
    %1986 = vmatprep.subr.bf16.mxu0 0
    %1987 = vmatpush1.bf16.msra.mxu0 0
    %1988 = vmatprep.subr.bf16.mxu0 0
    %1989 = vmatpush1.bf16.msra.mxu0 0
    %1990 = vmatprep.subr.bf16.mxu0 0
    %1991 = vmatpush1.bf16.msra.mxu0 %v1974
    %1992 = vmatprep.subr.bf16.mxu0 0
    %1993 = vmatpush2.bf16.msra.mxu0 0
    %1994 = vmatprep.subr.bf16.mxu0 0
    %1995 = vmatpush2.bf16.msra.mxu0 0
    %1996 = vmatprep.subr.bf16.mxu0 0
    %1997 = vmatpush2.bf16.msra.mxu0 0
    %1998 = vmatprep.subr.bf16.mxu0 0
    %1999 = vmatpush2.bf16.msra.mxu0 0
    %2000 = vmatprep.subr.bf16.mxu0 0
    %2001 = vmatpush2.bf16.msra.mxu0 0
    %2002 = vmatprep.subr.bf16.mxu0 0
    %2003 = vmatpush2.bf16.msra.mxu0 0
    %2004 = vmatprep.subr.bf16.mxu0 0
    %2005 = vmatpush2.bf16.msra.mxu0 0
    %2006 = vmatprep.subr.bf16.mxu0 0
    %2007 = vmatpush2.bf16.msra.mxu0 0
    %2008 = vmatprep.mubr.bf16.mxu0 0
    %2009 = vmatmul.mubr.bf16.gmra.mxu0 %v1971
    %v2010 = vpop.f32.mrf.mxu0
    %v2011 = vadd.f32 0.0, %v2010
    %v2012 = vpop.f32.mrf.mxu0
    %v2013 = vpop.f32.mrf.mxu0
    %v2014 = vpop.f32.mrf.mxu0
    %2015 = vdwg.mxu0
    %2016 = vrot.lane.b32.xlu0 %v1619, 56
    %v2017 = vpop.permute.xlu0 %2016
    %v2019 = vsel %vm289, %v1967, 0
    %v2022 = vsel %vm417, %v2017, 0
    %2024 = vmatprep.subr.bf16.mxu0 0
    %2025 = vmatpush1.bf16.msra.mxu0 0
    %2026 = vmatprep.subr.bf16.mxu0 0
    %2027 = vmatpush1.bf16.msra.mxu0 0
    %2028 = vmatprep.subr.bf16.mxu0 0
    %2029 = vmatpush1.bf16.msra.mxu0 0
    %2030 = vmatprep.subr.bf16.mxu0 0
    %2031 = vmatpush1.bf16.msra.mxu0 0
    %2032 = vmatprep.subr.bf16.mxu0 0
    %2033 = vmatpush1.bf16.msra.mxu0 0
    %2034 = vmatprep.subr.bf16.mxu0 0
    %2035 = vmatpush1.bf16.msra.mxu0 0
    %2036 = vmatprep.subr.bf16.mxu0 0
    %2037 = vmatpush1.bf16.msra.mxu0 0
    %2038 = vmatprep.subr.bf16.mxu0 0
    %2039 = vmatpush1.bf16.msra.mxu0 %v2022
    %2040 = vmatprep.subr.bf16.mxu0 0
    %2041 = vmatpush2.bf16.msra.mxu0 0
    %2042 = vmatprep.subr.bf16.mxu0 0
    %2043 = vmatpush2.bf16.msra.mxu0 0
    %2044 = vmatprep.subr.bf16.mxu0 0
    %2045 = vmatpush2.bf16.msra.mxu0 0
    %2046 = vmatprep.subr.bf16.mxu0 0
    %2047 = vmatpush2.bf16.msra.mxu0 0
    %2048 = vmatprep.subr.bf16.mxu0 0
    %2049 = vmatpush2.bf16.msra.mxu0 0
    %2050 = vmatprep.subr.bf16.mxu0 0
    %2051 = vmatpush2.bf16.msra.mxu0 0
    %2052 = vmatprep.subr.bf16.mxu0 0
    %2053 = vmatpush2.bf16.msra.mxu0 0
    %2054 = vmatprep.subr.bf16.mxu0 0
    %2055 = vmatpush2.bf16.msra.mxu0 0
    %2056 = vmatprep.mubr.bf16.mxu0 0
    %2057 = vmatmul.mubr.bf16.gmra.mxu0 %v2019
    %v2058 = vpop.f32.mrf.mxu0
    %v2059 = vadd.f32 0.0, %v2058
    %v2060 = vpop.f32.mrf.mxu0
    %v2061 = vpop.f32.mrf.mxu0
    %v2062 = vpop.f32.mrf.mxu0
    %2063 = vdwg.mxu0
    %2064 = vrot.lane.b32.xlu0 %v1618, 112
    %v2065 = vpop.permute.xlu0 %2064
    %2066 = vrot.lane.b32.xlu0 %v1618, 80
    %v2067 = vpop.permute.xlu0 %2066
    %v2069 = vsel %vm289, %v2065, 0
    %v2072 = vsel %vm289, %v2067, 0
    %2074 = vmatprep.subr.bf16.mxu0 0
    %2075 = vmatpush1.bf16.xpose.msra.mxu0 0
    %2076 = vmatprep.subr.bf16.mxu0 0
    %2077 = vmatpush1.bf16.xpose.msra.mxu0 0
    %2078 = vmatprep.subr.bf16.mxu0 0
    %2079 = vmatpush1.bf16.xpose.msra.mxu0 0
    %2080 = vmatprep.subr.bf16.mxu0 0
    %2081 = vmatpush1.bf16.xpose.msra.mxu0 0
    %2082 = vmatprep.subr.bf16.mxu0 0
    %2083 = vmatpush1.bf16.xpose.msra.mxu0 0
    %2084 = vmatprep.subr.bf16.mxu0 0
    %2085 = vmatpush1.bf16.xpose.msra.mxu0 0
    %2086 = vmatprep.subr.bf16.mxu0 0
    %2087 = vmatpush1.bf16.xpose.msra.mxu0 0
    %2088 = vmatprep.subr.bf16.mxu0 0
    %2089 = vmatpush1.bf16.xpose.msra.mxu0 %v2072
    %2090 = vmatprep.subr.bf16.mxu0 0
    %2091 = vmatpush2.bf16.xpose.msra.mxu0 0
    %2092 = vmatprep.subr.bf16.mxu0 0
    %2093 = vmatpush2.bf16.xpose.msra.mxu0 0
    %2094 = vmatprep.subr.bf16.mxu0 0
    %2095 = vmatpush2.bf16.xpose.msra.mxu0 0
    %2096 = vmatprep.subr.bf16.mxu0 0
    %2097 = vmatpush2.bf16.xpose.msra.mxu0 0
    %2098 = vmatprep.subr.bf16.mxu0 0
    %2099 = vmatpush2.bf16.xpose.msra.mxu0 0
    %2100 = vmatprep.subr.bf16.mxu0 0
    %2101 = vmatpush2.bf16.xpose.msra.mxu0 0
    %2102 = vmatprep.subr.bf16.mxu0 0
    %2103 = vmatpush2.bf16.xpose.msra.mxu0 0
    %2104 = vmatprep.subr.bf16.mxu0 0
    %2105 = vmatpush2.bf16.xpose.msra.mxu0 0
    %2106 = vmatprep.mubr.bf16.mxu0 0
    %2107 = vmatmul.mubr.bf16.gmra.mxu0 %v2069
    %v2108 = vpop.f32.mrf.mxu0
    %v2109 = vadd.f32 0.0, %v2108
    %v2110 = vpop.f32.mrf.mxu0
    %v2111 = vpop.f32.mrf.mxu0
    %v2112 = vpop.f32.mrf.mxu0
    %2113 = vdwg.mxu0
    %2114 = vrot.lane.b32.xlu0 %v1619, 112
    %v2115 = vpop.permute.xlu0 %2114
    %2116 = vrot.lane.b32.xlu0 %v1619, 80
    %v2117 = vpop.permute.xlu0 %2116
    %v2119 = vsel %vm289, %v2115, 0
    %v2122 = vsel %vm289, %v2117, 0
    %2124 = vmatprep.subr.bf16.mxu0 0
    %2125 = vmatpush1.bf16.xpose.msra.mxu0 0
    %2126 = vmatprep.subr.bf16.mxu0 0
    %2127 = vmatpush1.bf16.xpose.msra.mxu0 0
    %2128 = vmatprep.subr.bf16.mxu0 0
    %2129 = vmatpush1.bf16.xpose.msra.mxu0 0
    %2130 = vmatprep.subr.bf16.mxu0 0
    %2131 = vmatpush1.bf16.xpose.msra.mxu0 0
    %2132 = vmatprep.subr.bf16.mxu0 0
    %2133 = vmatpush1.bf16.xpose.msra.mxu0 0
    %2134 = vmatprep.subr.bf16.mxu0 0
    %2135 = vmatpush1.bf16.xpose.msra.mxu0 0
    %2136 = vmatprep.subr.bf16.mxu0 0
    %2137 = vmatpush1.bf16.xpose.msra.mxu0 0
    %2138 = vmatprep.subr.bf16.mxu0 0
    %2139 = vmatpush1.bf16.xpose.msra.mxu0 %v2122
    %2140 = vmatprep.subr.bf16.mxu0 0
    %2141 = vmatpush2.bf16.xpose.msra.mxu0 0
    %2142 = vmatprep.subr.bf16.mxu0 0
    %2143 = vmatpush2.bf16.xpose.msra.mxu0 0
    %2144 = vmatprep.subr.bf16.mxu0 0
    %2145 = vmatpush2.bf16.xpose.msra.mxu0 0
    %2146 = vmatprep.subr.bf16.mxu0 0
    %2147 = vmatpush2.bf16.xpose.msra.mxu0 0
    %2148 = vmatprep.subr.bf16.mxu0 0
    %2149 = vmatpush2.bf16.xpose.msra.mxu0 0
    %2150 = vmatprep.subr.bf16.mxu0 0
    %2151 = vmatpush2.bf16.xpose.msra.mxu0 0
    %2152 = vmatprep.subr.bf16.mxu0 0
    %2153 = vmatpush2.bf16.xpose.msra.mxu0 0
    %2154 = vmatprep.subr.bf16.mxu0 0
    %2155 = vmatpush2.bf16.xpose.msra.mxu0 0
    %2156 = vmatprep.mubr.bf16.mxu0 0
    %2157 = vmatmul.mubr.bf16.gmra.mxu0 %v2119
    %v2158 = vpop.f32.mrf.mxu0
    %v2159 = vadd.f32 0.0, %v2158
    %v2160 = vpop.f32.mrf.mxu0
    %v2161 = vpop.f32.mrf.mxu0
    %v2162 = vpop.f32.mrf.mxu0
    %2163 = vdwg.mxu0
    %v2164 = vmul.f32 %v2109, 0.35355338
    %v2165 = vmul.f32 %v2159, 0.35355338
    %v2166 = vadd.f32 %v2164, %v206
    %v2167 = vadd.f32 %v2165, %v210
    %v2168 = vsel %vm289, %v2166, -inf
    %2169 = vmax.xlane.f32.xlu0 %v2168
    %v2170 = vpop.xlane.xlu0 %2169
    %v2171 = vsel %vm289, %v2167, -inf
    %2172 = vmax.xlane.f32.xlu0 %v2171
    %v2173 = vpop.xlane.xlu0 %2172
    %v2174 = vsub.f32 %v2166, %v2170
    %v2175 = vsub.f32 %v2167, %v2173
    %v2176 = vmul.f32 %v2174, 1.442695
    %v2177 = vpow.pop %v2176
    %v2178 = vmul.f32 %v2175, 1.442695
    %v2179 = vpow.pop %v2178
    %v2180 = vsel %vm289, %v2177, 0.0
    %2181 = vadd.xlane.f32.xlu0 %v2180
    %v2182 = vpop.xlane.xlu0 %2181
    %v2183 = vsel %vm289, %v2179, 0.0
    %2184 = vadd.xlane.f32.xlu0 %v2183
    %v2185 = vpop.xlane.xlu0 %2184
    %v2186 = vrcp.pop %v2182
    %v2187 = vrcp.pop %v2185
    %v2188 = vmul.f32 %v2177, %v2186
    %v2189 = vmul.f32 %v2179, %v2187
    %v2190 = vpack.c.bf16 %v2188, %v2188
    %v2191 = vpack.c.bf16 %v2189, %v2189
    %2192 = vrot.lane.b32.xlu0 %v1618, 48
    %v2193 = vpop.permute.xlu0 %2192
    %v2195 = vsel %vm289, %v2190, 0
    %v2198 = vsel %vm417, %v2193, 0
    %2200 = vmatprep.subr.bf16.mxu0 0
    %2201 = vmatpush1.bf16.msra.mxu0 0
    %2202 = vmatprep.subr.bf16.mxu0 0
    %2203 = vmatpush1.bf16.msra.mxu0 0
    %2204 = vmatprep.subr.bf16.mxu0 0
    %2205 = vmatpush1.bf16.msra.mxu0 0
    %2206 = vmatprep.subr.bf16.mxu0 0
    %2207 = vmatpush1.bf16.msra.mxu0 0
    %2208 = vmatprep.subr.bf16.mxu0 0
    %2209 = vmatpush1.bf16.msra.mxu0 0
    %2210 = vmatprep.subr.bf16.mxu0 0
    %2211 = vmatpush1.bf16.msra.mxu0 0
    %2212 = vmatprep.subr.bf16.mxu0 0
    %2213 = vmatpush1.bf16.msra.mxu0 0
    %2214 = vmatprep.subr.bf16.mxu0 0
    %2215 = vmatpush1.bf16.msra.mxu0 %v2198
    %2216 = vmatprep.subr.bf16.mxu0 0
    %2217 = vmatpush2.bf16.msra.mxu0 0
    %2218 = vmatprep.subr.bf16.mxu0 0
    %2219 = vmatpush2.bf16.msra.mxu0 0
    %2220 = vmatprep.subr.bf16.mxu0 0
    %2221 = vmatpush2.bf16.msra.mxu0 0
    %2222 = vmatprep.subr.bf16.mxu0 0
    %2223 = vmatpush2.bf16.msra.mxu0 0
    %2224 = vmatprep.subr.bf16.mxu0 0
    %2225 = vmatpush2.bf16.msra.mxu0 0
    %2226 = vmatprep.subr.bf16.mxu0 0
    %2227 = vmatpush2.bf16.msra.mxu0 0
    %2228 = vmatprep.subr.bf16.mxu0 0
    %2229 = vmatpush2.bf16.msra.mxu0 0
    %2230 = vmatprep.subr.bf16.mxu0 0
    %2231 = vmatpush2.bf16.msra.mxu0 0
    %2232 = vmatprep.mubr.bf16.mxu0 0
    %2233 = vmatmul.mubr.bf16.gmra.mxu0 %v2195
    %v2234 = vpop.f32.mrf.mxu0
    %v2235 = vadd.f32 0.0, %v2234
    %v2236 = vpop.f32.mrf.mxu0
    %v2237 = vpop.f32.mrf.mxu0
    %v2238 = vpop.f32.mrf.mxu0
    %2239 = vdwg.mxu0
    %2240 = vrot.lane.b32.xlu0 %v1619, 48
    %v2241 = vpop.permute.xlu0 %2240
    %v2243 = vsel %vm289, %v2191, 0
    %v2246 = vsel %vm417, %v2241, 0
    %2248 = vmatprep.subr.bf16.mxu0 0
    %2249 = vmatpush1.bf16.msra.mxu0 0
    %2250 = vmatprep.subr.bf16.mxu0 0
    %2251 = vmatpush1.bf16.msra.mxu0 0
    %2252 = vmatprep.subr.bf16.mxu0 0
    %2253 = vmatpush1.bf16.msra.mxu0 0
    %2254 = vmatprep.subr.bf16.mxu0 0
    %2255 = vmatpush1.bf16.msra.mxu0 0
    %2256 = vmatprep.subr.bf16.mxu0 0
    %2257 = vmatpush1.bf16.msra.mxu0 0
    %2258 = vmatprep.subr.bf16.mxu0 0
    %2259 = vmatpush1.bf16.msra.mxu0 0
    %2260 = vmatprep.subr.bf16.mxu0 0
    %2261 = vmatpush1.bf16.msra.mxu0 0
    %2262 = vmatprep.subr.bf16.mxu0 0
    %2263 = vmatpush1.bf16.msra.mxu0 %v2246
    %2264 = vmatprep.subr.bf16.mxu0 0
    %2265 = vmatpush2.bf16.msra.mxu0 0
    %2266 = vmatprep.subr.bf16.mxu0 0
    %2267 = vmatpush2.bf16.msra.mxu0 0
    %2268 = vmatprep.subr.bf16.mxu0 0
    %2269 = vmatpush2.bf16.msra.mxu0 0
    %2270 = vmatprep.subr.bf16.mxu0 0
    %2271 = vmatpush2.bf16.msra.mxu0 0
    %2272 = vmatprep.subr.bf16.mxu0 0
    %2273 = vmatpush2.bf16.msra.mxu0 0
    %2274 = vmatprep.subr.bf16.mxu0 0
    %2275 = vmatpush2.bf16.msra.mxu0 0
    %2276 = vmatprep.subr.bf16.mxu0 0
    %2277 = vmatpush2.bf16.msra.mxu0 0
    %2278 = vmatprep.subr.bf16.mxu0 0
    %2279 = vmatpush2.bf16.msra.mxu0 0
    %2280 = vmatprep.mubr.bf16.mxu0 0
    %2281 = vmatmul.mubr.bf16.gmra.mxu0 %v2243
    %v2282 = vpop.f32.mrf.mxu0
    %v2283 = vadd.f32 0.0, %v2282
    %v2284 = vpop.f32.mrf.mxu0
    %v2285 = vpop.f32.mrf.mxu0
    %v2286 = vpop.f32.mrf.mxu0
    %2287 = vdwg.mxu0
    %2288 = vrot.lane.b32.xlu0 %v1618, 104
    %v2289 = vpop.permute.xlu0 %2288
    %2290 = vrot.lane.b32.xlu0 %v1618, 72
    %v2291 = vpop.permute.xlu0 %2290
    %v2293 = vsel %vm289, %v2289, 0
    %v2296 = vsel %vm289, %v2291, 0
    %2298 = vmatprep.subr.bf16.mxu0 0
    %2299 = vmatpush1.bf16.xpose.msra.mxu0 0
    %2300 = vmatprep.subr.bf16.mxu0 0
    %2301 = vmatpush1.bf16.xpose.msra.mxu0 0
    %2302 = vmatprep.subr.bf16.mxu0 0
    %2303 = vmatpush1.bf16.xpose.msra.mxu0 0
    %2304 = vmatprep.subr.bf16.mxu0 0
    %2305 = vmatpush1.bf16.xpose.msra.mxu0 0
    %2306 = vmatprep.subr.bf16.mxu0 0
    %2307 = vmatpush1.bf16.xpose.msra.mxu0 0
    %2308 = vmatprep.subr.bf16.mxu0 0
    %2309 = vmatpush1.bf16.xpose.msra.mxu0 0
    %2310 = vmatprep.subr.bf16.mxu0 0
    %2311 = vmatpush1.bf16.xpose.msra.mxu0 0
    %2312 = vmatprep.subr.bf16.mxu0 0
    %2313 = vmatpush1.bf16.xpose.msra.mxu0 %v2296
    %2314 = vmatprep.subr.bf16.mxu0 0
    %2315 = vmatpush2.bf16.xpose.msra.mxu0 0
    %2316 = vmatprep.subr.bf16.mxu0 0
    %2317 = vmatpush2.bf16.xpose.msra.mxu0 0
    %2318 = vmatprep.subr.bf16.mxu0 0
    %2319 = vmatpush2.bf16.xpose.msra.mxu0 0
    %2320 = vmatprep.subr.bf16.mxu0 0
    %2321 = vmatpush2.bf16.xpose.msra.mxu0 0
    %2322 = vmatprep.subr.bf16.mxu0 0
    %2323 = vmatpush2.bf16.xpose.msra.mxu0 0
    %2324 = vmatprep.subr.bf16.mxu0 0
    %2325 = vmatpush2.bf16.xpose.msra.mxu0 0
    %2326 = vmatprep.subr.bf16.mxu0 0
    %2327 = vmatpush2.bf16.xpose.msra.mxu0 0
    %2328 = vmatprep.subr.bf16.mxu0 0
    %2329 = vmatpush2.bf16.xpose.msra.mxu0 0
    %2330 = vmatprep.mubr.bf16.mxu0 0
    %2331 = vmatmul.mubr.bf16.gmra.mxu0 %v2293
    %v2332 = vpop.f32.mrf.mxu0
    %v2333 = vadd.f32 0.0, %v2332
    %v2334 = vpop.f32.mrf.mxu0
    %v2335 = vpop.f32.mrf.mxu0
    %v2336 = vpop.f32.mrf.mxu0
    %2337 = vdwg.mxu0
    %2338 = vrot.lane.b32.xlu0 %v1619, 104
    %v2339 = vpop.permute.xlu0 %2338
    %2340 = vrot.lane.b32.xlu0 %v1619, 72
    %v2341 = vpop.permute.xlu0 %2340
    %v2343 = vsel %vm289, %v2339, 0
    %v2346 = vsel %vm289, %v2341, 0
    %2348 = vmatprep.subr.bf16.mxu0 0
    %2349 = vmatpush1.bf16.xpose.msra.mxu0 0
    %2350 = vmatprep.subr.bf16.mxu0 0
    %2351 = vmatpush1.bf16.xpose.msra.mxu0 0
    %2352 = vmatprep.subr.bf16.mxu0 0
    %2353 = vmatpush1.bf16.xpose.msra.mxu0 0
    %2354 = vmatprep.subr.bf16.mxu0 0
    %2355 = vmatpush1.bf16.xpose.msra.mxu0 0
    %2356 = vmatprep.subr.bf16.mxu0 0
    %2357 = vmatpush1.bf16.xpose.msra.mxu0 0
    %2358 = vmatprep.subr.bf16.mxu0 0
    %2359 = vmatpush1.bf16.xpose.msra.mxu0 0
    %2360 = vmatprep.subr.bf16.mxu0 0
    %2361 = vmatpush1.bf16.xpose.msra.mxu0 0
    %2362 = vmatprep.subr.bf16.mxu0 0
    %2363 = vmatpush1.bf16.xpose.msra.mxu0 %v2346
    %2364 = vmatprep.subr.bf16.mxu0 0
    %2365 = vmatpush2.bf16.xpose.msra.mxu0 0
    %2366 = vmatprep.subr.bf16.mxu0 0
    %2367 = vmatpush2.bf16.xpose.msra.mxu0 0
    %2368 = vmatprep.subr.bf16.mxu0 0
    %2369 = vmatpush2.bf16.xpose.msra.mxu0 0
    %2370 = vmatprep.subr.bf16.mxu0 0
    %2371 = vmatpush2.bf16.xpose.msra.mxu0 0
    %2372 = vmatprep.subr.bf16.mxu0 0
    %2373 = vmatpush2.bf16.xpose.msra.mxu0 0
    %2374 = vmatprep.subr.bf16.mxu0 0
    %2375 = vmatpush2.bf16.xpose.msra.mxu0 0
    %2376 = vmatprep.subr.bf16.mxu0 0
    %2377 = vmatpush2.bf16.xpose.msra.mxu0 0
    %2378 = vmatprep.subr.bf16.mxu0 0
    %2379 = vmatpush2.bf16.xpose.msra.mxu0 0
    %2380 = vmatprep.mubr.bf16.mxu0 0
    %2381 = vmatmul.mubr.bf16.gmra.mxu0 %v2343
    %v2382 = vpop.f32.mrf.mxu0
    %v2383 = vadd.f32 0.0, %v2382
    %v2384 = vpop.f32.mrf.mxu0
    %v2385 = vpop.f32.mrf.mxu0
    %v2386 = vpop.f32.mrf.mxu0
    %2387 = vdwg.mxu0
    %v2388 = vmul.f32 %v2333, 0.35355338
    %v2389 = vmul.f32 %v2383, 0.35355338
    %v2390 = vadd.f32 %v2388, %v206
    %v2391 = vadd.f32 %v2389, %v210
    %v2392 = vsel %vm289, %v2390, -inf
    %2393 = vmax.xlane.f32.xlu0 %v2392
    %v2394 = vpop.xlane.xlu0 %2393
    %v2395 = vsel %vm289, %v2391, -inf
    %2396 = vmax.xlane.f32.xlu0 %v2395
    %v2397 = vpop.xlane.xlu0 %2396
    %v2398 = vsub.f32 %v2390, %v2394
    %v2399 = vsub.f32 %v2391, %v2397
    %v2400 = vmul.f32 %v2398, 1.442695
    %v2401 = vpow.pop %v2400
    %v2402 = vmul.f32 %v2399, 1.442695
    %v2403 = vpow.pop %v2402
    %v2404 = vsel %vm289, %v2401, 0.0
    %2405 = vadd.xlane.f32.xlu0 %v2404
    %v2406 = vpop.xlane.xlu0 %2405
    %v2407 = vsel %vm289, %v2403, 0.0
    %2408 = vadd.xlane.f32.xlu0 %v2407
    %v2409 = vpop.xlane.xlu0 %2408
    %v2410 = vrcp.pop %v2406
    %v2411 = vrcp.pop %v2409
    %v2412 = vmul.f32 %v2401, %v2410
    %v2413 = vmul.f32 %v2403, %v2411
    %v2414 = vpack.c.bf16 %v2412, %v2412
    %v2415 = vpack.c.bf16 %v2413, %v2413
    %2416 = vrot.lane.b32.xlu0 %v1618, 40
    %v2417 = vpop.permute.xlu0 %2416
    %v2419 = vsel %vm289, %v2414, 0
    %v2422 = vsel %vm417, %v2417, 0
    %2424 = vmatprep.subr.bf16.mxu0 0
    %2425 = vmatpush1.bf16.msra.mxu0 0
    %2426 = vmatprep.subr.bf16.mxu0 0
    %2427 = vmatpush1.bf16.msra.mxu0 0
    %2428 = vmatprep.subr.bf16.mxu0 0
    %2429 = vmatpush1.bf16.msra.mxu0 0
    %2430 = vmatprep.subr.bf16.mxu0 0
    %2431 = vmatpush1.bf16.msra.mxu0 0
    %2432 = vmatprep.subr.bf16.mxu0 0
    %2433 = vmatpush1.bf16.msra.mxu0 0
    %2434 = vmatprep.subr.bf16.mxu0 0
    %2435 = vmatpush1.bf16.msra.mxu0 0
    %2436 = vmatprep.subr.bf16.mxu0 0
    %2437 = vmatpush1.bf16.msra.mxu0 0
    %2438 = vmatprep.subr.bf16.mxu0 0
    %2439 = vmatpush1.bf16.msra.mxu0 %v2422
    %2440 = vmatprep.subr.bf16.mxu0 0
    %2441 = vmatpush2.bf16.msra.mxu0 0
    %2442 = vmatprep.subr.bf16.mxu0 0
    %2443 = vmatpush2.bf16.msra.mxu0 0
    %2444 = vmatprep.subr.bf16.mxu0 0
    %2445 = vmatpush2.bf16.msra.mxu0 0
    %2446 = vmatprep.subr.bf16.mxu0 0
    %2447 = vmatpush2.bf16.msra.mxu0 0
    %2448 = vmatprep.subr.bf16.mxu0 0
    %2449 = vmatpush2.bf16.msra.mxu0 0
    %2450 = vmatprep.subr.bf16.mxu0 0
    %2451 = vmatpush2.bf16.msra.mxu0 0
    %2452 = vmatprep.subr.bf16.mxu0 0
    %2453 = vmatpush2.bf16.msra.mxu0 0
    %2454 = vmatprep.subr.bf16.mxu0 0
    %2455 = vmatpush2.bf16.msra.mxu0 0
    %2456 = vmatprep.mubr.bf16.mxu0 0
    %2457 = vmatmul.mubr.bf16.gmra.mxu0 %v2419
    %v2458 = vpop.f32.mrf.mxu0
    %v2459 = vadd.f32 0.0, %v2458
    %v2460 = vpop.f32.mrf.mxu0
    %v2461 = vpop.f32.mrf.mxu0
    %v2462 = vpop.f32.mrf.mxu0
    %2463 = vdwg.mxu0
    %2464 = vrot.lane.b32.xlu0 %v1619, 40
    %v2465 = vpop.permute.xlu0 %2464
    %v2467 = vsel %vm289, %v2415, 0
    %v2470 = vsel %vm417, %v2465, 0
    %2472 = vmatprep.subr.bf16.mxu0 0
    %2473 = vmatpush1.bf16.msra.mxu0 0
    %2474 = vmatprep.subr.bf16.mxu0 0
    %2475 = vmatpush1.bf16.msra.mxu0 0
    %2476 = vmatprep.subr.bf16.mxu0 0
    %2477 = vmatpush1.bf16.msra.mxu0 0
    %2478 = vmatprep.subr.bf16.mxu0 0
    %2479 = vmatpush1.bf16.msra.mxu0 0
    %2480 = vmatprep.subr.bf16.mxu0 0
    %2481 = vmatpush1.bf16.msra.mxu0 0
    %2482 = vmatprep.subr.bf16.mxu0 0
    %2483 = vmatpush1.bf16.msra.mxu0 0
    %2484 = vmatprep.subr.bf16.mxu0 0
    %2485 = vmatpush1.bf16.msra.mxu0 0
    %2486 = vmatprep.subr.bf16.mxu0 0
    %2487 = vmatpush1.bf16.msra.mxu0 %v2470
    %2488 = vmatprep.subr.bf16.mxu0 0
    %2489 = vmatpush2.bf16.msra.mxu0 0
    %2490 = vmatprep.subr.bf16.mxu0 0
    %2491 = vmatpush2.bf16.msra.mxu0 0
    %2492 = vmatprep.subr.bf16.mxu0 0
    %2493 = vmatpush2.bf16.msra.mxu0 0
    %2494 = vmatprep.subr.bf16.mxu0 0
    %2495 = vmatpush2.bf16.msra.mxu0 0
    %2496 = vmatprep.subr.bf16.mxu0 0
    %2497 = vmatpush2.bf16.msra.mxu0 0
    %2498 = vmatprep.subr.bf16.mxu0 0
    %2499 = vmatpush2.bf16.msra.mxu0 0
    %2500 = vmatprep.subr.bf16.mxu0 0
    %2501 = vmatpush2.bf16.msra.mxu0 0
    %2502 = vmatprep.subr.bf16.mxu0 0
    %2503 = vmatpush2.bf16.msra.mxu0 0
    %2504 = vmatprep.mubr.bf16.mxu0 0
    %2505 = vmatmul.mubr.bf16.gmra.mxu0 %v2467
    %v2506 = vpop.f32.mrf.mxu0
    %v2507 = vadd.f32 0.0, %v2506
    %v2508 = vpop.f32.mrf.mxu0
    %v2509 = vpop.f32.mrf.mxu0
    %v2510 = vpop.f32.mrf.mxu0
    %2511 = vdwg.mxu0
    %2514 = vrot.lane.b32.xlu0 %v2011, 8
    %v2515 = vpop.permute.xlu0 %2514
    %2516 = vrot.lane.b32.xlu0 %v2059, 8
    %v2517 = vpop.permute.xlu0 %2516
    %2522 = vrot.lane.b32.xlu0 %v2235, 16
    %v2523 = vpop.permute.xlu0 %2522
    %2524 = vrot.lane.b32.xlu0 %v2283, 16
    %v2525 = vpop.permute.xlu0 %2524
    %2530 = vrot.lane.b32.xlu0 %v2459, 24
    %v2531 = vpop.permute.xlu0 %2530
    %2532 = vrot.lane.b32.xlu0 %v2507, 24
    %v2533 = vpop.permute.xlu0 %2532
    %v2536 = vsel %vm289, %v1787, %v2515
    %v2537 = vsel %vm289, %v1835, %v2517
    %v2538 = vsel %vm1207, %v2536, %v2523
    %v2539 = vsel %vm1207, %v2537, %v2525
    %v2540 = vsel %vm1210, %v2538, %v2531
    %v2541 = vsel %vm1210, %v2539, %v2533
    %v2542 = vpack.c.bf16 %v2541, %v2540
    %s2543 = scalar_lea.vmem %s7, 16
    %v2544 = vld [vmem:[%s2543] sm:$0xf]
    %v2545 = vld [vmem:[%s2543 + $0x4] sm:$0xf]
    %v2546 = vld [vmem:[%s2543 + $0x8] sm:$0xf]
    %v2547 = vld [vmem:[%s2543 + $0xc] sm:$0xf]
    %s2548 = scalar_lea.vmem %s8, 1
    %v2549 = vld [vmem:[%s2548] sm:$0x1]
    %v2551 = vlaneseq
    %v2552 = vshrl.u32 %v2551, 7
    %v2553 = vsub.s32 0, %v2552
    %v2554 = vrot.slane %v2549, %v2553
    %v2560 = vunpack.c.l.b16 %v2544
    %v2561 = vunpack.c.l.b16 %v2545
    %v2562 = vunpack.c.l.b16 %v2546
    %v2563 = vunpack.c.l.b16 %v2547
    %v2564 = vpack.c.b16 %v2561, %v2560
    %v2565 = vpack.c.b16 %v2563, %v2562
    %v2569 = vsel %vm151, %v2542, 0
    %2571 = vmatprep.subr.bf16.mxu0 0
    %2572 = vmatpush1.bf16.msra.mxu0 0
    %2573 = vmatprep.subr.bf16.mxu0 0
    %2574 = vmatpush1.bf16.msra.mxu0 0
    %2575 = vmatprep.subr.bf16.mxu0 0
    %2576 = vmatpush1.bf16.msra.mxu0 0
    %2577 = vmatprep.subr.bf16.mxu0 0
    %2578 = vmatpush1.bf16.msra.mxu0 0
    %2579 = vmatprep.subr.bf16.mxu0 0
    %2580 = vmatpush1.bf16.msra.mxu0 0
    %2581 = vmatprep.subr.bf16.mxu0 0
    %2582 = vmatpush1.bf16.msra.mxu0 0
    %2583 = vmatprep.subr.bf16.mxu0 0
    %2584 = vmatpush1.bf16.msra.mxu0 %v2565
    %2585 = vmatprep.subr.bf16.mxu0 0
    %2586 = vmatpush1.bf16.msra.mxu0 %v2564
    %2587 = vmatprep.subr.bf16.mxu0 0
    %2588 = vmatpush2.bf16.msra.mxu0 0
    %2589 = vmatprep.subr.bf16.mxu0 0
    %2590 = vmatpush2.bf16.msra.mxu0 0
    %2591 = vmatprep.subr.bf16.mxu0 0
    %2592 = vmatpush2.bf16.msra.mxu0 0
    %2593 = vmatprep.subr.bf16.mxu0 0
    %2594 = vmatpush2.bf16.msra.mxu0 0
    %2595 = vmatprep.subr.bf16.mxu0 0
    %2596 = vmatpush2.bf16.msra.mxu0 0
    %2597 = vmatprep.subr.bf16.mxu0 0
    %2598 = vmatpush2.bf16.msra.mxu0 0
    %2599 = vmatprep.subr.bf16.mxu0 0
    %2600 = vmatpush2.bf16.msra.mxu0 0
    %2601 = vmatprep.subr.bf16.mxu0 0
    %2602 = vmatpush2.bf16.msra.mxu0 0
    %2603 = vmatprep.mubr.bf16.mxu0 0
    %2604 = vmatmul.mubr.bf16.gmra.mxu0 %v2569
    %v2605 = vpop.f32.mrf.mxu0
    %v2606 = vadd.f32 %v2554, %v2605
    %v2607 = vpop.f32.mrf.mxu0
    %v2608 = vpop.f32.mrf.mxu0
    %v2609 = vadd.f32 %v2554, %v2608
    %v2610 = vpop.f32.mrf.mxu0
    %2611 = vdwg.mxu0
    %v2612 = vadd.f32 %v2606, %v1542
    %v2613 = vadd.f32 %v2609, %v1543
    %s2614 = scalar_lea.vmem [#allocation7], 1
    %v2615 = vld [vmem:[%s2614] sm:$0x1]
    %s2616 = scalar_lea.vmem [#allocation8], 1
    %v2617 = vld [vmem:[%s2616] sm:$0x1]
    %v2618 = vsel %vm151, %v2612, 0.0
    %2619 = vadd.xlane.f32.xlu0 %v2618
    %v2620 = vpop.xlane.xlu0 %2619
    %v2621 = vsel %vm151, %v2613, 0.0
    %2622 = vadd.xlane.f32.xlu0 %v2621
    %v2623 = vpop.xlane.xlu0 %2622
    %v2624 = vmul.f32 %v2620, %v158
    %v2625 = vmul.f32 %v2623, %v158
    %v2626 = vsub.f32 %v2612, %v2624
    %v2627 = vsub.f32 %v2613, %v2625
    %v2628 = vmul.f32 %v2626, %v2626
    %v2629 = vmul.f32 %v2627, %v2627
    %v2630 = vsel %vm151, %v2628, 0.0
    %2631 = vadd.xlane.f32.xlu0 %v2630
    %v2632 = vpop.xlane.xlu0 %2631
    %v2633 = vsel %vm151, %v2629, 0.0
    %2634 = vadd.xlane.f32.xlu0 %v2633
    %v2635 = vpop.xlane.xlu0 %2634
    %v2636 = vmul.f32 %v2632, %v158
    %v2637 = vmul.f32 %v2635, %v158
    %v2638 = vadd.f32 %v2636, 1e-05
    %v2639 = vadd.f32 %v2637, 1e-05
    %v2640 = vrsqrt.pop %v2638
    %v2641 = vrsqrt.pop %v2639
    %v2642 = vmul.f32 %v2626, %v2640
    %v2643 = vmul.f32 %v2627, %v2641
    %v2645 = vlaneseq
    %v2646 = vshrl.u32 %v2645, 7
    %v2647 = vsub.s32 0, %v2646
    %v2648 = vrot.slane %v2615, %v2647
    %v2650 = vmul.f32 %v2642, %v2648
    %v2651 = vmul.f32 %v2643, %v2648
    %v2653 = vlaneseq
    %v2654 = vshrl.u32 %v2653, 7
    %v2655 = vsub.s32 0, %v2654
    %v2656 = vrot.slane %v2617, %v2655
    %v2658 = vadd.f32 %v2650, %v2656
    %v2659 = vadd.f32 %v2651, %v2656
    %v2660 = vpack.c.bf16 %v2659, %v2658
    %s2661 = scalar_lea.vmem %s11, 16
    %v2662 = vld [vmem:[%s2661] sm:$0xf]
    %v2663 = vld [vmem:[%s2661 + $0x4] sm:$0xf]
    %v2664 = vld [vmem:[%s2661 + $0x8] sm:$0xf]
    %v2665 = vld [vmem:[%s2661 + $0xc] sm:$0xf]
    %s2666 = scalar_lea.vmem [#allocation10], 1
    %v2667 = vld [vmem:[%s2666] sm:$0x1]
    %v2669 = vlaneseq
    %v2670 = vshrl.u32 %v2669, 7
    %v2671 = vsub.s32 0, %v2670
    %v2672 = vrot.slane %v2667, %v2671
    %v2678 = vunpack.c.l.b16 %v2662
    %v2679 = vunpack.c.l.b16 %v2663
    %v2680 = vunpack.c.l.b16 %v2664
    %v2681 = vunpack.c.l.b16 %v2665
    %v2682 = vpack.c.b16 %v2679, %v2678
    %v2683 = vpack.c.b16 %v2681, %v2680
    %v2687 = vsel %vm151, %v2660, 0
    %2689 = vmatprep.subr.bf16.mxu0 0
    %2690 = vmatpush1.bf16.msra.mxu0 0
    %2691 = vmatprep.subr.bf16.mxu0 0
    %2692 = vmatpush1.bf16.msra.mxu0 0
    %2693 = vmatprep.subr.bf16.mxu0 0
    %2694 = vmatpush1.bf16.msra.mxu0 0
    %2695 = vmatprep.subr.bf16.mxu0 0
    %2696 = vmatpush1.bf16.msra.mxu0 0
    %2697 = vmatprep.subr.bf16.mxu0 0
    %2698 = vmatpush1.bf16.msra.mxu0 0
    %2699 = vmatprep.subr.bf16.mxu0 0
    %2700 = vmatpush1.bf16.msra.mxu0 0
    %2701 = vmatprep.subr.bf16.mxu0 0
    %2702 = vmatpush1.bf16.msra.mxu0 %v2683
    %2703 = vmatprep.subr.bf16.mxu0 0
    %2704 = vmatpush1.bf16.msra.mxu0 %v2682
    %2705 = vmatprep.subr.bf16.mxu0 0
    %2706 = vmatpush2.bf16.msra.mxu0 0
    %2707 = vmatprep.subr.bf16.mxu0 0
    %2708 = vmatpush2.bf16.msra.mxu0 0
    %2709 = vmatprep.subr.bf16.mxu0 0
    %2710 = vmatpush2.bf16.msra.mxu0 0
    %2711 = vmatprep.subr.bf16.mxu0 0
    %2712 = vmatpush2.bf16.msra.mxu0 0
    %2713 = vmatprep.subr.bf16.mxu0 0
    %2714 = vmatpush2.bf16.msra.mxu0 0
    %2715 = vmatprep.subr.bf16.mxu0 0
    %2716 = vmatpush2.bf16.msra.mxu0 0
    %2717 = vmatprep.subr.bf16.mxu0 0
    %2718 = vmatpush2.bf16.msra.mxu0 0
    %2719 = vmatprep.subr.bf16.mxu0 0
    %2720 = vmatpush2.bf16.msra.mxu0 0
    %2721 = vmatprep.mubr.bf16.mxu0 0
    %2722 = vmatmul.mubr.bf16.gmra.mxu0 %v2687
    %v2723 = vpop.f32.mrf.mxu0
    %v2724 = vadd.f32 %v2672, %v2723
    %v2725 = vpop.f32.mrf.mxu0
    %v2726 = vpop.f32.mrf.mxu0
    %v2727 = vadd.f32 %v2672, %v2726
    %v2728 = vpop.f32.mrf.mxu0
    %2729 = vdwg.mxu0
    %v2730 = vmul.f32 %v2724, 0.5
    %v2731 = vmul.f32 %v2727, 0.5
    %v2732 = vmul.f32 %v2724, 0.044715
    %v2733 = vmul.f32 %v2727, 0.044715
    %v2734 = vmul.f32 %v2732, %v2724
    %v2735 = vmul.f32 %v2733, %v2727
    %v2736 = vmul.f32 %v2734, %v2724
    %v2737 = vmul.f32 %v2735, %v2727
    %v2738 = vadd.f32 %v2724, %v2736
    %v2739 = vadd.f32 %v2727, %v2737
    %v2740 = vmul.f32 %v2738, 0.7978846
    %v2741 = vmul.f32 %v2739, 0.7978846
    %v2742 = vtanh.pop %v2740
    %v2743 = vtanh.pop %v2741
    %v2744 = vadd.f32 %v2742, 1.0
    %v2745 = vadd.f32 %v2743, 1.0
    %v2746 = vmul.f32 %v2730, %v2744
    %v2747 = vmul.f32 %v2731, %v2745
    %v2748 = vpack.c.bf16 %v2747, %v2746
    %s2749 = scalar_lea.vmem %s13, 32
    %v2750 = vld [vmem:[%s2749] sm:$0xf]
    %v2751 = vld [vmem:[%s2749 + $0x4] sm:$0xf]
    %v2752 = vld [vmem:[%s2749 + $0x8] sm:$0xf]
    %v2753 = vld [vmem:[%s2749 + $0xc] sm:$0xf]
    %v2754 = vld [vmem:[%s2749 + $0x10] sm:$0xf]
    %v2755 = vld [vmem:[%s2749 + $0x14] sm:$0xf]
    %v2756 = vld [vmem:[%s2749 + $0x18] sm:$0xf]
    %v2757 = vld [vmem:[%s2749 + $0x1c] sm:$0xf]
    %s2758 = scalar_lea.vmem [#allocation11], 1
    %v2759 = vld [vmem:[%s2758] sm:$0x1]
    %v2761 = vlaneseq
    %v2762 = vshrl.u32 %v2761, 7
    %v2763 = vsub.s32 0, %v2762
    %v2764 = vrot.slane %v2759, %v2763
    %v2774 = vunpack.c.l.b16 %v2750
    %v2775 = vunpack.c.l.b16 %v2751
    %v2776 = vunpack.c.l.b16 %v2752
    %v2777 = vunpack.c.l.b16 %v2753
    %v2778 = vunpack.c.l.b16 %v2754
    %v2779 = vunpack.c.l.b16 %v2755
    %v2780 = vunpack.c.l.b16 %v2756
    %v2781 = vunpack.c.l.b16 %v2757
    %v2782 = vpack.c.b16 %v2775, %v2774
    %v2783 = vpack.c.b16 %v2777, %v2776
    %v2784 = vpack.c.b16 %v2779, %v2778
    %v2785 = vpack.c.b16 %v2781, %v2780
    %v2791 = vsel %vm1453, %v2748, 0
    %2793 = vmatprep.subr.bf16.mxu0 0
    %2794 = vmatpush1.bf16.msra.mxu0 0
    %2795 = vmatprep.subr.bf16.mxu0 0
    %2796 = vmatpush1.bf16.msra.mxu0 0
    %2797 = vmatprep.subr.bf16.mxu0 0
    %2798 = vmatpush1.bf16.msra.mxu0 0
    %2799 = vmatprep.subr.bf16.mxu0 0
    %2800 = vmatpush1.bf16.msra.mxu0 0
    %2801 = vmatprep.subr.bf16.mxu0 0
    %2802 = vmatpush1.bf16.msra.mxu0 %v2785
    %2803 = vmatprep.subr.bf16.mxu0 0
    %2804 = vmatpush1.bf16.msra.mxu0 %v2784
    %2805 = vmatprep.subr.bf16.mxu0 0
    %2806 = vmatpush1.bf16.msra.mxu0 %v2783
    %2807 = vmatprep.subr.bf16.mxu0 0
    %2808 = vmatpush1.bf16.msra.mxu0 %v2782
    %2809 = vmatprep.subr.bf16.mxu0 0
    %2810 = vmatpush2.bf16.msra.mxu0 0
    %2811 = vmatprep.subr.bf16.mxu0 0
    %2812 = vmatpush2.bf16.msra.mxu0 0
    %2813 = vmatprep.subr.bf16.mxu0 0
    %2814 = vmatpush2.bf16.msra.mxu0 0
    %2815 = vmatprep.subr.bf16.mxu0 0
    %2816 = vmatpush2.bf16.msra.mxu0 0
    %2817 = vmatprep.subr.bf16.mxu0 0
    %2818 = vmatpush2.bf16.msra.mxu0 0
    %2819 = vmatprep.subr.bf16.mxu0 0
    %2820 = vmatpush2.bf16.msra.mxu0 0
    %2821 = vmatprep.subr.bf16.mxu0 0
    %2822 = vmatpush2.bf16.msra.mxu0 0
    %2823 = vmatprep.subr.bf16.mxu0 0
    %2824 = vmatpush2.bf16.msra.mxu0 0
    %2825 = vmatprep.mubr.bf16.mxu0 0
    %2826 = vmatmul.mubr.bf16.gmra.mxu0 %v2791
    %v2827 = vpop.f32.mrf.mxu0
    %v2828 = vadd.f32 %v2764, %v2827
    %v2829 = vpop.f32.mrf.mxu0
    %v2830 = vpop.f32.mrf.mxu0
    %v2831 = vadd.f32 %v2764, %v2830
    %v2832 = vpop.f32.mrf.mxu0
    %2833 = vdwg.mxu0
    %v2834 = vadd.f32 %v2828, %v2658
    %v2835 = vadd.f32 %v2831, %v2659
    %s2836 = scalar_lea.vmem %s15, 1
    %v2837 = vld [vmem:[%s2836] sm:$0x1]
    %s2838 = scalar_lea.vmem %s16, 1
    %v2839 = vld [vmem:[%s2838] sm:$0x1]
    %v2840 = vsel %vm151, %v2834, 0.0
    %2841 = vadd.xlane.f32.xlu0 %v2840
    %v2842 = vpop.xlane.xlu0 %2841
    %v2843 = vsel %vm151, %v2835, 0.0
    %2844 = vadd.xlane.f32.xlu0 %v2843
    %v2845 = vpop.xlane.xlu0 %2844
    %v2846 = vmul.f32 %v2842, %v158
    %v2847 = vmul.f32 %v2845, %v158
    %v2848 = vsub.f32 %v2834, %v2846
    %v2849 = vsub.f32 %v2835, %v2847
    %v2850 = vmul.f32 %v2848, %v2848
    %v2851 = vmul.f32 %v2849, %v2849
    %v2852 = vsel %vm151, %v2850, 0.0
    %2853 = vadd.xlane.f32.xlu0 %v2852
    %v2854 = vpop.xlane.xlu0 %2853
    %v2855 = vsel %vm151, %v2851, 0.0
    %2856 = vadd.xlane.f32.xlu0 %v2855
    %v2857 = vpop.xlane.xlu0 %2856
    %v2858 = vmul.f32 %v2854, %v158
    %v2859 = vmul.f32 %v2857, %v158
    %v2860 = vadd.f32 %v2858, 1e-05
    %v2861 = vadd.f32 %v2859, 1e-05
    %v2862 = vrsqrt.pop %v2860
    %v2863 = vrsqrt.pop %v2861
    %v2864 = vmul.f32 %v2848, %v2862
    %v2865 = vmul.f32 %v2849, %v2863
    %v2867 = vlaneseq
    %v2868 = vshrl.u32 %v2867, 7
    %v2869 = vsub.s32 0, %v2868
    %v2870 = vrot.slane %v2837, %v2869
    %v2872 = vmul.f32 %v2864, %v2870
    %v2873 = vmul.f32 %v2865, %v2870
    %v2875 = vlaneseq
    %v2876 = vshrl.u32 %v2875, 7
    %v2877 = vsub.s32 0, %v2876
    %v2878 = vrot.slane %v2839, %v2877
    %v2880 = vadd.f32 %v2872, %v2878
    %v2881 = vadd.f32 %v2873, %v2878
    %v2882 = vsel %vm151, %v2880, 0.0
    %v2883 = vrot.slane %v2882, 4
    %v2884 = vadd.f32 %v2882, %v2883
    %v2885 = vrot.slane %v2884, 2
    %v2886 = vadd.f32 %v2884, %v2885
    %v2887 = vrot.slane %v2886, 1
    %v2888 = vadd.f32 %v2886, %v2887
    %v2889 = vsel %vm151, %v2881, 0.0
    %v2890 = vrot.slane %v2889, 4
    %v2891 = vadd.f32 %v2889, %v2890
    %v2892 = vrot.slane %v2891, 2
    %v2893 = vadd.f32 %v2891, %v2892
    %v2894 = vrot.slane %v2893, 1
    %v2895 = vadd.f32 %v2893, %v2894
    %v2896 = vrcp.pop 8.0
    %v2897 = vmul.f32 %v2888, %v2896
    %v2898 = vmul.f32 %v2895, %v2896
    %v2899 = vpack.c.bf16 %v2897, %v2897
    %v2900 = vpack.c.bf16 %v2898, %v2898
    %v2901 = vld [vmem:[%s17] sm:$0xf]
    %v2902 = vld [vmem:[%s17 + $0x4] sm:$0xf]
    %v2903 = vld [vmem:[%s17 + $0x8] sm:$0xf]
    %v2904 = vld [vmem:[%s17 + $0xc] sm:$0xf]
    %v2905 = vld [vmem:[%s18] sm:$0x1]
    %v2907 = vlaneseq
    %v2908 = vshrl.u32 %v2907, 7
    %v2909 = vsub.s32 0, %v2908
    %v2910 = vrot.slane %v2905, %v2909
    %v2914 = vunpack.c.l.b16 %v2899
    %v2915 = vunpack.c.l.b16 %v2900
    %vm2916 = vcmask 1041409
    %v2917 = vsel %vm2916, %v2915, %v2914
    %v2918 = vpack.c.b16 %v2917, %v2917
    %v2923 = vunpack.c.l.b16 %v2901
    %v2924 = vunpack.c.l.b16 %v2902
    %v2925 = vunpack.c.l.b16 %v2903
    %v2926 = vunpack.c.l.b16 %v2904
    %v2927 = vpack.c.b16 %v2924, %v2923
    %v2928 = vpack.c.b16 %v2926, %v2925
    %v2932 = vsel %vm151, %v2918, 0
    %2934 = vmatprep.subr.bf16.mxu0 0
    %2935 = vmatpush1.bf16.msra.mxu0 0
    %2936 = vmatprep.subr.bf16.mxu0 0
    %2937 = vmatpush1.bf16.msra.mxu0 0
    %2938 = vmatprep.subr.bf16.mxu0 0
    %2939 = vmatpush1.bf16.msra.mxu0 0
    %2940 = vmatprep.subr.bf16.mxu0 0
    %2941 = vmatpush1.bf16.msra.mxu0 0
    %2942 = vmatprep.subr.bf16.mxu0 0
    %2943 = vmatpush1.bf16.msra.mxu0 0
    %2944 = vmatprep.subr.bf16.mxu0 0
    %2945 = vmatpush1.bf16.msra.mxu0 0
    %2946 = vmatprep.subr.bf16.mxu0 0
    %2947 = vmatpush1.bf16.msra.mxu0 %v2928
    %2948 = vmatprep.subr.bf16.mxu0 0
    %2949 = vmatpush1.bf16.msra.mxu0 %v2927
    %2950 = vmatprep.subr.bf16.mxu0 0
    %2951 = vmatpush2.bf16.msra.mxu0 0
    %2952 = vmatprep.subr.bf16.mxu0 0
    %2953 = vmatpush2.bf16.msra.mxu0 0
    %2954 = vmatprep.subr.bf16.mxu0 0
    %2955 = vmatpush2.bf16.msra.mxu0 0
    %2956 = vmatprep.subr.bf16.mxu0 0
    %2957 = vmatpush2.bf16.msra.mxu0 0
    %2958 = vmatprep.subr.bf16.mxu0 0
    %2959 = vmatpush2.bf16.msra.mxu0 0
    %2960 = vmatprep.subr.bf16.mxu0 0
    %2961 = vmatpush2.bf16.msra.mxu0 0
    %2962 = vmatprep.subr.bf16.mxu0 0
    %2963 = vmatpush2.bf16.msra.mxu0 0
    %2964 = vmatprep.subr.bf16.mxu0 0
    %2965 = vmatpush2.bf16.msra.mxu0 0
    %2966 = vmatprep.mubr.bf16.mxu0 0
    %2967 = vmatmul.mubr.bf16.gmra.mxu0 %v2932
    %v2968 = vpop.f32.mrf.mxu0
    %v2969 = vadd.f32 %v2910, %v2968
    %v2970 = vpop.f32.mrf.mxu0
    %v2971 = vpop.f32.mrf.mxu0
    %v2972 = vpop.f32.mrf.mxu0
    %2973 = vdwg.mxu0
    %vm2974 = vcmask 17408
    %2975 = vst.msk [vmem:[#allocation13] sm:$0x3] %vm2974, %v2969
    %v2976 = vsel %vm2974, %v2969, -inf
    %2977 = vmax.xlane.f32.xlu0 %v2976
    %v2978 = vpop.xlane.xlu0 %2977
    %v2979 = vsub.f32 %v2969, %v2978
    %v2980 = vmul.f32 %v2979, 1.442695
    %v2981 = vpow.pop %v2980
    %v2982 = vsel %vm2974, %v2981, 0.0
    %2983 = vadd.xlane.f32.xlu0 %v2982
    %v2984 = vpop.xlane.xlu0 %2983
    %v2985 = vlog2.pop %v2984
    %v2986 = vmul.f32 %v2985, 0.6931472
    %v2987 = vadd.f32 %v2978, %v2986
    %v2988 = vsub.f32 %v2987, %v2969
    %v2989 = vld [vmem:[%s2] sm:$0x3]
    %v2990 = vmul.f32 %v2988, %v2989
    %v2991 = vsel %vm2974, %v2990, 0.0
    %2992 = vadd.xlane.f32.xlu0 %v2991
    %v2993 = vpop.xlane.xlu0 %2992
    %vm2994 = vcmask 1024
    %v2995 = vsel %vm2994, %v2993, 0.0
    %2996 = vadd.xlane.f32.xlu0 %v2995
    %v2997 = vpop.xlane.xlu0 %2996
    %v2998 = vrot.slane %v2997, 4
    %v2999 = vadd.f32 %v2997, %v2998
    %v3000 = vrot.slane %v2999, 2
    %v3001 = vadd.f32 %v2999, %v3000
    %v3002 = vrot.slane %v3001, 1
    %v3003 = vadd.f32 %v3001, %v3002
    %s3004 = vtos %v3003
    %v3005 = vrcp.pop 2.0
    %s3006 = vtos %v3005
    %s3007 = smul.f32 %s3004, %s3006
    %v3008 = vstv %s3007
    %vm3009 = vcmask 0
    %3010 = vst.msk [vmem:[#allocation14] sm:$0x1] %vm3009, %v3008
    // Predicated region
    $region102: #{tpu_custom_call.1} parent=1 // pred_check
      _
    $region103: #{tpu_custom_call.1} parent=1 // pred_check_branch
      %3012 = sbr.rel (0) target = $region105
    $region104: #{tpu_custom_call.1} parent=1 // pred_region
      %s3014 = ssub.s32 32, 32
      %3015 = vsyncadd [#allocation4], %s3014
      %s3017 = sshll.u32 [#allocation13], 4
      %s3018 = int_to_ptr.vmem [resolvable:$true] %s3017
      %3020 = dma.vmem_to_hbm [thread:$0]  %s3018, 32, %s19, [#allocation4]
    $region105: #{tpu_custom_call.1} parent=1 // pred_fallthru
      _
    // Predicated region
    $region106: #{tpu_custom_call.1} parent=1 // pred_check
      _
    $region107: #{tpu_custom_call.1} parent=1 // pred_check_branch
      %3022 = sbr.rel (0) target = $region109
    $region108: #{tpu_custom_call.1} parent=1 // pred_region
      %s3024 = ssub.s32 16, 16
      %3025 = vsyncadd [#allocation15], %s3024
      %s3027 = sshll.u32 [#allocation14], 4
      %s3028 = int_to_ptr.vmem [resolvable:$true] %s3027
      %3030 = dma.vmem_to_hbm [thread:$0]  %s3028, 16, %s20, [#allocation15]
    $region109: #{tpu_custom_call.1} parent=1 // pred_fallthru
      _
    // Predicated region
    $region110: #{tpu_custom_call.1} parent=1 // pred_check
      _
    $region111: #{tpu_custom_call.1} parent=1 // pred_check_branch
      %3032 = sbr.rel (0) target = $region113
    $region112: #{tpu_custom_call.1} parent=1 // pred_region
      %3033 = dma.done [#allocation4], 32
    $region113: #{tpu_custom_call.1} parent=1 // pred_fallthru
      _
    // Predicated region
    $region114: #{tpu_custom_call.1} parent=1 // pred_check
      _
    $region115: #{tpu_custom_call.1} parent=1 // pred_check_branch
      %3035 = sbr.rel (0) target = $region117
    $region116: #{tpu_custom_call.1} parent=1 // pred_region
      %3036 = dma.done [#allocation15], 16
    $region117: #{tpu_custom_call.1} parent=1 // pred_fallthru
      _
    %3037 = vsyncpa [#allocation3], 1
    %3038 = vsyncpa [#allocation6], 1
    %3039 = vsyncpa [#allocation9], 1
    %3040 = vsyncpa [#allocation12], 1
    %3041 = vsyncpa [#allocation4], 1
    %3042 = vsyncpa [#allocation15], 1

</llo_original>
